<compile_context>
chip_gen: v5e
topology: v5e:2x2
jax: 0.10.0
libtpu: 0.0.40
codegen_flags: <defaults>
</compile_context>

<pallas_src>
import functools
import math

import jax
import jax.numpy as jnp
from jax.experimental import pallas as pl
from jax.experimental.pallas import tpu as pltpu


_LANE = 128          # TPU lane width
_SUBLANE = 16        # row-padding granularity (bf16-friendly sublane packing)
_COMPUTE_DTYPE = jnp.bfloat16   # MXU input dtype; accumulation stays f32


def _round_up(x, m):
    return (x + m - 1) // m * m


# ----------------------------- Pallas kernels ------------------------------ #

def _matmul_bias_kernel(x_ref, w_ref, b_ref, o_ref, acc_ref, *, relu):
    """Tiled o = relu?(x @ w + b) with f32 VMEM accumulator over the K grid axis."""
    @pl.when(pl.program_id(2) == 0)
    def _init():
        acc_ref[...] = jnp.zeros_like(acc_ref)

    acc_ref[...] += jnp.dot(x_ref[...], w_ref[...],
                            preferred_element_type=jnp.float32)

    @pl.when(pl.program_id(2) == pl.num_programs(2) - 1)
    def _finalize():
        r = acc_ref[...] + b_ref[...]
        if relu:
            r = jnp.maximum(r, 0.0)
        o_ref[...] = r.astype(o_ref.dtype)


def _fused_fc_kernel(x_ref, w1_ref, b1_ref, w2_ref, b2_ref, o_ref, acc_ref):
    """Fused fc1(+ReLU) and fc2: accumulate x@w1 over K, then apply fc2 in the epilogue."""
    k = pl.program_id(1)

    @pl.when(k == 0)
    def _init():
        acc_ref[...] = jnp.zeros_like(acc_ref)

    acc_ref[...] += jnp.dot(x_ref[...], w1_ref[...],
                            preferred_element_type=jnp.float32)

    @pl.when(k == pl.num_programs(1) - 1)
    def _finalize():
        h = jnp.maximum(acc_ref[...] + b1_ref[...], 0.0)
        out = jnp.dot(h.astype(w2_ref.dtype), w2_ref[...],
                      preferred_element_type=jnp.float32)
        o_ref[...] = (out + b2_ref[...]).astype(o_ref.dtype)


def _maxpool_kernel(x_ref, o_ref, *, half, wh, c):
    """2x2/stride-2 max pool on rows that hold two image rows each.

    x_ref: (TR, 2*W*C)  [two consecutive image rows, channel dim C == 128-padded]
    o_ref: (TR, Wh*C)
    All slices below are 128-lane aligned (c is a multiple of 128).
    """
    v = x_ref[...]
    m = jnp.maximum(v[:, :half], v[:, half:])          # vertical max -> (TR, W*C)
    pieces = [
        jnp.maximum(m[:, (2 * q) * c:(2 * q + 1) * c],
                    m[:, (2 * q + 1) * c:(2 * q + 2) * c])
        for q in range(wh)                              # horizontal max per window
    ]
    o_ref[...] = jnp.concatenate(pieces, axis=1)


# ----------------------------- Pallas wrappers ----------------------------- #

def pallas_matmul_bias(x, w, b, *, relu):
    """Tiled relu?(x @ w + b). Returns the PADDED (Mp, Np) f32 result; caller slices."""
    M, K = x.shape
    K2, N = w.shape
    assert K == K2

    TN = _LANE
    Np = _round_up(N, TN)
    TM = min(256, _round_up(M, _SUBLANE))
    Mp = _round_up(M, TM)
    if K > 1024:
        TK = 512
        Kp = _round_up(K, TK)
    else:
        Kp = TK = _round_up(K, _LANE)

    xp = jnp.pad(x, ((0, Mp - M), (0, Kp - K))).astype(_COMPUTE_DTYPE)
    wp = jnp.pad(w, ((0, Kp - K), (0, Np - N))).astype(_COMPUTE_DTYPE)
    bp = jnp.pad(b.astype(jnp.float32), (0, Np - N)).reshape(1, Np)

    grid = (Mp // TM, Np // TN, Kp // TK)
    return pl.pallas_call(
        functools.partial(_matmul_bias_kernel, relu=relu),
        out_shape=jax.ShapeDtypeStruct((Mp, Np), jnp.float32),
        grid=grid,
        in_specs=[
            pl.BlockSpec((TM, TK), lambda i, j, k: (i, k)),
            pl.BlockSpec((TK, TN), lambda i, j, k: (k, j)),
            pl.BlockSpec((1, TN), lambda i, j, k: (0, j)),
        ],
        out_specs=pl.BlockSpec((TM, TN), lambda i, j, k: (i, j)),
        scratch_shapes=[pltpu.VMEM((TM, TN), jnp.float32)],
        compiler_params=pltpu.CompilerParams(
            dimension_semantics=("parallel", "parallel", "arbitrary")),
    )(xp, wp, bp)


def pallas_fused_fc(x, w1, b1, w2, b2):
    """Fused fc1(+ReLU)+fc2 in one pallas_call. x:(B,K1) -> logits (B, N2)."""
    M, K1 = x.shape
    _, N1 = w1.shape
    _, N2 = w2.shape

    N1p = _round_up(N1, _LANE)
    N2p = _round_up(N2, _LANE)
    TM = min(256, _round_up(M, _SUBLANE))
    Mp = _round_up(M, TM)
    TK = 512
    K1p = _round_up(K1, TK)

    xp = jnp.pad(x, ((0, Mp - M), (0, K1p - K1))).astype(_COMPUTE_DTYPE)
    w1p = jnp.pad(w1, ((0, K1p - K1), (0, N1p - N1))).astype(_COMPUTE_DTYPE)
    b1p = jnp.pad(b1.astype(jnp.float32), (0, N1p - N1)).reshape(1, N1p)
    w2p = jnp.pad(w2, ((0, N1p - N1), (0, N2p - N2))).astype(_COMPUTE_DTYPE)
    b2p = jnp.pad(b2.astype(jnp.float32), (0, N2p - N2)).reshape(1, N2p)

    grid = (Mp // TM, K1p // TK)
    out = pl.pallas_call(
        _fused_fc_kernel,
        out_shape=jax.ShapeDtypeStruct((Mp, N2p), jnp.float32),
        grid=grid,
        in_specs=[
            pl.BlockSpec((TM, TK), lambda i, k: (i, k)),
            pl.BlockSpec((TK, N1p), lambda i, k: (k, 0)),
            pl.BlockSpec((1, N1p), lambda i, k: (0, 0)),
            pl.BlockSpec((N1p, N2p), lambda i, k: (0, 0)),
            pl.BlockSpec((1, N2p), lambda i, k: (0, 0)),
        ],
        out_specs=pl.BlockSpec((TM, N2p), lambda i, k: (i, 0)),
        scratch_shapes=[pltpu.VMEM((TM, N1p), jnp.float32)],
        compiler_params=pltpu.CompilerParams(
            dimension_semantics=("parallel", "arbitrary")),
    )(xp, w1p, b1p, w2p, b2p)
    return out[:M, :N2]


def pallas_maxpool2x2(x_nhwc):
    """MaxPool2d(kernel=2, stride=2) on a channel-padded NHWC tensor (C multiple of 128)."""
    B, H, W, C = x_nhwc.shape
    assert C % _LANE == 0 and H % 2 == 0 and W % 2 == 0
    Hh, Wh = H // 2, W // 2

    rows = B * Hh
    width_in = 2 * W * C            # two image rows per kernel row (multiple of 128)
    width_out = Wh * C              # pooled row (multiple of 128)
    TR = min(32, _round_up(rows, 8))
    rows_p = _round_up(rows, TR)

    xr = x_nhwc.reshape(rows, width_in)
    xr = jnp.pad(xr, ((0, rows_p - rows), (0, 0)))

    out = pl.pallas_call(
        functools.partial(_maxpool_kernel, half=W * C, wh=Wh, c=C),
        out_shape=jax.ShapeDtypeStruct((rows_p, width_out), jnp.float32),
        grid=(rows_p // TR,),
        in_specs=[pl.BlockSpec((TR, width_in), lambda i: (i, 0))],
        out_specs=pl.BlockSpec((TR, width_out), lambda i: (i, 0)),
        compiler_params=pltpu.CompilerParams(dimension_semantics=("parallel",)),
    )(xr)
    return out[:rows].reshape(B, Hh, Wh, C)


# ------------------------------- glue (JAX) -------------------------------- #

def im2col(x_nhwc, K, pad):
    """(B,H,W,C) -> (B*H*W, K*K*C) patch matrix, column order (kh, kw, cin)."""
    B, H, W, C = x_nhwc.shape
    xp = jnp.pad(x_nhwc, ((0, 0), (pad, pad), (pad, pad), (0, 0)))
    cols = [xp[:, kh:kh + H, kw:kw + W, :] for kh in range(K) for kw in range(K)]
    col = jnp.stack(cols, axis=3)            # (B, H, W, K*K, C)
    return col.reshape(B * H * W, K * K * C)


def init_params(key):
    """Deterministic synthetic parameters with torch-convention shapes."""
    ks = jax.random.split(key, 8)

    def uinit(k, shape, fan_in):
        bound = 1.0 / math.sqrt(fan_in)
        return jax.random.uniform(k, shape, jnp.float32, -bound, bound)

    return {
        "conv1_w": uinit(ks[0], (32, 1, 5, 5), 1 * 5 * 5),      # (Cout,Cin,KH,KW)
        "conv1_b": uinit(ks[1], (32,), 1 * 5 * 5),
        "conv2_w": uinit(ks[2], (64, 32, 5, 5), 32 * 5 * 5),
        "conv2_b": uinit(ks[3], (64,), 32 * 5 * 5),
        "fc1_w": uinit(ks[4], (512, 7 * 7 * 64), 7 * 7 * 64),   # (out, in), in = CHW order
        "fc1_b": uinit(ks[5], (512,), 7 * 7 * 64),
        "fc2_w": uinit(ks[6], (10, 512), 512),
        "fc2_b": uinit(ks[7], (10,), 512),
    }


def prepare_params(p):
    """One-time layout transforms of the torch-convention parameters."""
    return {
        # conv weights -> (KH*KW*Cin, Cout) to match the im2col column order
        "conv1_w": p["conv1_w"].transpose(2, 3, 1, 0).reshape(5 * 5 * 1, 32),
        "conv1_b": p["conv1_b"],
        "conv2_w": p["conv2_w"].transpose(2, 3, 1, 0).reshape(5 * 5 * 32, 64),
        "conv2_b": p["conv2_b"],
        # fc1 expects torch's CHW flatten; we flatten HWC, so permute the
        # weight's input axis ONCE here (removes the per-forward activation
        # transpose from the hot path).
        "fc1_w": p["fc1_w"].reshape(512, 64, 7, 7)
                           .transpose(2, 3, 1, 0).reshape(7 * 7 * 64, 512),
        "fc1_b": p["fc1_b"],
        "fc2_w": p["fc2_w"].T,                                   # (512, 10)
        "fc2_b": p["fc2_b"],
    }


def mnist_cnn_forward(x, p):
    """x: (B, 784) float32 -> logits (B, 10). `p` must come from prepare_params."""
    B = x.shape[0]
    # torch: view(-1, 1, 28, 28) [NCHW]; with Cin=1 the NHWC reshape has the
    # identical element ordering.
    t = x.reshape(B, 28, 28, 1)

    # conv1 (1->32, k=5, pad=2) + ReLU.  Output channels stay 128-padded
    # (extra channels are exactly zero) so the pooling kernel is lane-aligned.
    col = im2col(t, K=5, pad=2)                                   # (B*784, 25)
    h = pallas_matmul_bias(col, p["conv1_w"], p["conv1_b"], relu=True)
    h = h[:B * 28 * 28].reshape(B, 28, 28, _LANE)

    # pool1 2x2 stride 2 (in-kernel corner max, no HBM strided copies)
    h = pallas_maxpool2x2(h)                                      # (B,14,14,128)
    h = h[..., :32]                                               # real channels

    # conv2 (32->64, k=5, pad=2) + ReLU
    # NOTE: im2col stays as JAX glue; an in-kernel 5x5 patch gather would cut
    # its HBM traffic further at large batch sizes.
    col = im2col(h, K=5, pad=2)                                   # (B*196, 800)
    h = pallas_matmul_bias(col, p["conv2_w"], p["conv2_b"], relu=True)
    h = h[:B * 14 * 14].reshape(B, 14, 14, _LANE)

    # pool2 2x2 stride 2
    h = pallas_maxpool2x2(h)                                      # (B,7,7,128)
    h = h[..., :64].reshape(B, 7 * 7 * 64)                        # HWC flatten

    # fc1 + ReLU + fc2, fused in a single pallas_call
    return pallas_fused_fc(h, p["fc1_w"], p["fc1_b"], p["fc2_w"], p["fc2_b"])


if __name__ == "__main__":
    key = jax.random.PRNGKey(0)
    k_param, k_x = jax.random.split(key)
    params = prepare_params(init_params(k_param))

    batch = 2
    x = jax.random.normal(k_x, (batch, 28 * 28), dtype=jnp.float32)

    fwd = jax.jit(mnist_cnn_forward)
    logits = jax.block_until_ready(fwd(x, params))
    assert logits.shape == (batch, 10) and logits.dtype == jnp.float32
    print("KERNEL_OK")
</pallas_src>

<mosaic_0001>
module attributes {stable_mosaic.version = 11 : i64} {
  func.func @_matmul_bias_kernel(%arg0: i32, %arg1: i32, %arg2: i32, %arg3: memref<256x128xbf16, #tpu.memory_space<vmem>>, %arg4: memref<128x128xbf16, #tpu.memory_space<vmem>>, %arg5: memref<1x128xf32, #tpu.memory_space<vmem>>, %arg6: memref<256x128xf32, #tpu.memory_space<vmem>>, %arg7: memref<256x128xf32, #tpu.memory_space<vmem>>) attributes {dimension_semantics = [#tpu.dimension_semantics<parallel>, #tpu.dimension_semantics<parallel>, #tpu.dimension_semantics<arbitrary>], iteration_bounds = array<i64: 7, 1, 1>, scalar_prefetch = 0 : i64, scratch_operands = 1 : i64, tpu.core_type = #tpu.core_type<tc>, window_params = [{transform_indices = @transform_0, window_bounds = array<i64: 256, 128>}, {transform_indices = @transform_1, window_bounds = array<i64: 128, 128>}, {transform_indices = @transform_2, window_bounds = array<i64: 1, 128>}, {transform_indices = @transform_3, window_bounds = array<i64: 256, 128>}]} {
    %c0_i32 = arith.constant 0 : i32
    %0 = arith.cmpi eq, %arg2, %c0_i32 : i32
    %1 = arith.extui %0 : i1 to i32
    %c0_i32_0 = arith.constant 0 : i32
    %2 = arith.cmpi ne, %1, %c0_i32_0 : i32
    scf.if %2 {
      %cst_10 = arith.constant 0.000000e+00 : f32
      %12 = vector.broadcast %cst_10 : f32 to vector<256x128xf32>
      %c0_11 = arith.constant 0 : index
      %c0_12 = arith.constant 0 : index
      %13 = vector.load %arg7[%c0_11, %c0_12] : memref<256x128xf32, #tpu.memory_space<vmem>>, vector<256x128xf32>
      tpu.vector_store %arg7[%c0_11, %c0_12], %12 {strides = array<i32>} : memref<256x128xf32, #tpu.memory_space<vmem>>, vector<256x128xf32>,
    } else {
    }
    %c0 = arith.constant 0 : index
    %c0_1 = arith.constant 0 : index
    %3 = vector.load %arg7[%c0, %c0_1] : memref<256x128xf32, #tpu.memory_space<vmem>>, vector<256x128xf32>
    %c0_2 = arith.constant 0 : index
    %c0_3 = arith.constant 0 : index
    %4 = vector.load %arg3[%c0_2, %c0_3] : memref<256x128xbf16, #tpu.memory_space<vmem>>, vector<256x128xbf16>
    %c0_4 = arith.constant 0 : index
    %c0_5 = arith.constant 0 : index
    %5 = vector.load %arg4[%c0_4, %c0_5] : memref<128x128xbf16, #tpu.memory_space<vmem>>, vector<128x128xbf16>
    %cst = arith.constant dense<0.000000e+00> : vector<256x128xf32>
    %6 = tpu.matmul %4, %5, %cst {dimension_numbers = #tpu.dot_dimension_numbers<[1], [0], [0], [1], [0, 0, 1, 1], [], []>} : vector<256x128xbf16>, vector<128x128xbf16>, vector<256x128xf32> -> vector<256x128xf32>
    %7 = arith.addf %3, %6 : vector<256x128xf32>
    %c0_6 = arith.constant 0 : index
    %c0_7 = arith.constant 0 : index
    %8 = vector.load %arg7[%c0_6, %c0_7] : memref<256x128xf32, #tpu.memory_space<vmem>>, vector<256x128xf32>
    tpu.vector_store %arg7[%c0_6, %c0_7], %7 {strides = array<i32>} : memref<256x128xf32, #tpu.memory_space<vmem>>, vector<256x128xf32>,
    %c0_i32_8 = arith.constant 0 : i32
    %9 = arith.cmpi eq, %arg2, %c0_i32_8 : i32
    %10 = arith.extui %9 : i1 to i32
    %c0_i32_9 = arith.constant 0 : i32
    %11 = arith.cmpi ne, %10, %c0_i32_9 : i32
    scf.if %11 {
      %c0_10 = arith.constant 0 : index
      %c0_11 = arith.constant 0 : index
      %12 = vector.load %arg7[%c0_10, %c0_11] : memref<256x128xf32, #tpu.memory_space<vmem>>, vector<256x128xf32>
      %c0_12 = arith.constant 0 : index
      %c0_13 = arith.constant 0 : index
      %13 = vector.load %arg5[%c0_12, %c0_13] : memref<1x128xf32, #tpu.memory_space<vmem>>, vector<1x128xf32>
      %14 = vector.broadcast %13 : vector<1x128xf32> to vector<256x128xf32>
      %15 = arith.addf %12, %14 : vector<256x128xf32>
      %cst_14 = arith.constant 0.000000e+00 : f32
      %16 = vector.broadcast %cst_14 : f32 to vector<256x128xf32>
      %17 = arith.maximumf %15, %16 : vector<256x128xf32>
      %c0_15 = arith.constant 0 : index
      %c0_16 = arith.constant 0 : index
      %18 = vector.load %arg6[%c0_15, %c0_16] : memref<256x128xf32, #tpu.memory_space<vmem>>, vector<256x128xf32>
      tpu.vector_store %arg6[%c0_15, %c0_16], %17 {strides = array<i32>} : memref<256x128xf32, #tpu.memory_space<vmem>>, vector<256x128xf32>,
    } else {
    }
    return
  }
  func.func @transform_0(%arg0: i32, %arg1: i32, %arg2: i32) -> (i32, i32) {
    %c0_i32 = arith.constant 0 : i32
    return %arg0, %arg2 : i32, i32
  }
  func.func @transform_1(%arg0: i32, %arg1: i32, %arg2: i32) -> (i32, i32) {
    %c0_i32 = arith.constant 0 : i32
    return %arg2, %arg1 : i32, i32
  }
  func.func @transform_2(%arg0: i32, %arg1: i32, %arg2: i32) -> (i32, i32) {
    %c0_i32 = arith.constant 0 : i32
    %c0_i32_0 = arith.constant 0 : i32
    return %c0_i32, %arg1 : i32, i32
  }
  func.func @transform_3(%arg0: i32, %arg1: i32, %arg2: i32) -> (i32, i32) {
    %c0_i32 = arith.constant 0 : i32
    return %arg0, %arg1 : i32, i32
  }
}

module attributes {stable_mosaic.version = 11 : i64} {
  func.func @_maxpool_kernel(%arg0: i32, %arg1: memref<32x7168xf32, #tpu.memory_space<vmem>>, %arg2: memref<32x1792xf32, #tpu.memory_space<vmem>>) attributes {dimension_semantics = [#tpu.dimension_semantics<parallel>], iteration_bounds = array<i64: 1>, scalar_prefetch = 0 : i64, scratch_operands = 0 : i64, tpu.core_type = #tpu.core_type<tc>, window_params = [{transform_indices = @transform_0, window_bounds = array<i64: 32, 7168>}, {transform_indices = @transform_1, window_bounds = array<i64: 32, 1792>}]} {
    %c0 = arith.constant 0 : index
    %c0_0 = arith.constant 0 : index
    %0 = vector.load %arg1[%c0, %c0_0] : memref<32x7168xf32, #tpu.memory_space<vmem>>, vector<32x7168xf32>
    %1 = vector.extract_strided_slice %0 {offsets = [0, 0], sizes = [32, 3584], strides = [1, 1]} : vector<32x7168xf32> to vector<32x3584xf32>
    %2 = vector.extract_strided_slice %0 {offsets = [0, 3584], sizes = [32, 3584], strides = [1, 1]} : vector<32x7168xf32> to vector<32x3584xf32>
    %3 = arith.maximumf %1, %2 : vector<32x3584xf32>
    %4 = vector.extract_strided_slice %3 {offsets = [0, 0], sizes = [32, 128], strides = [1, 1]} : vector<32x3584xf32> to vector<32x128xf32>
    %5 = vector.extract_strided_slice %3 {offsets = [0, 128], sizes = [32, 128], strides = [1, 1]} : vector<32x3584xf32> to vector<32x128xf32>
    %6 = arith.maximumf %4, %5 : vector<32x128xf32>
    %7 = vector.extract_strided_slice %3 {offsets = [0, 256], sizes = [32, 128], strides = [1, 1]} : vector<32x3584xf32> to vector<32x128xf32>
    %8 = vector.extract_strided_slice %3 {offsets = [0, 384], sizes = [32, 128], strides = [1, 1]} : vector<32x3584xf32> to vector<32x128xf32>
    %9 = arith.maximumf %7, %8 : vector<32x128xf32>
    %10 = vector.extract_strided_slice %3 {offsets = [0, 512], sizes = [32, 128], strides = [1, 1]} : vector<32x3584xf32> to vector<32x128xf32>
    %11 = vector.extract_strided_slice %3 {offsets = [0, 640], sizes = [32, 128], strides = [1, 1]} : vector<32x3584xf32> to vector<32x128xf32>
    %12 = arith.maximumf %10, %11 : vector<32x128xf32>
    %13 = vector.extract_strided_slice %3 {offsets = [0, 768], sizes = [32, 128], strides = [1, 1]} : vector<32x3584xf32> to vector<32x128xf32>
    %14 = vector.extract_strided_slice %3 {offsets = [0, 896], sizes = [32, 128], strides = [1, 1]} : vector<32x3584xf32> to vector<32x128xf32>
    %15 = arith.maximumf %13, %14 : vector<32x128xf32>
    %16 = vector.extract_strided_slice %3 {offsets = [0, 1024], sizes = [32, 128], strides = [1, 1]} : vector<32x3584xf32> to vector<32x128xf32>
    %17 = vector.extract_strided_slice %3 {offsets = [0, 1152], sizes = [32, 128], strides = [1, 1]} : vector<32x3584xf32> to vector<32x128xf32>
    %18 = arith.maximumf %16, %17 : vector<32x128xf32>
    %19 = vector.extract_strided_slice %3 {offsets = [0, 1280], sizes = [32, 128], strides = [1, 1]} : vector<32x3584xf32> to vector<32x128xf32>
    %20 = vector.extract_strided_slice %3 {offsets = [0, 1408], sizes = [32, 128], strides = [1, 1]} : vector<32x3584xf32> to vector<32x128xf32>
    %21 = arith.maximumf %19, %20 : vector<32x128xf32>
    %22 = vector.extract_strided_slice %3 {offsets = [0, 1536], sizes = [32, 128], strides = [1, 1]} : vector<32x3584xf32> to vector<32x128xf32>
    %23 = vector.extract_strided_slice %3 {offsets = [0, 1664], sizes = [32, 128], strides = [1, 1]} : vector<32x3584xf32> to vector<32x128xf32>
    %24 = arith.maximumf %22, %23 : vector<32x128xf32>
    %25 = vector.extract_strided_slice %3 {offsets = [0, 1792], sizes = [32, 128], strides = [1, 1]} : vector<32x3584xf32> to vector<32x128xf32>
    %26 = vector.extract_strided_slice %3 {offsets = [0, 1920], sizes = [32, 128], strides = [1, 1]} : vector<32x3584xf32> to vector<32x128xf32>
    %27 = arith.maximumf %25, %26 : vector<32x128xf32>
    %28 = vector.extract_strided_slice %3 {offsets = [0, 2048], sizes = [32, 128], strides = [1, 1]} : vector<32x3584xf32> to vector<32x128xf32>
    %29 = vector.extract_strided_slice %3 {offsets = [0, 2176], sizes = [32, 128], strides = [1, 1]} : vector<32x3584xf32> to vector<32x128xf32>
    %30 = arith.maximumf %28, %29 : vector<32x128xf32>
    %31 = vector.extract_strided_slice %3 {offsets = [0, 2304], sizes = [32, 128], strides = [1, 1]} : vector<32x3584xf32> to vector<32x128xf32>
    %32 = vector.extract_strided_slice %3 {offsets = [0, 2432], sizes = [32, 128], strides = [1, 1]} : vector<32x3584xf32> to vector<32x128xf32>
    %33 = arith.maximumf %31, %32 : vector<32x128xf32>
    %34 = vector.extract_strided_slice %3 {offsets = [0, 2560], sizes = [32, 128], strides = [1, 1]} : vector<32x3584xf32> to vector<32x128xf32>
    %35 = vector.extract_strided_slice %3 {offsets = [0, 2688], sizes = [32, 128], strides = [1, 1]} : vector<32x3584xf32> to vector<32x128xf32>
    %36 = arith.maximumf %34, %35 : vector<32x128xf32>
    %37 = vector.extract_strided_slice %3 {offsets = [0, 2816], sizes = [32, 128], strides = [1, 1]} : vector<32x3584xf32> to vector<32x128xf32>
    %38 = vector.extract_strided_slice %3 {offsets = [0, 2944], sizes = [32, 128], strides = [1, 1]} : vector<32x3584xf32> to vector<32x128xf32>
    %39 = arith.maximumf %37, %38 : vector<32x128xf32>
    %40 = vector.extract_strided_slice %3 {offsets = [0, 3072], sizes = [32, 128], strides = [1, 1]} : vector<32x3584xf32> to vector<32x128xf32>
    %41 = vector.extract_strided_slice %3 {offsets = [0, 3200], sizes = [32, 128], strides = [1, 1]} : vector<32x3584xf32> to vector<32x128xf32>
    %42 = arith.maximumf %40, %41 : vector<32x128xf32>
    %43 = vector.extract_strided_slice %3 {offsets = [0, 3328], sizes = [32, 128], strides = [1, 1]} : vector<32x3584xf32> to vector<32x128xf32>
    %44 = vector.extract_strided_slice %3 {offsets = [0, 3456], sizes = [32, 128], strides = [1, 1]} : vector<32x3584xf32> to vector<32x128xf32>
    %45 = arith.maximumf %43, %44 : vector<32x128xf32>
    %46 = tpu.concatenate %6, %9, %12, %15, %18, %21, %24, %27, %30, %33, %36, %39, %42, %45 in 1 : vector<32x128xf32>, vector<32x128xf32>, vector<32x128xf32>, vector<32x128xf32>, vector<32x128xf32>, vector<32x128xf32>, vector<32x128xf32>, vector<32x128xf32>, vector<32x128xf32>, vector<32x128xf32>, vector<32x128xf32>, vector<32x128xf32>, vector<32x128xf32>, vector<32x128xf32> -> vector<32x1792xf32>
    %c0_1 = arith.constant 0 : index
    %c0_2 = arith.constant 0 : index
    %47 = vector.load %arg2[%c0_1, %c0_2] : memref<32x1792xf32, #tpu.memory_space<vmem>>, vector<32x1792xf32>
    tpu.vector_store %arg2[%c0_1, %c0_2], %46 {strides = array<i32>} : memref<32x1792xf32, #tpu.memory_space<vmem>>, vector<32x1792xf32>,
    return
  }
  func.func @transform_0(%arg0: i32) -> (i32, i32) {
    %c0_i32 = arith.constant 0 : i32
    %c0_i32_0 = arith.constant 0 : i32
    return %arg0, %c0_i32 : i32, i32
  }
  func.func @transform_1(%arg0: i32) -> (i32, i32) {
    %c0_i32 = arith.constant 0 : i32
    %c0_i32_0 = arith.constant 0 : i32
    return %arg0, %c0_i32 : i32, i32
  }
}

module attributes {stable_mosaic.version = 11 : i64} {
  func.func @_matmul_bias_kernel(%arg0: i32, %arg1: i32, %arg2: i32, %arg3: memref<256x896xbf16, #tpu.memory_space<vmem>>, %arg4: memref<896x128xbf16, #tpu.memory_space<vmem>>, %arg5: memref<1x128xf32, #tpu.memory_space<vmem>>, %arg6: memref<256x128xf32, #tpu.memory_space<vmem>>, %arg7: memref<256x128xf32, #tpu.memory_space<vmem>>) attributes {dimension_semantics = [#tpu.dimension_semantics<parallel>, #tpu.dimension_semantics<parallel>, #tpu.dimension_semantics<arbitrary>], iteration_bounds = array<i64: 2, 1, 1>, scalar_prefetch = 0 : i64, scratch_operands = 1 : i64, tpu.core_type = #tpu.core_type<tc>, window_params = [{transform_indices = @transform_0, window_bounds = array<i64: 256, 896>}, {transform_indices = @transform_1, window_bounds = array<i64: 896, 128>}, {transform_indices = @transform_2, window_bounds = array<i64: 1, 128>}, {transform_indices = @transform_3, window_bounds = array<i64: 256, 128>}]} {
    %c0_i32 = arith.constant 0 : i32
    %0 = arith.cmpi eq, %arg2, %c0_i32 : i32
    %1 = arith.extui %0 : i1 to i32
    %c0_i32_0 = arith.constant 0 : i32
    %2 = arith.cmpi ne, %1, %c0_i32_0 : i32
    scf.if %2 {
      %cst_10 = arith.constant 0.000000e+00 : f32
      %12 = vector.broadcast %cst_10 : f32 to vector<256x128xf32>
      %c0_11 = arith.constant 0 : index
      %c0_12 = arith.constant 0 : index
      %13 = vector.load %arg7[%c0_11, %c0_12] : memref<256x128xf32, #tpu.memory_space<vmem>>, vector<256x128xf32>
      tpu.vector_store %arg7[%c0_11, %c0_12], %12 {strides = array<i32>} : memref<256x128xf32, #tpu.memory_space<vmem>>, vector<256x128xf32>,
    } else {
    }
    %c0 = arith.constant 0 : index
    %c0_1 = arith.constant 0 : index
    %3 = vector.load %arg7[%c0, %c0_1] : memref<256x128xf32, #tpu.memory_space<vmem>>, vector<256x128xf32>
    %c0_2 = arith.constant 0 : index
    %c0_3 = arith.constant 0 : index
    %4 = vector.load %arg3[%c0_2, %c0_3] : memref<256x896xbf16, #tpu.memory_space<vmem>>, vector<256x896xbf16>
    %c0_4 = arith.constant 0 : index
    %c0_5 = arith.constant 0 : index
    %5 = vector.load %arg4[%c0_4, %c0_5] : memref<896x128xbf16, #tpu.memory_space<vmem>>, vector<896x128xbf16>
    %cst = arith.constant dense<0.000000e+00> : vector<256x128xf32>
    %6 = tpu.matmul %4, %5, %cst {dimension_numbers = #tpu.dot_dimension_numbers<[1], [0], [0], [1], [0, 0, 1, 1], [], []>} : vector<256x896xbf16>, vector<896x128xbf16>, vector<256x128xf32> -> vector<256x128xf32>
    %7 = arith.addf %3, %6 : vector<256x128xf32>
    %c0_6 = arith.constant 0 : index
    %c0_7 = arith.constant 0 : index
    %8 = vector.load %arg7[%c0_6, %c0_7] : memref<256x128xf32, #tpu.memory_space<vmem>>, vector<256x128xf32>
    tpu.vector_store %arg7[%c0_6, %c0_7], %7 {strides = array<i32>} : memref<256x128xf32, #tpu.memory_space<vmem>>, vector<256x128xf32>,
    %c0_i32_8 = arith.constant 0 : i32
    %9 = arith.cmpi eq, %arg2, %c0_i32_8 : i32
    %10 = arith.extui %9 : i1 to i32
    %c0_i32_9 = arith.constant 0 : i32
    %11 = arith.cmpi ne, %10, %c0_i32_9 : i32
    scf.if %11 {
      %c0_10 = arith.constant 0 : index
      %c0_11 = arith.constant 0 : index
      %12 = vector.load %arg7[%c0_10, %c0_11] : memref<256x128xf32, #tpu.memory_space<vmem>>, vector<256x128xf32>
      %c0_12 = arith.constant 0 : index
      %c0_13 = arith.constant 0 : index
      %13 = vector.load %arg5[%c0_12, %c0_13] : memref<1x128xf32, #tpu.memory_space<vmem>>, vector<1x128xf32>
      %14 = vector.broadcast %13 : vector<1x128xf32> to vector<256x128xf32>
      %15 = arith.addf %12, %14 : vector<256x128xf32>
      %cst_14 = arith.constant 0.000000e+00 : f32
      %16 = vector.broadcast %cst_14 : f32 to vector<256x128xf32>
      %17 = arith.maximumf %15, %16 : vector<256x128xf32>
      %c0_15 = arith.constant 0 : index
      %c0_16 = arith.constant 0 : index
      %18 = vector.load %arg6[%c0_15, %c0_16] : memref<256x128xf32, #tpu.memory_space<vmem>>, vector<256x128xf32>
      tpu.vector_store %arg6[%c0_15, %c0_16], %17 {strides = array<i32>} : memref<256x128xf32, #tpu.memory_space<vmem>>, vector<256x128xf32>,
    } else {
    }
    return
  }
  func.func @transform_0(%arg0: i32, %arg1: i32, %arg2: i32) -> (i32, i32) {
    %c0_i32 = arith.constant 0 : i32
    return %arg0, %arg2 : i32, i32
  }
  func.func @transform_1(%arg0: i32, %arg1: i32, %arg2: i32) -> (i32, i32) {
    %c0_i32 = arith.constant 0 : i32
    return %arg2, %arg1 : i32, i32
  }
  func.func @transform_2(%arg0: i32, %arg1: i32, %arg2: i32) -> (i32, i32) {
    %c0_i32 = arith.constant 0 : i32
    %c0_i32_0 = arith.constant 0 : i32
    return %c0_i32, %arg1 : i32, i32
  }
  func.func @transform_3(%arg0: i32, %arg1: i32, %arg2: i32) -> (i32, i32) {
    %c0_i32 = arith.constant 0 : i32
    return %arg0, %arg1 : i32, i32
  }
}

module attributes {stable_mosaic.version = 11 : i64} {
  func.func @_maxpool_kernel(%arg0: i32, %arg1: memref<16x3584xf32, #tpu.memory_space<vmem>>, %arg2: memref<16x896xf32, #tpu.memory_space<vmem>>) attributes {dimension_semantics = [#tpu.dimension_semantics<parallel>], iteration_bounds = array<i64: 1>, scalar_prefetch = 0 : i64, scratch_operands = 0 : i64, tpu.core_type = #tpu.core_type<tc>, window_params = [{transform_indices = @transform_0, window_bounds = array<i64: 16, 3584>}, {transform_indices = @transform_1, window_bounds = array<i64: 16, 896>}]} {
    %c0 = arith.constant 0 : index
    %c0_0 = arith.constant 0 : index
    %0 = vector.load %arg1[%c0, %c0_0] : memref<16x3584xf32, #tpu.memory_space<vmem>>, vector<16x3584xf32>
    %1 = vector.extract_strided_slice %0 {offsets = [0, 0], sizes = [16, 1792], strides = [1, 1]} : vector<16x3584xf32> to vector<16x1792xf32>
    %2 = vector.extract_strided_slice %0 {offsets = [0, 1792], sizes = [16, 1792], strides = [1, 1]} : vector<16x3584xf32> to vector<16x1792xf32>
    %3 = arith.maximumf %1, %2 : vector<16x1792xf32>
    %4 = vector.extract_strided_slice %3 {offsets = [0, 0], sizes = [16, 128], strides = [1, 1]} : vector<16x1792xf32> to vector<16x128xf32>
    %5 = vector.extract_strided_slice %3 {offsets = [0, 128], sizes = [16, 128], strides = [1, 1]} : vector<16x1792xf32> to vector<16x128xf32>
    %6 = arith.maximumf %4, %5 : vector<16x128xf32>
    %7 = vector.extract_strided_slice %3 {offsets = [0, 256], sizes = [16, 128], strides = [1, 1]} : vector<16x1792xf32> to vector<16x128xf32>
    %8 = vector.extract_strided_slice %3 {offsets = [0, 384], sizes = [16, 128], strides = [1, 1]} : vector<16x1792xf32> to vector<16x128xf32>
    %9 = arith.maximumf %7, %8 : vector<16x128xf32>
    %10 = vector.extract_strided_slice %3 {offsets = [0, 512], sizes = [16, 128], strides = [1, 1]} : vector<16x1792xf32> to vector<16x128xf32>
    %11 = vector.extract_strided_slice %3 {offsets = [0, 640], sizes = [16, 128], strides = [1, 1]} : vector<16x1792xf32> to vector<16x128xf32>
    %12 = arith.maximumf %10, %11 : vector<16x128xf32>
    %13 = vector.extract_strided_slice %3 {offsets = [0, 768], sizes = [16, 128], strides = [1, 1]} : vector<16x1792xf32> to vector<16x128xf32>
    %14 = vector.extract_strided_slice %3 {offsets = [0, 896], sizes = [16, 128], strides = [1, 1]} : vector<16x1792xf32> to vector<16x128xf32>
    %15 = arith.maximumf %13, %14 : vector<16x128xf32>
    %16 = vector.extract_strided_slice %3 {offsets = [0, 1024], sizes = [16, 128], strides = [1, 1]} : vector<16x1792xf32> to vector<16x128xf32>
    %17 = vector.extract_strided_slice %3 {offsets = [0, 1152], sizes = [16, 128], strides = [1, 1]} : vector<16x1792xf32> to vector<16x128xf32>
    %18 = arith.maximumf %16, %17 : vector<16x128xf32>
    %19 = vector.extract_strided_slice %3 {offsets = [0, 1280], sizes = [16, 128], strides = [1, 1]} : vector<16x1792xf32> to vector<16x128xf32>
    %20 = vector.extract_strided_slice %3 {offsets = [0, 1408], sizes = [16, 128], strides = [1, 1]} : vector<16x1792xf32> to vector<16x128xf32>
    %21 = arith.maximumf %19, %20 : vector<16x128xf32>
    %22 = vector.extract_strided_slice %3 {offsets = [0, 1536], sizes = [16, 128], strides = [1, 1]} : vector<16x1792xf32> to vector<16x128xf32>
    %23 = vector.extract_strided_slice %3 {offsets = [0, 1664], sizes = [16, 128], strides = [1, 1]} : vector<16x1792xf32> to vector<16x128xf32>
    %24 = arith.maximumf %22, %23 : vector<16x128xf32>
    %25 = tpu.concatenate %6, %9, %12, %15, %18, %21, %24 in 1 : vector<16x128xf32>, vector<16x128xf32>, vector<16x128xf32>, vector<16x128xf32>, vector<16x128xf32>, vector<16x128xf32>, vector<16x128xf32> -> vector<16x896xf32>
    %c0_1 = arith.constant 0 : index
    %c0_2 = arith.constant 0 : index
    %26 = vector.load %arg2[%c0_1, %c0_2] : memref<16x896xf32, #tpu.memory_space<vmem>>, vector<16x896xf32>
    tpu.vector_store %arg2[%c0_1, %c0_2], %25 {strides = array<i32>} : memref<16x896xf32, #tpu.memory_space<vmem>>, vector<16x896xf32>,
    return
  }
  func.func @transform_0(%arg0: i32) -> (i32, i32) {
    %c0_i32 = arith.constant 0 : i32
    %c0_i32_0 = arith.constant 0 : i32
    return %arg0, %c0_i32 : i32, i32
  }
  func.func @transform_1(%arg0: i32) -> (i32, i32) {
    %c0_i32 = arith.constant 0 : i32
    %c0_i32_0 = arith.constant 0 : i32
    return %arg0, %c0_i32 : i32, i32
  }
}

module attributes {stable_mosaic.version = 11 : i64} {
  func.func @_fused_fc_kernel(%arg0: i32, %arg1: i32, %arg2: memref<16x512xbf16, #tpu.memory_space<vmem>>, %arg3: memref<512x512xbf16, #tpu.memory_space<vmem>>, %arg4: memref<1x512xf32, #tpu.memory_space<vmem>>, %arg5: memref<512x128xbf16, #tpu.memory_space<vmem>>, %arg6: memref<1x128xf32, #tpu.memory_space<vmem>>, %arg7: memref<16x128xf32, #tpu.memory_space<vmem>>, %arg8: memref<16x512xf32, #tpu.memory_space<vmem>>) attributes {dimension_semantics = [#tpu.dimension_semantics<parallel>, #tpu.dimension_semantics<arbitrary>], iteration_bounds = array<i64: 1, 7>, scalar_prefetch = 0 : i64, scratch_operands = 1 : i64, tpu.core_type = #tpu.core_type<tc>, window_params = [{transform_indices = @transform_0, window_bounds = array<i64: 16, 512>}, {transform_indices = @transform_1, window_bounds = array<i64: 512, 512>}, {pipeline_mode = #tpu.pipeline_mode<synchronous>, transform_indices = @transform_2, window_bounds = array<i64: 1, 512>}, {pipeline_mode = #tpu.pipeline_mode<synchronous>, transform_indices = @transform_3, window_bounds = array<i64: 512, 128>}, {pipeline_mode = #tpu.pipeline_mode<synchronous>, transform_indices = @transform_4, window_bounds = array<i64: 1, 128>}, {transform_indices = @transform_5, window_bounds = array<i64: 16, 128>}]} {
    %c0_i32 = arith.constant 0 : i32
    %0 = arith.cmpi eq, %arg1, %c0_i32 : i32
    %1 = arith.extui %0 : i1 to i32
    %c0_i32_0 = arith.constant 0 : i32
    %2 = arith.cmpi ne, %1, %c0_i32_0 : i32
    scf.if %2 {
      %cst_9 = arith.constant 0.000000e+00 : f32
      %12 = vector.broadcast %cst_9 : f32 to vector<16x512xf32>
      %c0_10 = arith.constant 0 : index
      %c0_11 = arith.constant 0 : index
      %13 = vector.load %arg8[%c0_10, %c0_11] : memref<16x512xf32, #tpu.memory_space<vmem>>, vector<16x512xf32>
      tpu.vector_store %arg8[%c0_10, %c0_11], %12 {strides = array<i32>} : memref<16x512xf32, #tpu.memory_space<vmem>>, vector<16x512xf32>,
    } else {
    }
    %c0 = arith.constant 0 : index
    %c0_1 = arith.constant 0 : index
    %3 = vector.load %arg8[%c0, %c0_1] : memref<16x512xf32, #tpu.memory_space<vmem>>, vector<16x512xf32>
    %c0_2 = arith.constant 0 : index
    %c0_3 = arith.constant 0 : index
    %4 = vector.load %arg2[%c0_2, %c0_3] : memref<16x512xbf16, #tpu.memory_space<vmem>>, vector<16x512xbf16>
    %c0_4 = arith.constant 0 : index
    %c0_5 = arith.constant 0 : index
    %5 = vector.load %arg3[%c0_4, %c0_5] : memref<512x512xbf16, #tpu.memory_space<vmem>>, vector<512x512xbf16>
    %cst = arith.constant dense<0.000000e+00> : vector<16x512xf32>
    %6 = tpu.matmul %4, %5, %cst {dimension_numbers = #tpu.dot_dimension_numbers<[1], [0], [0], [1], [0, 0, 1, 1], [], []>} : vector<16x512xbf16>, vector<512x512xbf16>, vector<16x512xf32> -> vector<16x512xf32>
    %7 = arith.addf %3, %6 : vector<16x512xf32>
    %c0_6 = arith.constant 0 : index
    %c0_7 = arith.constant 0 : index
    %8 = vector.load %arg8[%c0_6, %c0_7] : memref<16x512xf32, #tpu.memory_space<vmem>>, vector<16x512xf32>
    tpu.vector_store %arg8[%c0_6, %c0_7], %7 {strides = array<i32>} : memref<16x512xf32, #tpu.memory_space<vmem>>, vector<16x512xf32>,
    %c6_i32 = arith.constant 6 : i32
    %9 = arith.cmpi eq, %arg1, %c6_i32 : i32
    %10 = arith.extui %9 : i1 to i32
    %c0_i32_8 = arith.constant 0 : i32
    %11 = arith.cmpi ne, %10, %c0_i32_8 : i32
    scf.if %11 {
      %c0_9 = arith.constant 0 : index
      %c0_10 = arith.constant 0 : index
      %12 = vector.load %arg8[%c0_9, %c0_10] : memref<16x512xf32, #tpu.memory_space<vmem>>, vector<16x512xf32>
      %c0_11 = arith.constant 0 : index
      %c0_12 = arith.constant 0 : index
      %13 = vector.load %arg4[%c0_11, %c0_12] : memref<1x512xf32, #tpu.memory_space<vmem>>, vector<1x512xf32>
      %14 = vector.broadcast %13 : vector<1x512xf32> to vector<16x512xf32>
      %15 = arith.addf %12, %14 : vector<16x512xf32>
      %cst_13 = arith.constant 0.000000e+00 : f32
      %16 = vector.broadcast %cst_13 : f32 to vector<16x512xf32>
      %17 = arith.maximumf %15, %16 : vector<16x512xf32>
      %18 = arith.truncf %17 : vector<16x512xf32> to vector<16x512xbf16>
      %c0_14 = arith.constant 0 : index
      %c0_15 = arith.constant 0 : index
      %19 = vector.load %arg5[%c0_14, %c0_15] : memref<512x128xbf16, #tpu.memory_space<vmem>>, vector<512x128xbf16>
      %cst_16 = arith.constant dense<0.000000e+00> : vector<16x128xf32>
      %20 = tpu.matmul %18, %19, %cst_16 {dimension_numbers = #tpu.dot_dimension_numbers<[1], [0], [0], [1], [0, 0, 1, 1], [], []>} : vector<16x512xbf16>, vector<512x128xbf16>, vector<16x128xf32> -> vector<16x128xf32>
      %c0_17 = arith.constant 0 : index
      %c0_18 = arith.constant 0 : index
      %21 = vector.load %arg6[%c0_17, %c0_18] : memref<1x128xf32, #tpu.memory_space<vmem>>, vector<1x128xf32>
      %22 = vector.broadcast %21 : vector<1x128xf32> to vector<16x128xf32>
      %23 = arith.addf %20, %22 : vector<16x128xf32>
      %c0_19 = arith.constant 0 : index
      %c0_20 = arith.constant 0 : index
      %24 = vector.load %arg7[%c0_19, %c0_20] : memref<16x128xf32, #tpu.memory_space<vmem>>, vector<16x128xf32>
      tpu.vector_store %arg7[%c0_19, %c0_20], %23 {strides = array<i32>} : memref<16x128xf32, #tpu.memory_space<vmem>>, vector<16x128xf32>,
    } else {
    }
    return
  }
  func.func @transform_0(%arg0: i32, %arg1: i32) -> (i32, i32) {
    %c0_i32 = arith.constant 0 : i32
    return %arg0, %arg1 : i32, i32
  }
  func.func @transform_1(%arg0: i32, %arg1: i32) -> (i32, i32) {
    %c0_i32 = arith.constant 0 : i32
    %c0_i32_0 = arith.constant 0 : i32
    return %arg1, %c0_i32 : i32, i32
  }
  func.func @transform_2(%arg0: i32, %arg1: i32) -> (i32, i32) {
    %c0_i32 = arith.constant 0 : i32
    %c0_i32_0 = arith.constant 0 : i32
    %c0_i32_1 = arith.constant 0 : i32
    return %c0_i32, %c0_i32_0 : i32, i32
  }
  func.func @transform_3(%arg0: i32, %arg1: i32) -> (i32, i32) {
    %c0_i32 = arith.constant 0 : i32
    %c0_i32_0 = arith.constant 0 : i32
    %c0_i32_1 = arith.constant 0 : i32
    return %c0_i32, %c0_i32_0 : i32, i32
  }
  func.func @transform_4(%arg0: i32, %arg1: i32) -> (i32, i32) {
    %c0_i32 = arith.constant 0 : i32
    %c0_i32_0 = arith.constant 0 : i32
    %c0_i32_1 = arith.constant 0 : i32
    return %c0_i32, %c0_i32_0 : i32, i32
  }
  func.func @transform_5(%arg0: i32, %arg1: i32) -> (i32, i32) {
    %c0_i32 = arith.constant 0 : i32
    %c0_i32_0 = arith.constant 0 : i32
    return %arg0, %c0_i32 : i32, i32
  }
}

</mosaic_0001>

<llo_original>
// kernel: mnist_cnn_forward.5
$region0: #{mnist_cnn_forward.5}
  #allocation0 [shape = 'u32[]', space=smem, size = 0x4, offset = 0x4, fixed_abs, tag = 'smem constant byte address 0x4 - core index']
  #allocation1 [shape = 'u32[72,128]{1,0:T(1,128)}', space=vmem, size = 0x9000, scoped, tag = 'internal scratch']
  #allocation2 [shape = 'f32[256,128]{1,0:T(8,128)}', space=vmem, size = 0x20000, scoped, tag = 'scratch operand']
  %s0 = inlined_call_operand.vmem [shape: bf16[1792,128], index: 0, kind: input, shape index: {}]
  %s1 = inlined_call_operand.vmem [shape: bf16[128,128], index: 1, kind: input, shape index: {}]
  %s2 = inlined_call_operand.vmem [shape: f32[1,128], index: 2, kind: input, shape index: {}]
  %s3 = inlined_call_operand.vmem [shape: f32[1792,128], index: 3, kind: output, shape index: {}]
  %s4 = sld [smem:[#allocation0]]
  $region53: #{mnist_cnn_forward.5} parent=0
    _
  %s6 = ssub.s32 1, %s4
  %s7 = scalar_select 0, %s6, %s4
  loop: start=0, step=1, limit=9
  $region2: #{mnist_cnn_forward.5} parent=0 // loop_pre_header
    _
  $region3: #{mnist_cnn_forward.5} parent=0 // loop_header
    %s9 = sphi 0, %s13
    %p10 = scmp.ge.s32.totalorder %s9, 9
    %s16 = sphi 0, %s35
    %s17 = sphi 0, %s31
    %s18 = sphi 0, %s27
    %s19 = sphi 0, %s16
    %s20 = sphi 0, %s17
    %s21 = sphi 0, %s18
    %s22 = sphi 0, %s19
    %s23 = sphi 0, %s20
    %s24 = sphi 0, %s21
    %s40 = sphi 0, %s42
    %s43 = sphi 0, %s40
    %s44 = sphi 0, %s43
    %s60 = sphi 0, %s44
    %s68 = sphi 0, %s70
    %s71 = sphi 0, %s68
    %s72 = sphi 0, %s71
    %s88 = sphi 0, %s72
    %s94 = sphi 0, %s96
    %s97 = sphi 0, %s94
    %s98 = sphi 0, %s97
    %s114 = sphi 0, %s98
    %s122 = sphi 0, %s124
    %s125 = sphi 0, %s122
    %s126 = sphi 0, %s125
    %s142 = sphi 0, %s126
  $region4: #{mnist_cnn_forward.5} parent=0 // loop_header_branch
    %12 = sbr.rel (%p10) target = $region8
  $region5: #{mnist_cnn_forward.5} parent=0 // loop_body
    %s14 = ssub.s32 %s9, 1
    %s15 = ssub.s32 %s9, 2
    %s25 = sadd.s32 1, %s18
    %p26 = scmp.ge.s32.totalorder %s25, 1
    %s27 = scalar_select %p26, 0, %s25
    %s28 = sadd.s32 1, %s17
    %s29 = scalar_select %p26, %s28, %s17
    %p30 = scmp.ge.s32.totalorder %s29, 1
    %s31 = scalar_select %p30, 0, %s29
    %s32 = sadd.s32 1, %s16
    %s33 = scalar_select %p30, %s32, %s16
    %p34 = scmp.ge.s32.totalorder %s33, 7
    %s35 = scalar_select %p34, 0, %s33
    %s36 = ssub.s32 %s16, %s35
    %s37 = ssub.s32 %s18, %s27
    %s38 = sor.u32 %s36, %s37
    %p39 = scmp.eq.s32.totalorder %s38, 0
    %s41 = sadd.s32 %s40, 1
    %s42 = scalar_select %p39, %s40, %s41
    %p45 = pneg %p39
    %p46 = scmp.eq.s32.totalorder %s9, 6
    %p47 = por %p45, %p46
    %p48 = scmp.ne.s32.totalorder %s40, %s43
    %p49 = scmp.eq.s32.totalorder %s9, 0
    %p50 = por %p48, %p49
    %p51 = scmp.ne.s32.totalorder %s40, %s43
    %p52 = scmp.eq.s32.totalorder %s14, 6
    %p53 = por %p51, %p52
    %p54 = scmp.ne.s32.totalorder %s43, %s44
    %p55 = scmp.eq.s32.totalorder %s14, 0
    %p56 = por %p54, %p55
    %p57 = scmp.ne.s32.totalorder %s43, %s44
    %p58 = scmp.eq.s32.totalorder %s15, 6
    %p59 = por %p57, %p58
    %p61 = scmp.ne.s32.totalorder %s44, %s60
    %p62 = scmp.eq.s32.totalorder %s15, 0
    %p63 = por %p61, %p62
    %s64 = ssub.s32 %s18, %s27
    %s65 = ssub.s32 %s17, %s31
    %s66 = sor.u32 %s64, %s65
    %p67 = scmp.eq.s32.totalorder %s66, 0
    %s69 = sadd.s32 %s68, 1
    %s70 = scalar_select %p67, %s68, %s69
    %p73 = pneg %p67
    %p74 = scmp.eq.s32.totalorder %s9, 6
    %p75 = por %p73, %p74
    %p76 = scmp.ne.s32.totalorder %s68, %s71
    %p77 = scmp.eq.s32.totalorder %s9, 0
    %p78 = por %p76, %p77
    %p79 = scmp.ne.s32.totalorder %s68, %s71
    %p80 = scmp.eq.s32.totalorder %s14, 6
    %p81 = por %p79, %p80
    %p82 = scmp.ne.s32.totalorder %s71, %s72
    %p83 = scmp.eq.s32.totalorder %s14, 0
    %p84 = por %p82, %p83
    %p85 = scmp.ne.s32.totalorder %s71, %s72
    %p86 = scmp.eq.s32.totalorder %s15, 6
    %p87 = por %p85, %p86
    %p89 = scmp.ne.s32.totalorder %s72, %s88
    %p90 = scmp.eq.s32.totalorder %s15, 0
    %p91 = por %p89, %p90
    %s92 = ssub.s32 %s17, %s31
    %p93 = scmp.eq.s32.totalorder %s92, 0
    %s95 = sadd.s32 %s94, 1
    %s96 = scalar_select %p93, %s94, %s95
    %p99 = pneg %p93
    %p100 = scmp.eq.s32.totalorder %s9, 6
    %p101 = por %p99, %p100
    %p102 = scmp.ne.s32.totalorder %s94, %s97
    %p103 = scmp.eq.s32.totalorder %s9, 0
    %p104 = por %p102, %p103
    %p105 = scmp.ne.s32.totalorder %s94, %s97
    %p106 = scmp.eq.s32.totalorder %s14, 6
    %p107 = por %p105, %p106
    %p108 = scmp.ne.s32.totalorder %s97, %s98
    %p109 = scmp.eq.s32.totalorder %s14, 0
    %p110 = por %p108, %p109
    %p111 = scmp.ne.s32.totalorder %s97, %s98
    %p112 = scmp.eq.s32.totalorder %s15, 6
    %p113 = por %p111, %p112
    %p115 = scmp.ne.s32.totalorder %s98, %s114
    %p116 = scmp.eq.s32.totalorder %s15, 0
    %p117 = por %p115, %p116
    %s118 = ssub.s32 %s16, %s35
    %s119 = ssub.s32 %s17, %s31
    %s120 = sor.u32 %s118, %s119
    %p121 = scmp.eq.s32.totalorder %s120, 0
    %s123 = sadd.s32 %s122, 1
    %s124 = scalar_select %p121, %s122, %s123
    %p127 = pneg %p121
    %p128 = scmp.eq.s32.totalorder %s9, 6
    %p129 = por %p127, %p128
    %p130 = scmp.ne.s32.totalorder %s122, %s125
    %p131 = scmp.eq.s32.totalorder %s9, 0
    %p132 = por %p130, %p131
    %p133 = scmp.ne.s32.totalorder %s122, %s125
    %p134 = scmp.eq.s32.totalorder %s14, 6
    %p135 = por %p133, %p134
    %p136 = scmp.ne.s32.totalorder %s125, %s126
    %p137 = scmp.eq.s32.totalorder %s14, 0
    %p138 = por %p136, %p137
    %p139 = scmp.ne.s32.totalorder %s125, %s126
    %p140 = scmp.eq.s32.totalorder %s15, 6
    %p141 = por %p139, %p140
    %p143 = scmp.ne.s32.totalorder %s126, %s142
    %p144 = scmp.eq.s32.totalorder %s15, 0
    %p145 = por %p143, %p144
    %p146 = scmp.le.s32.totalorder 1, %s9
    %p147 = scmp.lt.s32.totalorder %s9, 8
    %p148 = pnand %p146, %p147
    %p149 = pneg %p148
    // Predicated region
    $region9: #{mnist_cnn_forward.5} parent=5 // pred_check
      _
    $region10: #{mnist_cnn_forward.5} parent=5 // pred_check_branch
      %151 = sbr.rel (%p148) target = $region12
    $region11: #{mnist_cnn_forward.5} parent=5 // pred_region
      %s152 = ssub.s32 %s9, 1
      // Predicated region
      $region13: #{mnist_cnn_forward.5} parent=11 // pred_check
        %p153 = pneg %p84
      $region14: #{mnist_cnn_forward.5} parent=11 // pred_check_branch
        %155 = sbr.rel (%p153) target = $region16
      $region15: #{mnist_cnn_forward.5} parent=11 // pred_region
        %s156 = smul.u32 16, %s21
        %p157 = scmp.lt.s32.totalorder %s156, 15
        %s158 = scalar_select %p157, %s156, 15
        %p159 = scmp.lt.s32.totalorder %s20, 0
        %s160 = scalar_select %p159, %s20, 0
        %s161 = sadd.s32 %s160, %s158
        %s162 = smul.addr %s161, 4
        %s163 = scalar_lea.vmem %s1, %s162
        %s164 = smul.u32 16, %s21
      $region16: #{mnist_cnn_forward.5} parent=11 // pred_fallthru
        _
      // Predicated region
      $region17: #{mnist_cnn_forward.5} parent=11 // pred_check
        %p165 = pneg %p110
      $region18: #{mnist_cnn_forward.5} parent=11 // pred_check_branch
        %167 = sbr.rel (%p165) target = $region20
      $region19: #{mnist_cnn_forward.5} parent=11 // pred_region
        %p168 = scmp.lt.s32.totalorder %s20, 0
        %s169 = scalar_select %p168, %s20, 0
        %s170 = scalar_lea.vmem %s2, %s169
      $region20: #{mnist_cnn_forward.5} parent=11 // pred_fallthru
        _
    $region12: #{mnist_cnn_forward.5} parent=5 // pred_fallthru
      _
    %p171 = scmp.lt.s32.totalorder %s9, 7
    // Predicated region
    $region21: #{mnist_cnn_forward.5} parent=5 // pred_check
      %p172 = pneg %p171
    $region22: #{mnist_cnn_forward.5} parent=5 // pred_check_branch
      %174 = sbr.rel (%p172) target = $region24
    $region23: #{mnist_cnn_forward.5} parent=5 // pred_region
      // Predicated region
      $region25: #{mnist_cnn_forward.5} parent=23 // pred_check
        %p175 = pneg %p50
      $region26: #{mnist_cnn_forward.5} parent=23 // pred_check_branch
        %177 = sbr.rel (%p175) target = $region28
      $region27: #{mnist_cnn_forward.5} parent=23 // pred_region
        %s178 = smul.u32 32, %s16
        %p179 = scmp.lt.s32.totalorder %s178, 223
        %s180 = scalar_select %p179, %s178, 223
        %p181 = scmp.lt.s32.totalorder %s18, 0
        %s182 = scalar_select %p181, %s18, 0
        %s183 = sadd.s32 %s182, %s180
        %s184 = smul.addr %s183, 4
        %s185 = scalar_lea.vmem %s0, %s184
        %s186 = smul.u32 32, %s16
      $region28: #{mnist_cnn_forward.5} parent=23 // pred_fallthru
        _
    $region24: #{mnist_cnn_forward.5} parent=5 // pred_fallthru
      _
    %p187 = scmp.le.s32.totalorder 1, %s9
    %p188 = scmp.lt.s32.totalorder %s9, 8
    %p189 = pnand %p187, %p188
    %p190 = pneg %p189
    // Predicated region
    $region29: #{mnist_cnn_forward.5} parent=5 // pred_check
      _
    $region30: #{mnist_cnn_forward.5} parent=5 // pred_check_branch
      %192 = sbr.rel (%p189) target = $region32
    $region31: #{mnist_cnn_forward.5} parent=5 // pred_region
      %s193 = ssub.s32 %s9, 1
      %s194 = smul.u32 32, %s19
      %p195 = scmp.lt.s32.totalorder %s194, 223
      %s196 = scalar_select %p195, %s194, 223
      %p197 = scmp.lt.s32.totalorder %s21, 0
      %s198 = scalar_select %p197, %s21, 0
      %s199 = sadd.s32 %s198, %s196
      %s200 = smul.addr %s199, 4
      %s201 = scalar_lea.vmem %s0, %s200
      %p202 = pneg %p56
      %p203 = pneg %p53
      %s204 = smul.u32 16, %s21
      %p205 = scmp.lt.s32.totalorder %s204, 15
      %s206 = scalar_select %p205, %s204, 15
      %p207 = scmp.lt.s32.totalorder %s20, 0
      %s208 = scalar_select %p207, %s20, 0
      %s209 = sadd.s32 %s208, %s206
      %s210 = smul.addr %s209, 4
      %s211 = scalar_lea.vmem %s1, %s210
      %p212 = pneg %p84
      %p213 = pneg %p81
      %p214 = scmp.lt.s32.totalorder %s20, 0
      %s215 = scalar_select %p214, %s20, 0
      %s216 = scalar_lea.vmem %s2, %s215
      %p217 = pneg %p110
      %p218 = pneg %p107
      %p219 = pneg %p138
      %p220 = pneg %p135
      %s221 = smul.u32 32, %s19
      %p222 = scmp.lt.s32.totalorder %s221, 223
      %s223 = scalar_select %p222, %s221, 223
      %p224 = scmp.lt.s32.totalorder %s20, 0
      %s225 = scalar_select %p224, %s20, 0
      %s226 = sadd.s32 %s225, %s223
      %s227 = smul.addr %s226, 8
      %s228 = scalar_lea.vmem %s3, %s227
      %s229 = smul.u32 32, %s19
      %p230 = scmp.lt.s32.totalorder %s229, 223
      %s231 = scalar_select %p230, %s229, 223
      %p232 = scmp.lt.s32.totalorder %s21, 0
      %s233 = scalar_select %p232, %s21, 0
      %s234 = sadd.s32 %s233, %s231
      %s235 = smul.addr %s234, 4
      %s236 = scalar_lea.vmem %s0, %s235
      %s237 = smul.u32 32, %s19
      %s238 = smul.u32 16, %s21
      %p239 = scmp.lt.s32.totalorder %s238, 15
      %s240 = scalar_select %p239, %s238, 15
      %p241 = scmp.lt.s32.totalorder %s20, 0
      %s242 = scalar_select %p241, %s20, 0
      %s243 = sadd.s32 %s242, %s240
      %s244 = smul.addr %s243, 4
      %s245 = scalar_lea.vmem %s1, %s244
      %s246 = smul.u32 16, %s21
      %p247 = scmp.lt.s32.totalorder %s20, 0
      %s248 = scalar_select %p247, %s20, 0
      %s249 = scalar_lea.vmem %s2, %s248
      %s250 = smul.u32 32, %s19
      %p251 = scmp.lt.s32.totalorder %s250, 223
      %s252 = scalar_select %p251, %s250, 223
      %p253 = scmp.lt.s32.totalorder %s20, 0
      %s254 = scalar_select %p253, %s20, 0
      %s255 = sadd.s32 %s254, %s252
      %s256 = smul.addr %s255, 8
      %s257 = scalar_lea.vmem %s3, %s256
      %s258 = smul.u32 32, %s19
      %p259 = scmp.eq.s32.totalorder %s21, 0
      // Predicated region
      $region33: #{mnist_cnn_forward.5} parent=31 // pred_check
        %p260 = pneg %p259
      $region34: #{mnist_cnn_forward.5} parent=31 // pred_check_branch
        %262 = sbr.rel (%p260) target = $region36
      $region35: #{mnist_cnn_forward.5} parent=31 // pred_region
        %263 = vst [vmem:[#allocation2] sm:$0xff] 0.0
        %264 = vst [vmem:[#allocation2 + $0x8] sm:$0xff] 0.0
        %265 = vst [vmem:[#allocation2 + $0x10] sm:$0xff] 0.0
        %266 = vst [vmem:[#allocation2 + $0x18] sm:$0xff] 0.0
        %267 = vst [vmem:[#allocation2 + $0x20] sm:$0xff] 0.0
        %268 = vst [vmem:[#allocation2 + $0x28] sm:$0xff] 0.0
        %269 = vst [vmem:[#allocation2 + $0x30] sm:$0xff] 0.0
        %270 = vst [vmem:[#allocation2 + $0x38] sm:$0xff] 0.0
        %271 = vst [vmem:[#allocation2 + $0x40] sm:$0xff] 0.0
        %272 = vst [vmem:[#allocation2 + $0x48] sm:$0xff] 0.0
        %273 = vst [vmem:[#allocation2 + $0x50] sm:$0xff] 0.0
        %274 = vst [vmem:[#allocation2 + $0x58] sm:$0xff] 0.0
        %275 = vst [vmem:[#allocation2 + $0x60] sm:$0xff] 0.0
        %276 = vst [vmem:[#allocation2 + $0x68] sm:$0xff] 0.0
        %277 = vst [vmem:[#allocation2 + $0x70] sm:$0xff] 0.0
        %278 = vst [vmem:[#allocation2 + $0x78] sm:$0xff] 0.0
        %279 = vst [vmem:[#allocation2 + $0x80] sm:$0xff] 0.0
        %280 = vst [vmem:[#allocation2 + $0x88] sm:$0xff] 0.0
        %281 = vst [vmem:[#allocation2 + $0x90] sm:$0xff] 0.0
        %282 = vst [vmem:[#allocation2 + $0x98] sm:$0xff] 0.0
        %283 = vst [vmem:[#allocation2 + $0xa0] sm:$0xff] 0.0
        %284 = vst [vmem:[#allocation2 + $0xa8] sm:$0xff] 0.0
        %285 = vst [vmem:[#allocation2 + $0xb0] sm:$0xff] 0.0
        %286 = vst [vmem:[#allocation2 + $0xb8] sm:$0xff] 0.0
        %287 = vst [vmem:[#allocation2 + $0xc0] sm:$0xff] 0.0
        %288 = vst [vmem:[#allocation2 + $0xc8] sm:$0xff] 0.0
        %289 = vst [vmem:[#allocation2 + $0xd0] sm:$0xff] 0.0
        %290 = vst [vmem:[#allocation2 + $0xd8] sm:$0xff] 0.0
        %291 = vst [vmem:[#allocation2 + $0xe0] sm:$0xff] 0.0
        %292 = vst [vmem:[#allocation2 + $0xe8] sm:$0xff] 0.0
        %293 = vst [vmem:[#allocation2 + $0xf0] sm:$0xff] 0.0
        %294 = vst [vmem:[#allocation2 + $0xf8] sm:$0xff] 0.0
      $region36: #{mnist_cnn_forward.5} parent=31 // pred_fallthru
        _
      %v295 = vld [vmem:[#allocation2] sm:$0xff]
      %v296 = vld [vmem:[#allocation2 + $0x8] sm:$0xff]
      %v297 = vld [vmem:[#allocation2 + $0x10] sm:$0xff]
      %v298 = vld [vmem:[#allocation2 + $0x18] sm:$0xff]
      %v299 = vld [vmem:[#allocation2 + $0x20] sm:$0xff]
      %v300 = vld [vmem:[#allocation2 + $0x28] sm:$0xff]
      %v301 = vld [vmem:[#allocation2 + $0x30] sm:$0xff]
      %v302 = vld [vmem:[#allocation2 + $0x38] sm:$0xff]
      %v303 = vld [vmem:[#allocation2 + $0x40] sm:$0xff]
      %v304 = vld [vmem:[#allocation2 + $0x48] sm:$0xff]
      %v305 = vld [vmem:[#allocation2 + $0x50] sm:$0xff]
      %v306 = vld [vmem:[#allocation2 + $0x58] sm:$0xff]
      %v307 = vld [vmem:[#allocation2 + $0x60] sm:$0xff]
      %v308 = vld [vmem:[#allocation2 + $0x68] sm:$0xff]
      %v309 = vld [vmem:[#allocation2 + $0x70] sm:$0xff]
      %v310 = vld [vmem:[#allocation2 + $0x78] sm:$0xff]
      %v311 = vld [vmem:[#allocation2 + $0x80] sm:$0xff]
      %v312 = vld [vmem:[#allocation2 + $0x88] sm:$0xff]
      %v313 = vld [vmem:[#allocation2 + $0x90] sm:$0xff]
      %v314 = vld [vmem:[#allocation2 + $0x98] sm:$0xff]
      %v315 = vld [vmem:[#allocation2 + $0xa0] sm:$0xff]
      %v316 = vld [vmem:[#allocation2 + $0xa8] sm:$0xff]
      %v317 = vld [vmem:[#allocation2 + $0xb0] sm:$0xff]
      %v318 = vld [vmem:[#allocation2 + $0xb8] sm:$0xff]
      %v319 = vld [vmem:[#allocation2 + $0xc0] sm:$0xff]
      %v320 = vld [vmem:[#allocation2 + $0xc8] sm:$0xff]
      %v321 = vld [vmem:[#allocation2 + $0xd0] sm:$0xff]
      %v322 = vld [vmem:[#allocation2 + $0xd8] sm:$0xff]
      %v323 = vld [vmem:[#allocation2 + $0xe0] sm:$0xff]
      %v324 = vld [vmem:[#allocation2 + $0xe8] sm:$0xff]
      %v325 = vld [vmem:[#allocation2 + $0xf0] sm:$0xff]
      %v326 = vld [vmem:[#allocation2 + $0xf8] sm:$0xff]
      %v327 = vld [vmem:[%s236] sm:$0xf]
      %v328 = vld [vmem:[%s236 + $0x4] sm:$0xf]
      %v329 = vld [vmem:[%s236 + $0x8] sm:$0xf]
      %v330 = vld [vmem:[%s236 + $0xc] sm:$0xf]
      %v331 = vld [vmem:[%s236 + $0x10] sm:$0xf]
      %v332 = vld [vmem:[%s236 + $0x14] sm:$0xf]
      %v333 = vld [vmem:[%s236 + $0x18] sm:$0xf]
      %v334 = vld [vmem:[%s236 + $0x1c] sm:$0xf]
      %v335 = vld [vmem:[%s236 + $0x20] sm:$0xf]
      %v336 = vld [vmem:[%s236 + $0x24] sm:$0xf]
      %v337 = vld [vmem:[%s236 + $0x28] sm:$0xf]
      %v338 = vld [vmem:[%s236 + $0x2c] sm:$0xf]
      %v339 = vld [vmem:[%s236 + $0x30] sm:$0xf]
      %v340 = vld [vmem:[%s236 + $0x34] sm:$0xf]
      %v341 = vld [vmem:[%s236 + $0x38] sm:$0xf]
      %v342 = vld [vmem:[%s236 + $0x3c] sm:$0xf]
      %v343 = vld [vmem:[%s236 + $0x40] sm:$0xf]
      %v344 = vld [vmem:[%s236 + $0x44] sm:$0xf]
      %v345 = vld [vmem:[%s236 + $0x48] sm:$0xf]
      %v346 = vld [vmem:[%s236 + $0x4c] sm:$0xf]
      %v347 = vld [vmem:[%s236 + $0x50] sm:$0xf]
      %v348 = vld [vmem:[%s236 + $0x54] sm:$0xf]
      %v349 = vld [vmem:[%s236 + $0x58] sm:$0xf]
      %v350 = vld [vmem:[%s236 + $0x5c] sm:$0xf]
      %v351 = vld [vmem:[%s236 + $0x60] sm:$0xf]
      %v352 = vld [vmem:[%s236 + $0x64] sm:$0xf]
      %v353 = vld [vmem:[%s236 + $0x68] sm:$0xf]
      %v354 = vld [vmem:[%s236 + $0x6c] sm:$0xf]
      %v355 = vld [vmem:[%s236 + $0x70] sm:$0xf]
      %v356 = vld [vmem:[%s236 + $0x74] sm:$0xf]
      %v357 = vld [vmem:[%s236 + $0x78] sm:$0xf]
      %v358 = vld [vmem:[%s236 + $0x7c] sm:$0xf]
      %v359 = vld [vmem:[%s245] sm:$0xf]
      %v360 = vld [vmem:[%s245 + $0x4] sm:$0xf]
      %v361 = vld [vmem:[%s245 + $0x8] sm:$0xf]
      %v362 = vld [vmem:[%s245 + $0xc] sm:$0xf]
      %v363 = vld [vmem:[%s245 + $0x10] sm:$0xf]
      %v364 = vld [vmem:[%s245 + $0x14] sm:$0xf]
      %v365 = vld [vmem:[%s245 + $0x18] sm:$0xf]
      %v366 = vld [vmem:[%s245 + $0x1c] sm:$0xf]
      %v367 = vld [vmem:[%s245 + $0x20] sm:$0xf]
      %v368 = vld [vmem:[%s245 + $0x24] sm:$0xf]
      %v369 = vld [vmem:[%s245 + $0x28] sm:$0xf]
      %v370 = vld [vmem:[%s245 + $0x2c] sm:$0xf]
      %v371 = vld [vmem:[%s245 + $0x30] sm:$0xf]
      %v372 = vld [vmem:[%s245 + $0x34] sm:$0xf]
      %v373 = vld [vmem:[%s245 + $0x38] sm:$0xf]
      %v374 = vld [vmem:[%s245 + $0x3c] sm:$0xf]
      %v407 = vunpack.c.l.b16 %v327
      %v408 = vunpack.c.l.b16 %v328
      %v409 = vunpack.c.l.b16 %v329
      %v410 = vunpack.c.l.b16 %v330
      %v411 = vunpack.c.l.b16 %v331
      %v412 = vunpack.c.l.b16 %v332
      %v413 = vunpack.c.l.b16 %v333
      %v414 = vunpack.c.l.b16 %v334
      %v415 = vunpack.c.l.b16 %v335
      %v416 = vunpack.c.l.b16 %v336
      %v417 = vunpack.c.l.b16 %v337
      %v418 = vunpack.c.l.b16 %v338
      %v419 = vunpack.c.l.b16 %v339
      %v420 = vunpack.c.l.b16 %v340
      %v421 = vunpack.c.l.b16 %v341
      %v422 = vunpack.c.l.b16 %v342
      %v423 = vunpack.c.l.b16 %v343
      %v424 = vunpack.c.l.b16 %v344
      %v425 = vunpack.c.l.b16 %v345
      %v426 = vunpack.c.l.b16 %v346
      %v427 = vunpack.c.l.b16 %v347
      %v428 = vunpack.c.l.b16 %v348
      %v429 = vunpack.c.l.b16 %v349
      %v430 = vunpack.c.l.b16 %v350
      %v431 = vunpack.c.l.b16 %v351
      %v432 = vunpack.c.l.b16 %v352
      %v433 = vunpack.c.l.b16 %v353
      %v434 = vunpack.c.l.b16 %v354
      %v435 = vunpack.c.l.b16 %v355
      %v436 = vunpack.c.l.b16 %v356
      %v437 = vunpack.c.l.b16 %v357
      %v438 = vunpack.c.l.b16 %v358
      %v439 = vpack.c.b16 %v408, %v407
      %v440 = vpack.c.b16 %v410, %v409
      %v441 = vpack.c.b16 %v412, %v411
      %v442 = vpack.c.b16 %v414, %v413
      %v443 = vpack.c.b16 %v416, %v415
      %v444 = vpack.c.b16 %v418, %v417
      %v445 = vpack.c.b16 %v420, %v419
      %v446 = vpack.c.b16 %v422, %v421
      %v447 = vpack.c.b16 %v424, %v423
      %v448 = vpack.c.b16 %v426, %v425
      %v449 = vpack.c.b16 %v428, %v427
      %v450 = vpack.c.b16 %v430, %v429
      %v451 = vpack.c.b16 %v432, %v431
      %v452 = vpack.c.b16 %v434, %v433
      %v453 = vpack.c.b16 %v436, %v435
      %v454 = vpack.c.b16 %v438, %v437
      %v487 = vunpack.c.l.b16 %v359
      %v488 = vunpack.c.l.b16 %v360
      %v489 = vunpack.c.l.b16 %v361
      %v490 = vunpack.c.l.b16 %v362
      %v491 = vunpack.c.l.b16 %v363
      %v492 = vunpack.c.l.b16 %v364
      %v493 = vunpack.c.l.b16 %v365
      %v494 = vunpack.c.l.b16 %v366
      %v495 = vunpack.c.l.b16 %v367
      %v496 = vunpack.c.l.b16 %v368
      %v497 = vunpack.c.l.b16 %v369
      %v498 = vunpack.c.l.b16 %v370
      %v499 = vunpack.c.l.b16 %v371
      %v500 = vunpack.c.l.b16 %v372
      %v501 = vunpack.c.l.b16 %v373
      %v502 = vunpack.c.l.b16 %v374
      %v503 = vpack.c.b16 %v488, %v487
      %v504 = vpack.c.b16 %v490, %v489
      %v505 = vpack.c.b16 %v492, %v491
      %v506 = vpack.c.b16 %v494, %v493
      %v507 = vpack.c.b16 %v496, %v495
      %v508 = vpack.c.b16 %v498, %v497
      %v509 = vpack.c.b16 %v500, %v499
      %v510 = vpack.c.b16 %v502, %v501
      %519 = vmatpush.bf16.msra.mxu0 %v510
      %520 = vmatpush.bf16.msra.mxu0 %v509
      %521 = vmatpush.bf16.msra.mxu0 %v508
      %522 = vmatpush.bf16.msra.mxu0 %v507
      %523 = vmatpush.bf16.msra.mxu0 %v506
      %524 = vmatpush.bf16.msra.mxu0 %v505
      %525 = vmatpush.bf16.msra.mxu0 %v504
      %526 = vmatpush.bf16.msra.mxu0 %v503
      %527 = vmatmul.bf16.gmra.mxu0 %v439
      %v528 = vpop.f32.mrf.mxu0
      %v529 = vadd.f32 0.0, %v528
      %v530 = vpop.f32.mrf.mxu0
      %v531 = vadd.f32 0.0, %v530
      %532 = vmatmul.bf16.gmra.mxu0 %v440
      %v533 = vpop.f32.mrf.mxu0
      %v534 = vadd.f32 0.0, %v533
      %v535 = vpop.f32.mrf.mxu0
      %v536 = vadd.f32 0.0, %v535
      %537 = vmatmul.bf16.gmra.mxu0 %v441
      %v538 = vpop.f32.mrf.mxu0
      %v539 = vadd.f32 0.0, %v538
      %v540 = vpop.f32.mrf.mxu0
      %v541 = vadd.f32 0.0, %v540
      %542 = vmatmul.bf16.gmra.mxu0 %v442
      %v543 = vpop.f32.mrf.mxu0
      %v544 = vadd.f32 0.0, %v543
      %v545 = vpop.f32.mrf.mxu0
      %v546 = vadd.f32 0.0, %v545
      %547 = vmatmul.bf16.gmra.mxu0 %v443
      %v548 = vpop.f32.mrf.mxu0
      %v549 = vadd.f32 0.0, %v548
      %v550 = vpop.f32.mrf.mxu0
      %v551 = vadd.f32 0.0, %v550
      %552 = vmatmul.bf16.gmra.mxu0 %v444
      %v553 = vpop.f32.mrf.mxu0
      %v554 = vadd.f32 0.0, %v553
      %v555 = vpop.f32.mrf.mxu0
      %v556 = vadd.f32 0.0, %v555
      %557 = vmatmul.bf16.gmra.mxu0 %v445
      %v558 = vpop.f32.mrf.mxu0
      %v559 = vadd.f32 0.0, %v558
      %v560 = vpop.f32.mrf.mxu0
      %v561 = vadd.f32 0.0, %v560
      %562 = vmatmul.bf16.gmra.mxu0 %v446
      %v563 = vpop.f32.mrf.mxu0
      %v564 = vadd.f32 0.0, %v563
      %v565 = vpop.f32.mrf.mxu0
      %v566 = vadd.f32 0.0, %v565
      %567 = vmatmul.bf16.gmra.mxu0 %v447
      %v568 = vpop.f32.mrf.mxu0
      %v569 = vadd.f32 0.0, %v568
      %v570 = vpop.f32.mrf.mxu0
      %v571 = vadd.f32 0.0, %v570
      %572 = vmatmul.bf16.gmra.mxu0 %v448
      %v573 = vpop.f32.mrf.mxu0
      %v574 = vadd.f32 0.0, %v573
      %v575 = vpop.f32.mrf.mxu0
      %v576 = vadd.f32 0.0, %v575
      %577 = vmatmul.bf16.gmra.mxu0 %v449
      %v578 = vpop.f32.mrf.mxu0
      %v579 = vadd.f32 0.0, %v578
      %v580 = vpop.f32.mrf.mxu0
      %v581 = vadd.f32 0.0, %v580
      %582 = vmatmul.bf16.gmra.mxu0 %v450
      %v583 = vpop.f32.mrf.mxu0
      %v584 = vadd.f32 0.0, %v583
      %v585 = vpop.f32.mrf.mxu0
      %v586 = vadd.f32 0.0, %v585
      %587 = vmatmul.bf16.gmra.mxu0 %v451
      %v588 = vpop.f32.mrf.mxu0
      %v589 = vadd.f32 0.0, %v588
      %v590 = vpop.f32.mrf.mxu0
      %v591 = vadd.f32 0.0, %v590
      %592 = vmatmul.bf16.gmra.mxu0 %v452
      %v593 = vpop.f32.mrf.mxu0
      %v594 = vadd.f32 0.0, %v593
      %v595 = vpop.f32.mrf.mxu0
      %v596 = vadd.f32 0.0, %v595
      %597 = vmatmul.bf16.gmra.mxu0 %v453
      %v598 = vpop.f32.mrf.mxu0
      %v599 = vadd.f32 0.0, %v598
      %v600 = vpop.f32.mrf.mxu0
      %v601 = vadd.f32 0.0, %v600
      %602 = vmatmul.bf16.gmra.mxu0 %v454
      %v603 = vpop.f32.mrf.mxu0
      %v604 = vadd.f32 0.0, %v603
      %v605 = vpop.f32.mrf.mxu0
      %v606 = vadd.f32 0.0, %v605
      %607 = vdwg.mxu0
      %v608 = vadd.f32 %v295, %v529
      %v609 = vadd.f32 %v296, %v531
      %v610 = vadd.f32 %v297, %v534
      %v611 = vadd.f32 %v298, %v536
      %v612 = vadd.f32 %v299, %v539
      %v613 = vadd.f32 %v300, %v541
      %v614 = vadd.f32 %v301, %v544
      %v615 = vadd.f32 %v302, %v546
      %v616 = vadd.f32 %v303, %v549
      %v617 = vadd.f32 %v304, %v551
      %v618 = vadd.f32 %v305, %v554
      %v619 = vadd.f32 %v306, %v556
      %v620 = vadd.f32 %v307, %v559
      %v621 = vadd.f32 %v308, %v561
      %v622 = vadd.f32 %v309, %v564
      %v623 = vadd.f32 %v310, %v566
      %v624 = vadd.f32 %v311, %v569
      %v625 = vadd.f32 %v312, %v571
      %v626 = vadd.f32 %v313, %v574
      %v627 = vadd.f32 %v314, %v576
      %v628 = vadd.f32 %v315, %v579
      %v629 = vadd.f32 %v316, %v581
      %v630 = vadd.f32 %v317, %v584
      %v631 = vadd.f32 %v318, %v586
      %v632 = vadd.f32 %v319, %v589
      %v633 = vadd.f32 %v320, %v591
      %v634 = vadd.f32 %v321, %v594
      %v635 = vadd.f32 %v322, %v596
      %v636 = vadd.f32 %v323, %v599
      %v637 = vadd.f32 %v324, %v601
      %v638 = vadd.f32 %v325, %v604
      %v639 = vadd.f32 %v326, %v606
      %640 = vst [vmem:[#allocation2] sm:$0xff] %v608
      %641 = vst [vmem:[#allocation2 + $0x8] sm:$0xff] %v609
      %642 = vst [vmem:[#allocation2 + $0x10] sm:$0xff] %v610
      %643 = vst [vmem:[#allocation2 + $0x18] sm:$0xff] %v611
      %644 = vst [vmem:[#allocation2 + $0x20] sm:$0xff] %v612
      %645 = vst [vmem:[#allocation2 + $0x28] sm:$0xff] %v613
      %646 = vst [vmem:[#allocation2 + $0x30] sm:$0xff] %v614
      %647 = vst [vmem:[#allocation2 + $0x38] sm:$0xff] %v615
      %648 = vst [vmem:[#allocation2 + $0x40] sm:$0xff] %v616
      %649 = vst [vmem:[#allocation2 + $0x48] sm:$0xff] %v617
      %650 = vst [vmem:[#allocation2 + $0x50] sm:$0xff] %v618
      %651 = vst [vmem:[#allocation2 + $0x58] sm:$0xff] %v619
      %652 = vst [vmem:[#allocation2 + $0x60] sm:$0xff] %v620
      %653 = vst [vmem:[#allocation2 + $0x68] sm:$0xff] %v621
      %654 = vst [vmem:[#allocation2 + $0x70] sm:$0xff] %v622
      %655 = vst [vmem:[#allocation2 + $0x78] sm:$0xff] %v623
      %656 = vst [vmem:[#allocation2 + $0x80] sm:$0xff] %v624
      %657 = vst [vmem:[#allocation2 + $0x88] sm:$0xff] %v625
      %658 = vst [vmem:[#allocation2 + $0x90] sm:$0xff] %v626
      %659 = vst [vmem:[#allocation2 + $0x98] sm:$0xff] %v627
      %660 = vst [vmem:[#allocation2 + $0xa0] sm:$0xff] %v628
      %661 = vst [vmem:[#allocation2 + $0xa8] sm:$0xff] %v629
      %662 = vst [vmem:[#allocation2 + $0xb0] sm:$0xff] %v630
      %663 = vst [vmem:[#allocation2 + $0xb8] sm:$0xff] %v631
      %664 = vst [vmem:[#allocation2 + $0xc0] sm:$0xff] %v632
      %665 = vst [vmem:[#allocation2 + $0xc8] sm:$0xff] %v633
      %666 = vst [vmem:[#allocation2 + $0xd0] sm:$0xff] %v634
      %667 = vst [vmem:[#allocation2 + $0xd8] sm:$0xff] %v635
      %668 = vst [vmem:[#allocation2 + $0xe0] sm:$0xff] %v636
      %669 = vst [vmem:[#allocation2 + $0xe8] sm:$0xff] %v637
      %670 = vst [vmem:[#allocation2 + $0xf0] sm:$0xff] %v638
      %671 = vst [vmem:[#allocation2 + $0xf8] sm:$0xff] %v639
      // Predicated region
      $region37: #{mnist_cnn_forward.5} parent=31 // pred_check
        %p672 = pneg %p259
      $region38: #{mnist_cnn_forward.5} parent=31 // pred_check_branch
        %674 = sbr.rel (%p672) target = $region40
      $region39: #{mnist_cnn_forward.5} parent=31 // pred_region
        %v675 = vld [vmem:[#allocation2] sm:$0xff]
        %v676 = vld [vmem:[#allocation2 + $0x8] sm:$0xff]
        %v677 = vld [vmem:[#allocation2 + $0x10] sm:$0xff]
        %v678 = vld [vmem:[#allocation2 + $0x18] sm:$0xff]
        %v679 = vld [vmem:[#allocation2 + $0x20] sm:$0xff]
        %v680 = vld [vmem:[#allocation2 + $0x28] sm:$0xff]
        %v681 = vld [vmem:[#allocation2 + $0x30] sm:$0xff]
        %v682 = vld [vmem:[#allocation2 + $0x38] sm:$0xff]
        %v683 = vld [vmem:[#allocation2 + $0x40] sm:$0xff]
        %v684 = vld [vmem:[#allocation2 + $0x48] sm:$0xff]
        %v685 = vld [vmem:[#allocation2 + $0x50] sm:$0xff]
        %v686 = vld [vmem:[#allocation2 + $0x58] sm:$0xff]
        %v687 = vld [vmem:[#allocation2 + $0x60] sm:$0xff]
        %v688 = vld [vmem:[#allocation2 + $0x68] sm:$0xff]
        %v689 = vld [vmem:[#allocation2 + $0x70] sm:$0xff]
        %v690 = vld [vmem:[#allocation2 + $0x78] sm:$0xff]
        %v691 = vld [vmem:[#allocation2 + $0x80] sm:$0xff]
        %v692 = vld [vmem:[#allocation2 + $0x88] sm:$0xff]
        %v693 = vld [vmem:[#allocation2 + $0x90] sm:$0xff]
        %v694 = vld [vmem:[#allocation2 + $0x98] sm:$0xff]
        %v695 = vld [vmem:[#allocation2 + $0xa0] sm:$0xff]
        %v696 = vld [vmem:[#allocation2 + $0xa8] sm:$0xff]
        %v697 = vld [vmem:[#allocation2 + $0xb0] sm:$0xff]
        %v698 = vld [vmem:[#allocation2 + $0xb8] sm:$0xff]
        %v699 = vld [vmem:[#allocation2 + $0xc0] sm:$0xff]
        %v700 = vld [vmem:[#allocation2 + $0xc8] sm:$0xff]
        %v701 = vld [vmem:[#allocation2 + $0xd0] sm:$0xff]
        %v702 = vld [vmem:[#allocation2 + $0xd8] sm:$0xff]
        %v703 = vld [vmem:[#allocation2 + $0xe0] sm:$0xff]
        %v704 = vld [vmem:[#allocation2 + $0xe8] sm:$0xff]
        %v705 = vld [vmem:[#allocation2 + $0xf0] sm:$0xff]
        %v706 = vld [vmem:[#allocation2 + $0xf8] sm:$0xff]
        %v707 = vld [vmem:[%s249] sm:$0x1]
        %v709 = vperm.slane %v707, 0
        %v711 = vadd.f32 %v675, %v709
        %v712 = vadd.f32 %v676, %v709
        %v713 = vadd.f32 %v677, %v709
        %v714 = vadd.f32 %v678, %v709
        %v715 = vadd.f32 %v679, %v709
        %v716 = vadd.f32 %v680, %v709
        %v717 = vadd.f32 %v681, %v709
        %v718 = vadd.f32 %v682, %v709
        %v719 = vadd.f32 %v683, %v709
        %v720 = vadd.f32 %v684, %v709
        %v721 = vadd.f32 %v685, %v709
        %v722 = vadd.f32 %v686, %v709
        %v723 = vadd.f32 %v687, %v709
        %v724 = vadd.f32 %v688, %v709
        %v725 = vadd.f32 %v689, %v709
        %v726 = vadd.f32 %v690, %v709
        %v727 = vadd.f32 %v691, %v709
        %v728 = vadd.f32 %v692, %v709
        %v729 = vadd.f32 %v693, %v709
        %v730 = vadd.f32 %v694, %v709
        %v731 = vadd.f32 %v695, %v709
        %v732 = vadd.f32 %v696, %v709
        %v733 = vadd.f32 %v697, %v709
        %v734 = vadd.f32 %v698, %v709
        %v735 = vadd.f32 %v699, %v709
        %v736 = vadd.f32 %v700, %v709
        %v737 = vadd.f32 %v701, %v709
        %v738 = vadd.f32 %v702, %v709
        %v739 = vadd.f32 %v703, %v709
        %v740 = vadd.f32 %v704, %v709
        %v741 = vadd.f32 %v705, %v709
        %v742 = vadd.f32 %v706, %v709
        %v743 = vmax.f32 %v711, 0.0
        %v744 = vmax.f32 %v712, 0.0
        %v745 = vmax.f32 %v713, 0.0
        %v746 = vmax.f32 %v714, 0.0
        %v747 = vmax.f32 %v715, 0.0
        %v748 = vmax.f32 %v716, 0.0
        %v749 = vmax.f32 %v717, 0.0
        %v750 = vmax.f32 %v718, 0.0
        %v751 = vmax.f32 %v719, 0.0
        %v752 = vmax.f32 %v720, 0.0
        %v753 = vmax.f32 %v721, 0.0
        %v754 = vmax.f32 %v722, 0.0
        %v755 = vmax.f32 %v723, 0.0
        %v756 = vmax.f32 %v724, 0.0
        %v757 = vmax.f32 %v725, 0.0
        %v758 = vmax.f32 %v726, 0.0
        %v759 = vmax.f32 %v727, 0.0
        %v760 = vmax.f32 %v728, 0.0
        %v761 = vmax.f32 %v729, 0.0
        %v762 = vmax.f32 %v730, 0.0
        %v763 = vmax.f32 %v731, 0.0
        %v764 = vmax.f32 %v732, 0.0
        %v765 = vmax.f32 %v733, 0.0
        %v766 = vmax.f32 %v734, 0.0
        %v767 = vmax.f32 %v735, 0.0
        %v768 = vmax.f32 %v736, 0.0
        %v769 = vmax.f32 %v737, 0.0
        %v770 = vmax.f32 %v738, 0.0
        %v771 = vmax.f32 %v739, 0.0
        %v772 = vmax.f32 %v740, 0.0
        %v773 = vmax.f32 %v741, 0.0
        %v774 = vmax.f32 %v742, 0.0
        %775 = vst [vmem:[%s257] sm:$0xff] %v743
        %776 = vst [vmem:[%s257 + $0x8] sm:$0xff] %v744
        %777 = vst [vmem:[%s257 + $0x10] sm:$0xff] %v745
        %778 = vst [vmem:[%s257 + $0x18] sm:$0xff] %v746
        %779 = vst [vmem:[%s257 + $0x20] sm:$0xff] %v747
        %780 = vst [vmem:[%s257 + $0x28] sm:$0xff] %v748
        %781 = vst [vmem:[%s257 + $0x30] sm:$0xff] %v749
        %782 = vst [vmem:[%s257 + $0x38] sm:$0xff] %v750
        %783 = vst [vmem:[%s257 + $0x40] sm:$0xff] %v751
        %784 = vst [vmem:[%s257 + $0x48] sm:$0xff] %v752
        %785 = vst [vmem:[%s257 + $0x50] sm:$0xff] %v753
        %786 = vst [vmem:[%s257 + $0x58] sm:$0xff] %v754
        %787 = vst [vmem:[%s257 + $0x60] sm:$0xff] %v755
        %788 = vst [vmem:[%s257 + $0x68] sm:$0xff] %v756
        %789 = vst [vmem:[%s257 + $0x70] sm:$0xff] %v757
        %790 = vst [vmem:[%s257 + $0x78] sm:$0xff] %v758
        %791 = vst [vmem:[%s257 + $0x80] sm:$0xff] %v759
        %792 = vst [vmem:[%s257 + $0x88] sm:$0xff] %v760
        %793 = vst [vmem:[%s257 + $0x90] sm:$0xff] %v761
        %794 = vst [vmem:[%s257 + $0x98] sm:$0xff] %v762
        %795 = vst [vmem:[%s257 + $0xa0] sm:$0xff] %v763
        %796 = vst [vmem:[%s257 + $0xa8] sm:$0xff] %v764
        %797 = vst [vmem:[%s257 + $0xb0] sm:$0xff] %v765
        %798 = vst [vmem:[%s257 + $0xb8] sm:$0xff] %v766
        %799 = vst [vmem:[%s257 + $0xc0] sm:$0xff] %v767
        %800 = vst [vmem:[%s257 + $0xc8] sm:$0xff] %v768
        %801 = vst [vmem:[%s257 + $0xd0] sm:$0xff] %v769
        %802 = vst [vmem:[%s257 + $0xd8] sm:$0xff] %v770
        %803 = vst [vmem:[%s257 + $0xe0] sm:$0xff] %v771
        %804 = vst [vmem:[%s257 + $0xe8] sm:$0xff] %v772
        %805 = vst [vmem:[%s257 + $0xf0] sm:$0xff] %v773
        %806 = vst [vmem:[%s257 + $0xf8] sm:$0xff] %v774
      $region40: #{mnist_cnn_forward.5} parent=31 // pred_fallthru
        _
      %s807 = smul.u32 32, %s19
      %p808 = scmp.lt.s32.totalorder %s807, 223
      %s809 = scalar_select %p808, %s807, 223
      %p810 = scmp.lt.s32.totalorder %s20, 0
      %s811 = scalar_select %p810, %s20, 0
      %s812 = sadd.s32 %s811, %s809
      %s813 = smul.addr %s812, 8
      %s814 = scalar_lea.vmem %s3, %s813
      // Predicated region
      $region41: #{mnist_cnn_forward.5} parent=31 // pred_check
        %p815 = pneg %p135
      $region42: #{mnist_cnn_forward.5} parent=31 // pred_check_branch
        %817 = sbr.rel (%p815) target = $region44
      $region43: #{mnist_cnn_forward.5} parent=31 // pred_region
        %s818 = smul.u32 32, %s19
      $region44: #{mnist_cnn_forward.5} parent=31 // pred_fallthru
        _
    $region32: #{mnist_cnn_forward.5} parent=5 // pred_fallthru
      _
    %p819 = scmp.le.s32.totalorder 2, %s9
    // Predicated region
    $region45: #{mnist_cnn_forward.5} parent=5 // pred_check
      %p820 = pneg %p819
    $region46: #{mnist_cnn_forward.5} parent=5 // pred_check_branch
      %822 = sbr.rel (%p820) target = $region48
    $region47: #{mnist_cnn_forward.5} parent=5 // pred_region
      %s823 = ssub.s32 %s9, 2
      // Predicated region
      $region49: #{mnist_cnn_forward.5} parent=47 // pred_check
        %p824 = pneg %p141
      $region50: #{mnist_cnn_forward.5} parent=47 // pred_check_branch
        %826 = sbr.rel (%p824) target = $region52
      $region51: #{mnist_cnn_forward.5} parent=47 // pred_region
        %s827 = smul.u32 32, %s22
        %p828 = scmp.lt.s32.totalorder %s827, 223
        %s829 = scalar_select %p828, %s827, 223
        %p830 = scmp.lt.s32.totalorder %s23, 0
        %s831 = scalar_select %p830, %s23, 0
        %s832 = sadd.s32 %s831, %s829
        %s833 = smul.addr %s832, 8
        %s834 = scalar_lea.vmem %s3, %s833
      $region52: #{mnist_cnn_forward.5} parent=47 // pred_fallthru
        _
    $region48: #{mnist_cnn_forward.5} parent=5 // pred_fallthru
      _
  $region6: #{mnist_cnn_forward.5} parent=0 // loop_footer
    %s13 = sadd.s32 1, %s9
  $region7: #{mnist_cnn_forward.5} parent=0 // loop_footer_branch
    %8 = sbr.rel target = $region3
  $region8: #{mnist_cnn_forward.5} parent=0 // loop_exit
    _

// kernel: mnist_cnn_forward.6
$region0: #{mnist_cnn_forward.6}
  #allocation0 [shape = 'u32[]', space=smem, size = 0x4, offset = 0x4, fixed_abs, tag = 'smem constant byte address 0x4 - core index']
  #allocation1 [shape = 'u32[72,128]{1,0:T(1,128)}', space=vmem, size = 0x9000, scoped, tag = 'internal scratch']
  %s0 = inlined_call_operand.vmem [shape: f32[32,7168], index: 0, kind: input, shape index: {}]
  %s1 = inlined_call_operand.vmem [shape: f32[32,1792], index: 1, kind: output, shape index: {}]
  %s2 = sld [smem:[#allocation0]]
  $region14: #{mnist_cnn_forward.6} parent=0
    _
  %s4 = ssub.s32 1, %s2
  %s5 = scalar_select 0, %s4, %s2
  // Predicated region
  $region2: #{mnist_cnn_forward.6} parent=0 // pred_check
    _
  $region3: #{mnist_cnn_forward.6} parent=0 // pred_check_branch
    %7 = sbr.rel (0) target = $region5
  $region4: #{mnist_cnn_forward.6} parent=0 // pred_region
    _
  $region5: #{mnist_cnn_forward.6} parent=0 // pred_fallthru
    _
  %v8 = vld [vmem:[%s0] sm:$0xff]
  %v9 = vld [vmem:[%s0 + $0x8] sm:$0xff]
  %v10 = vld [vmem:[%s0 + $0x10] sm:$0xff]
  %v11 = vld [vmem:[%s0 + $0x18] sm:$0xff]
  %v12 = vld [vmem:[%s0 + $0x20] sm:$0xff]
  %v13 = vld [vmem:[%s0 + $0x28] sm:$0xff]
  %v14 = vld [vmem:[%s0 + $0x30] sm:$0xff]
  %v15 = vld [vmem:[%s0 + $0x38] sm:$0xff]
  %v16 = vld [vmem:[%s0 + $0x40] sm:$0xff]
  %v17 = vld [vmem:[%s0 + $0x48] sm:$0xff]
  %v18 = vld [vmem:[%s0 + $0x50] sm:$0xff]
  %v19 = vld [vmem:[%s0 + $0x58] sm:$0xff]
  %v20 = vld [vmem:[%s0 + $0x60] sm:$0xff]
  %v21 = vld [vmem:[%s0 + $0x68] sm:$0xff]
  %v22 = vld [vmem:[%s0 + $0x70] sm:$0xff]
  %v23 = vld [vmem:[%s0 + $0x78] sm:$0xff]
  %v24 = vld [vmem:[%s0 + $0x80] sm:$0xff]
  %v25 = vld [vmem:[%s0 + $0x88] sm:$0xff]
  %v26 = vld [vmem:[%s0 + $0x90] sm:$0xff]
  %v27 = vld [vmem:[%s0 + $0x98] sm:$0xff]
  %v28 = vld [vmem:[%s0 + $0xa0] sm:$0xff]
  %v29 = vld [vmem:[%s0 + $0xa8] sm:$0xff]
  %v30 = vld [vmem:[%s0 + $0xb0] sm:$0xff]
  %v31 = vld [vmem:[%s0 + $0xb8] sm:$0xff]
  %v32 = vld [vmem:[%s0 + $0xc0] sm:$0xff]
  %v33 = vld [vmem:[%s0 + $0xc8] sm:$0xff]
  %v34 = vld [vmem:[%s0 + $0xd0] sm:$0xff]
  %v35 = vld [vmem:[%s0 + $0xd8] sm:$0xff]
  %v36 = vld [vmem:[%s0 + $0xe0] sm:$0xff]
  %v37 = vld [vmem:[%s0 + $0xe8] sm:$0xff]
  %v38 = vld [vmem:[%s0 + $0xf0] sm:$0xff]
  %v39 = vld [vmem:[%s0 + $0xf8] sm:$0xff]
  %v40 = vld [vmem:[%s0 + $0x100] sm:$0xff]
  %v41 = vld [vmem:[%s0 + $0x108] sm:$0xff]
  %v42 = vld [vmem:[%s0 + $0x110] sm:$0xff]
  %v43 = vld [vmem:[%s0 + $0x118] sm:$0xff]
  %v44 = vld [vmem:[%s0 + $0x120] sm:$0xff]
  %v45 = vld [vmem:[%s0 + $0x128] sm:$0xff]
  %v46 = vld [vmem:[%s0 + $0x130] sm:$0xff]
  %v47 = vld [vmem:[%s0 + $0x138] sm:$0xff]
  %v48 = vld [vmem:[%s0 + $0x140] sm:$0xff]
  %v49 = vld [vmem:[%s0 + $0x148] sm:$0xff]
  %v50 = vld [vmem:[%s0 + $0x150] sm:$0xff]
  %v51 = vld [vmem:[%s0 + $0x158] sm:$0xff]
  %v52 = vld [vmem:[%s0 + $0x160] sm:$0xff]
  %v53 = vld [vmem:[%s0 + $0x168] sm:$0xff]
  %v54 = vld [vmem:[%s0 + $0x170] sm:$0xff]
  %v55 = vld [vmem:[%s0 + $0x178] sm:$0xff]
  %v56 = vld [vmem:[%s0 + $0x180] sm:$0xff]
  %v57 = vld [vmem:[%s0 + $0x188] sm:$0xff]
  %v58 = vld [vmem:[%s0 + $0x190] sm:$0xff]
  %v59 = vld [vmem:[%s0 + $0x198] sm:$0xff]
  %v60 = vld [vmem:[%s0 + $0x1a0] sm:$0xff]
  %v61 = vld [vmem:[%s0 + $0x1a8] sm:$0xff]
  %v62 = vld [vmem:[%s0 + $0x1b0] sm:$0xff]
  %v63 = vld [vmem:[%s0 + $0x1b8] sm:$0xff]
  %v64 = vld [vmem:[%s0 + $0x1c0] sm:$0xff]
  %v65 = vld [vmem:[%s0 + $0x1c8] sm:$0xff]
  %v66 = vld [vmem:[%s0 + $0x1d0] sm:$0xff]
  %v67 = vld [vmem:[%s0 + $0x1d8] sm:$0xff]
  %v68 = vld [vmem:[%s0 + $0x1e0] sm:$0xff]
  %v69 = vld [vmem:[%s0 + $0x1e8] sm:$0xff]
  %v70 = vld [vmem:[%s0 + $0x1f0] sm:$0xff]
  %v71 = vld [vmem:[%s0 + $0x1f8] sm:$0xff]
  %v72 = vld [vmem:[%s0 + $0x200] sm:$0xff]
  %v73 = vld [vmem:[%s0 + $0x208] sm:$0xff]
  %v74 = vld [vmem:[%s0 + $0x210] sm:$0xff]
  %v75 = vld [vmem:[%s0 + $0x218] sm:$0xff]
  %v76 = vld [vmem:[%s0 + $0x220] sm:$0xff]
  %v77 = vld [vmem:[%s0 + $0x228] sm:$0xff]
  %v78 = vld [vmem:[%s0 + $0x230] sm:$0xff]
  %v79 = vld [vmem:[%s0 + $0x238] sm:$0xff]
  %v80 = vld [vmem:[%s0 + $0x240] sm:$0xff]
  %v81 = vld [vmem:[%s0 + $0x248] sm:$0xff]
  %v82 = vld [vmem:[%s0 + $0x250] sm:$0xff]
  %v83 = vld [vmem:[%s0 + $0x258] sm:$0xff]
  %v84 = vld [vmem:[%s0 + $0x260] sm:$0xff]
  %v85 = vld [vmem:[%s0 + $0x268] sm:$0xff]
  %v86 = vld [vmem:[%s0 + $0x270] sm:$0xff]
  %v87 = vld [vmem:[%s0 + $0x278] sm:$0xff]
  %v88 = vld [vmem:[%s0 + $0x280] sm:$0xff]
  %v89 = vld [vmem:[%s0 + $0x288] sm:$0xff]
  %v90 = vld [vmem:[%s0 + $0x290] sm:$0xff]
  %v91 = vld [vmem:[%s0 + $0x298] sm:$0xff]
  %v92 = vld [vmem:[%s0 + $0x2a0] sm:$0xff]
  %v93 = vld [vmem:[%s0 + $0x2a8] sm:$0xff]
  %v94 = vld [vmem:[%s0 + $0x2b0] sm:$0xff]
  %v95 = vld [vmem:[%s0 + $0x2b8] sm:$0xff]
  %v96 = vld [vmem:[%s0 + $0x2c0] sm:$0xff]
  %v97 = vld [vmem:[%s0 + $0x2c8] sm:$0xff]
  %v98 = vld [vmem:[%s0 + $0x2d0] sm:$0xff]
  %v99 = vld [vmem:[%s0 + $0x2d8] sm:$0xff]
  %v100 = vld [vmem:[%s0 + $0x2e0] sm:$0xff]
  %v101 = vld [vmem:[%s0 + $0x2e8] sm:$0xff]
  %v102 = vld [vmem:[%s0 + $0x2f0] sm:$0xff]
  %v103 = vld [vmem:[%s0 + $0x2f8] sm:$0xff]
  %v104 = vld [vmem:[%s0 + $0x300] sm:$0xff]
  %v105 = vld [vmem:[%s0 + $0x308] sm:$0xff]
  %v106 = vld [vmem:[%s0 + $0x310] sm:$0xff]
  %v107 = vld [vmem:[%s0 + $0x318] sm:$0xff]
  %v108 = vld [vmem:[%s0 + $0x320] sm:$0xff]
  %v109 = vld [vmem:[%s0 + $0x328] sm:$0xff]
  %v110 = vld [vmem:[%s0 + $0x330] sm:$0xff]
  %v111 = vld [vmem:[%s0 + $0x338] sm:$0xff]
  %v112 = vld [vmem:[%s0 + $0x340] sm:$0xff]
  %v113 = vld [vmem:[%s0 + $0x348] sm:$0xff]
  %v114 = vld [vmem:[%s0 + $0x350] sm:$0xff]
  %v115 = vld [vmem:[%s0 + $0x358] sm:$0xff]
  %v116 = vld [vmem:[%s0 + $0x360] sm:$0xff]
  %v117 = vld [vmem:[%s0 + $0x368] sm:$0xff]
  %v118 = vld [vmem:[%s0 + $0x370] sm:$0xff]
  %v119 = vld [vmem:[%s0 + $0x378] sm:$0xff]
  %v120 = vld [vmem:[%s0 + $0x380] sm:$0xff]
  %v121 = vld [vmem:[%s0 + $0x388] sm:$0xff]
  %v122 = vld [vmem:[%s0 + $0x390] sm:$0xff]
  %v123 = vld [vmem:[%s0 + $0x398] sm:$0xff]
  %v124 = vld [vmem:[%s0 + $0x3a0] sm:$0xff]
  %v125 = vld [vmem:[%s0 + $0x3a8] sm:$0xff]
  %v126 = vld [vmem:[%s0 + $0x3b0] sm:$0xff]
  %v127 = vld [vmem:[%s0 + $0x3b8] sm:$0xff]
  %v128 = vld [vmem:[%s0 + $0x3c0] sm:$0xff]
  %v129 = vld [vmem:[%s0 + $0x3c8] sm:$0xff]
  %v130 = vld [vmem:[%s0 + $0x3d0] sm:$0xff]
  %v131 = vld [vmem:[%s0 + $0x3d8] sm:$0xff]
  %v132 = vld [vmem:[%s0 + $0x3e0] sm:$0xff]
  %v133 = vld [vmem:[%s0 + $0x3e8] sm:$0xff]
  %v134 = vld [vmem:[%s0 + $0x3f0] sm:$0xff]
  %v135 = vld [vmem:[%s0 + $0x3f8] sm:$0xff]
  %v136 = vld [vmem:[%s0 + $0x400] sm:$0xff]
  %v137 = vld [vmem:[%s0 + $0x408] sm:$0xff]
  %v138 = vld [vmem:[%s0 + $0x410] sm:$0xff]
  %v139 = vld [vmem:[%s0 + $0x418] sm:$0xff]
  %v140 = vld [vmem:[%s0 + $0x420] sm:$0xff]
  %v141 = vld [vmem:[%s0 + $0x428] sm:$0xff]
  %v142 = vld [vmem:[%s0 + $0x430] sm:$0xff]
  %v143 = vld [vmem:[%s0 + $0x438] sm:$0xff]
  %v144 = vld [vmem:[%s0 + $0x440] sm:$0xff]
  %v145 = vld [vmem:[%s0 + $0x448] sm:$0xff]
  %v146 = vld [vmem:[%s0 + $0x450] sm:$0xff]
  %v147 = vld [vmem:[%s0 + $0x458] sm:$0xff]
  %v148 = vld [vmem:[%s0 + $0x460] sm:$0xff]
  %v149 = vld [vmem:[%s0 + $0x468] sm:$0xff]
  %v150 = vld [vmem:[%s0 + $0x470] sm:$0xff]
  %v151 = vld [vmem:[%s0 + $0x478] sm:$0xff]
  %v152 = vld [vmem:[%s0 + $0x480] sm:$0xff]
  %v153 = vld [vmem:[%s0 + $0x488] sm:$0xff]
  %v154 = vld [vmem:[%s0 + $0x490] sm:$0xff]
  %v155 = vld [vmem:[%s0 + $0x498] sm:$0xff]
  %v156 = vld [vmem:[%s0 + $0x4a0] sm:$0xff]
  %v157 = vld [vmem:[%s0 + $0x4a8] sm:$0xff]
  %v158 = vld [vmem:[%s0 + $0x4b0] sm:$0xff]
  %v159 = vld [vmem:[%s0 + $0x4b8] sm:$0xff]
  %v160 = vld [vmem:[%s0 + $0x4c0] sm:$0xff]
  %v161 = vld [vmem:[%s0 + $0x4c8] sm:$0xff]
  %v162 = vld [vmem:[%s0 + $0x4d0] sm:$0xff]
  %v163 = vld [vmem:[%s0 + $0x4d8] sm:$0xff]
  %v164 = vld [vmem:[%s0 + $0x4e0] sm:$0xff]
  %v165 = vld [vmem:[%s0 + $0x4e8] sm:$0xff]
  %v166 = vld [vmem:[%s0 + $0x4f0] sm:$0xff]
  %v167 = vld [vmem:[%s0 + $0x4f8] sm:$0xff]
  %v168 = vld [vmem:[%s0 + $0x500] sm:$0xff]
  %v169 = vld [vmem:[%s0 + $0x508] sm:$0xff]
  %v170 = vld [vmem:[%s0 + $0x510] sm:$0xff]
  %v171 = vld [vmem:[%s0 + $0x518] sm:$0xff]
  %v172 = vld [vmem:[%s0 + $0x520] sm:$0xff]
  %v173 = vld [vmem:[%s0 + $0x528] sm:$0xff]
  %v174 = vld [vmem:[%s0 + $0x530] sm:$0xff]
  %v175 = vld [vmem:[%s0 + $0x538] sm:$0xff]
  %v176 = vld [vmem:[%s0 + $0x540] sm:$0xff]
  %v177 = vld [vmem:[%s0 + $0x548] sm:$0xff]
  %v178 = vld [vmem:[%s0 + $0x550] sm:$0xff]
  %v179 = vld [vmem:[%s0 + $0x558] sm:$0xff]
  %v180 = vld [vmem:[%s0 + $0x560] sm:$0xff]
  %v181 = vld [vmem:[%s0 + $0x568] sm:$0xff]
  %v182 = vld [vmem:[%s0 + $0x570] sm:$0xff]
  %v183 = vld [vmem:[%s0 + $0x578] sm:$0xff]
  %v184 = vld [vmem:[%s0 + $0x580] sm:$0xff]
  %v185 = vld [vmem:[%s0 + $0x588] sm:$0xff]
  %v186 = vld [vmem:[%s0 + $0x590] sm:$0xff]
  %v187 = vld [vmem:[%s0 + $0x598] sm:$0xff]
  %v188 = vld [vmem:[%s0 + $0x5a0] sm:$0xff]
  %v189 = vld [vmem:[%s0 + $0x5a8] sm:$0xff]
  %v190 = vld [vmem:[%s0 + $0x5b0] sm:$0xff]
  %v191 = vld [vmem:[%s0 + $0x5b8] sm:$0xff]
  %v192 = vld [vmem:[%s0 + $0x5c0] sm:$0xff]
  %v193 = vld [vmem:[%s0 + $0x5c8] sm:$0xff]
  %v194 = vld [vmem:[%s0 + $0x5d0] sm:$0xff]
  %v195 = vld [vmem:[%s0 + $0x5d8] sm:$0xff]
  %v196 = vld [vmem:[%s0 + $0x5e0] sm:$0xff]
  %v197 = vld [vmem:[%s0 + $0x5e8] sm:$0xff]
  %v198 = vld [vmem:[%s0 + $0x5f0] sm:$0xff]
  %v199 = vld [vmem:[%s0 + $0x5f8] sm:$0xff]
  %v200 = vld [vmem:[%s0 + $0x600] sm:$0xff]
  %v201 = vld [vmem:[%s0 + $0x608] sm:$0xff]
  %v202 = vld [vmem:[%s0 + $0x610] sm:$0xff]
  %v203 = vld [vmem:[%s0 + $0x618] sm:$0xff]
  %v204 = vld [vmem:[%s0 + $0x620] sm:$0xff]
  %v205 = vld [vmem:[%s0 + $0x628] sm:$0xff]
  %v206 = vld [vmem:[%s0 + $0x630] sm:$0xff]
  %v207 = vld [vmem:[%s0 + $0x638] sm:$0xff]
  %v208 = vld [vmem:[%s0 + $0x640] sm:$0xff]
  %v209 = vld [vmem:[%s0 + $0x648] sm:$0xff]
  %v210 = vld [vmem:[%s0 + $0x650] sm:$0xff]
  %v211 = vld [vmem:[%s0 + $0x658] sm:$0xff]
  %v212 = vld [vmem:[%s0 + $0x660] sm:$0xff]
  %v213 = vld [vmem:[%s0 + $0x668] sm:$0xff]
  %v214 = vld [vmem:[%s0 + $0x670] sm:$0xff]
  %v215 = vld [vmem:[%s0 + $0x678] sm:$0xff]
  %v216 = vld [vmem:[%s0 + $0x680] sm:$0xff]
  %v217 = vld [vmem:[%s0 + $0x688] sm:$0xff]
  %v218 = vld [vmem:[%s0 + $0x690] sm:$0xff]
  %v219 = vld [vmem:[%s0 + $0x698] sm:$0xff]
  %v220 = vld [vmem:[%s0 + $0x6a0] sm:$0xff]
  %v221 = vld [vmem:[%s0 + $0x6a8] sm:$0xff]
  %v222 = vld [vmem:[%s0 + $0x6b0] sm:$0xff]
  %v223 = vld [vmem:[%s0 + $0x6b8] sm:$0xff]
  %v224 = vld [vmem:[%s0 + $0x6c0] sm:$0xff]
  %v225 = vld [vmem:[%s0 + $0x6c8] sm:$0xff]
  %v226 = vld [vmem:[%s0 + $0x6d0] sm:$0xff]
  %v227 = vld [vmem:[%s0 + $0x6d8] sm:$0xff]
  %v228 = vld [vmem:[%s0 + $0x6e0] sm:$0xff]
  %v229 = vld [vmem:[%s0 + $0x6e8] sm:$0xff]
  %v230 = vld [vmem:[%s0 + $0x6f0] sm:$0xff]
  %v231 = vld [vmem:[%s0 + $0x6f8] sm:$0xff]
  %v232 = vmax.f32 %v8, %v36
  %v233 = vmax.f32 %v9, %v37
  %v234 = vmax.f32 %v10, %v38
  %v235 = vmax.f32 %v11, %v39
  %v236 = vmax.f32 %v12, %v40
  %v237 = vmax.f32 %v13, %v41
  %v238 = vmax.f32 %v14, %v42
  %v239 = vmax.f32 %v15, %v43
  %v240 = vmax.f32 %v16, %v44
  %v241 = vmax.f32 %v17, %v45
  %v242 = vmax.f32 %v18, %v46
  %v243 = vmax.f32 %v19, %v47
  %v244 = vmax.f32 %v20, %v48
  %v245 = vmax.f32 %v21, %v49
  %v246 = vmax.f32 %v22, %v50
  %v247 = vmax.f32 %v23, %v51
  %v248 = vmax.f32 %v24, %v52
  %v249 = vmax.f32 %v25, %v53
  %v250 = vmax.f32 %v26, %v54
  %v251 = vmax.f32 %v27, %v55
  %v252 = vmax.f32 %v28, %v56
  %v253 = vmax.f32 %v29, %v57
  %v254 = vmax.f32 %v30, %v58
  %v255 = vmax.f32 %v31, %v59
  %v256 = vmax.f32 %v32, %v60
  %v257 = vmax.f32 %v33, %v61
  %v258 = vmax.f32 %v34, %v62
  %v259 = vmax.f32 %v35, %v63
  %v260 = vmax.f32 %v64, %v92
  %v261 = vmax.f32 %v65, %v93
  %v262 = vmax.f32 %v66, %v94
  %v263 = vmax.f32 %v67, %v95
  %v264 = vmax.f32 %v68, %v96
  %v265 = vmax.f32 %v69, %v97
  %v266 = vmax.f32 %v70, %v98
  %v267 = vmax.f32 %v71, %v99
  %v268 = vmax.f32 %v72, %v100
  %v269 = vmax.f32 %v73, %v101
  %v270 = vmax.f32 %v74, %v102
  %v271 = vmax.f32 %v75, %v103
  %v272 = vmax.f32 %v76, %v104
  %v273 = vmax.f32 %v77, %v105
  %v274 = vmax.f32 %v78, %v106
  %v275 = vmax.f32 %v79, %v107
  %v276 = vmax.f32 %v80, %v108
  %v277 = vmax.f32 %v81, %v109
  %v278 = vmax.f32 %v82, %v110
  %v279 = vmax.f32 %v83, %v111
  %v280 = vmax.f32 %v84, %v112
  %v281 = vmax.f32 %v85, %v113
  %v282 = vmax.f32 %v86, %v114
  %v283 = vmax.f32 %v87, %v115
  %v284 = vmax.f32 %v88, %v116
  %v285 = vmax.f32 %v89, %v117
  %v286 = vmax.f32 %v90, %v118
  %v287 = vmax.f32 %v91, %v119
  %v288 = vmax.f32 %v120, %v148
  %v289 = vmax.f32 %v121, %v149
  %v290 = vmax.f32 %v122, %v150
  %v291 = vmax.f32 %v123, %v151
  %v292 = vmax.f32 %v124, %v152
  %v293 = vmax.f32 %v125, %v153
  %v294 = vmax.f32 %v126, %v154
  %v295 = vmax.f32 %v127, %v155
  %v296 = vmax.f32 %v128, %v156
  %v297 = vmax.f32 %v129, %v157
  %v298 = vmax.f32 %v130, %v158
  %v299 = vmax.f32 %v131, %v159
  %v300 = vmax.f32 %v132, %v160
  %v301 = vmax.f32 %v133, %v161
  %v302 = vmax.f32 %v134, %v162
  %v303 = vmax.f32 %v135, %v163
  %v304 = vmax.f32 %v136, %v164
  %v305 = vmax.f32 %v137, %v165
  %v306 = vmax.f32 %v138, %v166
  %v307 = vmax.f32 %v139, %v167
  %v308 = vmax.f32 %v140, %v168
  %v309 = vmax.f32 %v141, %v169
  %v310 = vmax.f32 %v142, %v170
  %v311 = vmax.f32 %v143, %v171
  %v312 = vmax.f32 %v144, %v172
  %v313 = vmax.f32 %v145, %v173
  %v314 = vmax.f32 %v146, %v174
  %v315 = vmax.f32 %v147, %v175
  %v316 = vmax.f32 %v176, %v204
  %v317 = vmax.f32 %v177, %v205
  %v318 = vmax.f32 %v178, %v206
  %v319 = vmax.f32 %v179, %v207
  %v320 = vmax.f32 %v180, %v208
  %v321 = vmax.f32 %v181, %v209
  %v322 = vmax.f32 %v182, %v210
  %v323 = vmax.f32 %v183, %v211
  %v324 = vmax.f32 %v184, %v212
  %v325 = vmax.f32 %v185, %v213
  %v326 = vmax.f32 %v186, %v214
  %v327 = vmax.f32 %v187, %v215
  %v328 = vmax.f32 %v188, %v216
  %v329 = vmax.f32 %v189, %v217
  %v330 = vmax.f32 %v190, %v218
  %v331 = vmax.f32 %v191, %v219
  %v332 = vmax.f32 %v192, %v220
  %v333 = vmax.f32 %v193, %v221
  %v334 = vmax.f32 %v194, %v222
  %v335 = vmax.f32 %v195, %v223
  %v336 = vmax.f32 %v196, %v224
  %v337 = vmax.f32 %v197, %v225
  %v338 = vmax.f32 %v198, %v226
  %v339 = vmax.f32 %v199, %v227
  %v340 = vmax.f32 %v200, %v228
  %v341 = vmax.f32 %v201, %v229
  %v342 = vmax.f32 %v202, %v230
  %v343 = vmax.f32 %v203, %v231
  %v344 = vmax.f32 %v232, %v233
  %v345 = vmax.f32 %v260, %v261
  %v346 = vmax.f32 %v288, %v289
  %v347 = vmax.f32 %v316, %v317
  %v348 = vmax.f32 %v234, %v235
  %v349 = vmax.f32 %v262, %v263
  %v350 = vmax.f32 %v290, %v291
  %v351 = vmax.f32 %v318, %v319
  %v352 = vmax.f32 %v236, %v237
  %v353 = vmax.f32 %v264, %v265
  %v354 = vmax.f32 %v292, %v293
  %v355 = vmax.f32 %v320, %v321
  %v356 = vmax.f32 %v238, %v239
  %v357 = vmax.f32 %v266, %v267
  %v358 = vmax.f32 %v294, %v295
  %v359 = vmax.f32 %v322, %v323
  %v360 = vmax.f32 %v240, %v241
  %v361 = vmax.f32 %v268, %v269
  %v362 = vmax.f32 %v296, %v297
  %v363 = vmax.f32 %v324, %v325
  %v364 = vmax.f32 %v242, %v243
  %v365 = vmax.f32 %v270, %v271
  %v366 = vmax.f32 %v298, %v299
  %v367 = vmax.f32 %v326, %v327
  %v368 = vmax.f32 %v244, %v245
  %v369 = vmax.f32 %v272, %v273
  %v370 = vmax.f32 %v300, %v301
  %v371 = vmax.f32 %v328, %v329
  %v372 = vmax.f32 %v246, %v247
  %v373 = vmax.f32 %v274, %v275
  %v374 = vmax.f32 %v302, %v303
  %v375 = vmax.f32 %v330, %v331
  %v376 = vmax.f32 %v248, %v249
  %v377 = vmax.f32 %v276, %v277
  %v378 = vmax.f32 %v304, %v305
  %v379 = vmax.f32 %v332, %v333
  %v380 = vmax.f32 %v250, %v251
  %v381 = vmax.f32 %v278, %v279
  %v382 = vmax.f32 %v306, %v307
  %v383 = vmax.f32 %v334, %v335
  %v384 = vmax.f32 %v252, %v253
  %v385 = vmax.f32 %v280, %v281
  %v386 = vmax.f32 %v308, %v309
  %v387 = vmax.f32 %v336, %v337
  %v388 = vmax.f32 %v254, %v255
  %v389 = vmax.f32 %v282, %v283
  %v390 = vmax.f32 %v310, %v311
  %v391 = vmax.f32 %v338, %v339
  %v392 = vmax.f32 %v256, %v257
  %v393 = vmax.f32 %v284, %v285
  %v394 = vmax.f32 %v312, %v313
  %v395 = vmax.f32 %v340, %v341
  %v396 = vmax.f32 %v258, %v259
  %v397 = vmax.f32 %v286, %v287
  %v398 = vmax.f32 %v314, %v315
  %v399 = vmax.f32 %v342, %v343
  %400 = vst [vmem:[%s1] sm:$0xff] %v344
  %401 = vst [vmem:[%s1 + $0x8] sm:$0xff] %v348
  %402 = vst [vmem:[%s1 + $0x10] sm:$0xff] %v352
  %403 = vst [vmem:[%s1 + $0x18] sm:$0xff] %v356
  %404 = vst [vmem:[%s1 + $0x20] sm:$0xff] %v360
  %405 = vst [vmem:[%s1 + $0x28] sm:$0xff] %v364
  %406 = vst [vmem:[%s1 + $0x30] sm:$0xff] %v368
  %407 = vst [vmem:[%s1 + $0x38] sm:$0xff] %v372
  %408 = vst [vmem:[%s1 + $0x40] sm:$0xff] %v376
  %409 = vst [vmem:[%s1 + $0x48] sm:$0xff] %v380
  %410 = vst [vmem:[%s1 + $0x50] sm:$0xff] %v384
  %411 = vst [vmem:[%s1 + $0x58] sm:$0xff] %v388
  %412 = vst [vmem:[%s1 + $0x60] sm:$0xff] %v392
  %413 = vst [vmem:[%s1 + $0x68] sm:$0xff] %v396
  %414 = vst [vmem:[%s1 + $0x70] sm:$0xff] %v345
  %415 = vst [vmem:[%s1 + $0x78] sm:$0xff] %v349
  %416 = vst [vmem:[%s1 + $0x80] sm:$0xff] %v353
  %417 = vst [vmem:[%s1 + $0x88] sm:$0xff] %v357
  %418 = vst [vmem:[%s1 + $0x90] sm:$0xff] %v361
  %419 = vst [vmem:[%s1 + $0x98] sm:$0xff] %v365
  %420 = vst [vmem:[%s1 + $0xa0] sm:$0xff] %v369
  %421 = vst [vmem:[%s1 + $0xa8] sm:$0xff] %v373
  %422 = vst [vmem:[%s1 + $0xb0] sm:$0xff] %v377
  %423 = vst [vmem:[%s1 + $0xb8] sm:$0xff] %v381
  %424 = vst [vmem:[%s1 + $0xc0] sm:$0xff] %v385
  %425 = vst [vmem:[%s1 + $0xc8] sm:$0xff] %v389
  %426 = vst [vmem:[%s1 + $0xd0] sm:$0xff] %v393
  %427 = vst [vmem:[%s1 + $0xd8] sm:$0xff] %v397
  %428 = vst [vmem:[%s1 + $0xe0] sm:$0xff] %v346
  %429 = vst [vmem:[%s1 + $0xe8] sm:$0xff] %v350
  %430 = vst [vmem:[%s1 + $0xf0] sm:$0xff] %v354
  %431 = vst [vmem:[%s1 + $0xf8] sm:$0xff] %v358
  %432 = vst [vmem:[%s1 + $0x100] sm:$0xff] %v362
  %433 = vst [vmem:[%s1 + $0x108] sm:$0xff] %v366
  %434 = vst [vmem:[%s1 + $0x110] sm:$0xff] %v370
  %435 = vst [vmem:[%s1 + $0x118] sm:$0xff] %v374
  %436 = vst [vmem:[%s1 + $0x120] sm:$0xff] %v378
  %437 = vst [vmem:[%s1 + $0x128] sm:$0xff] %v382
  %438 = vst [vmem:[%s1 + $0x130] sm:$0xff] %v386
  %439 = vst [vmem:[%s1 + $0x138] sm:$0xff] %v390
  %440 = vst [vmem:[%s1 + $0x140] sm:$0xff] %v394
  %441 = vst [vmem:[%s1 + $0x148] sm:$0xff] %v398
  %442 = vst [vmem:[%s1 + $0x150] sm:$0xff] %v347
  %443 = vst [vmem:[%s1 + $0x158] sm:$0xff] %v351
  %444 = vst [vmem:[%s1 + $0x160] sm:$0xff] %v355
  %445 = vst [vmem:[%s1 + $0x168] sm:$0xff] %v359
  %446 = vst [vmem:[%s1 + $0x170] sm:$0xff] %v363
  %447 = vst [vmem:[%s1 + $0x178] sm:$0xff] %v367
  %448 = vst [vmem:[%s1 + $0x180] sm:$0xff] %v371
  %449 = vst [vmem:[%s1 + $0x188] sm:$0xff] %v375
  %450 = vst [vmem:[%s1 + $0x190] sm:$0xff] %v379
  %451 = vst [vmem:[%s1 + $0x198] sm:$0xff] %v383
  %452 = vst [vmem:[%s1 + $0x1a0] sm:$0xff] %v387
  %453 = vst [vmem:[%s1 + $0x1a8] sm:$0xff] %v391
  %454 = vst [vmem:[%s1 + $0x1b0] sm:$0xff] %v395
  %455 = vst [vmem:[%s1 + $0x1b8] sm:$0xff] %v399
  // Predicated region
  $region6: #{mnist_cnn_forward.6} parent=0 // pred_check
    _
  $region7: #{mnist_cnn_forward.6} parent=0 // pred_check_branch
    %457 = sbr.rel (0) target = $region9
  $region8: #{mnist_cnn_forward.6} parent=0 // pred_region
    _
  $region9: #{mnist_cnn_forward.6} parent=0 // pred_fallthru
    _
  // Predicated region
  $region10: #{mnist_cnn_forward.6} parent=0 // pred_check
    _
  $region11: #{mnist_cnn_forward.6} parent=0 // pred_check_branch
    %459 = sbr.rel (0) target = $region13
  $region12: #{mnist_cnn_forward.6} parent=0 // pred_region
    _
  $region13: #{mnist_cnn_forward.6} parent=0 // pred_fallthru
    _

// kernel: mnist_cnn_forward.8
$region0: #{mnist_cnn_forward.8}
  #allocation0 [shape = 'u32[]', space=smem, size = 0x4, offset = 0x4, fixed_abs, tag = 'smem constant byte address 0x4 - core index']
  #allocation1 [shape = 'u32[72,128]{1,0:T(1,128)}', space=vmem, size = 0x9000, scoped, tag = 'internal scratch']
  %s0 = inlined_call_operand.vmem [shape: f32[16,3584], index: 0, kind: input, shape index: {}]
  %s1 = inlined_call_operand.vmem [shape: f32[16,896], index: 1, kind: output, shape index: {}]
  %s2 = sld [smem:[#allocation0]]
  $region14: #{mnist_cnn_forward.8} parent=0
    _
  %s4 = ssub.s32 1, %s2
  %s5 = scalar_select 0, %s4, %s2
  // Predicated region
  $region2: #{mnist_cnn_forward.8} parent=0 // pred_check
    _
  $region3: #{mnist_cnn_forward.8} parent=0 // pred_check_branch
    %7 = sbr.rel (0) target = $region5
  $region4: #{mnist_cnn_forward.8} parent=0 // pred_region
    _
  $region5: #{mnist_cnn_forward.8} parent=0 // pred_fallthru
    _
  %v8 = vld [vmem:[%s0] sm:$0xff]
  %v9 = vld [vmem:[%s0 + $0x8] sm:$0xff]
  %v10 = vld [vmem:[%s0 + $0x10] sm:$0xff]
  %v11 = vld [vmem:[%s0 + $0x18] sm:$0xff]
  %v12 = vld [vmem:[%s0 + $0x20] sm:$0xff]
  %v13 = vld [vmem:[%s0 + $0x28] sm:$0xff]
  %v14 = vld [vmem:[%s0 + $0x30] sm:$0xff]
  %v15 = vld [vmem:[%s0 + $0x38] sm:$0xff]
  %v16 = vld [vmem:[%s0 + $0x40] sm:$0xff]
  %v17 = vld [vmem:[%s0 + $0x48] sm:$0xff]
  %v18 = vld [vmem:[%s0 + $0x50] sm:$0xff]
  %v19 = vld [vmem:[%s0 + $0x58] sm:$0xff]
  %v20 = vld [vmem:[%s0 + $0x60] sm:$0xff]
  %v21 = vld [vmem:[%s0 + $0x68] sm:$0xff]
  %v22 = vld [vmem:[%s0 + $0x70] sm:$0xff]
  %v23 = vld [vmem:[%s0 + $0x78] sm:$0xff]
  %v24 = vld [vmem:[%s0 + $0x80] sm:$0xff]
  %v25 = vld [vmem:[%s0 + $0x88] sm:$0xff]
  %v26 = vld [vmem:[%s0 + $0x90] sm:$0xff]
  %v27 = vld [vmem:[%s0 + $0x98] sm:$0xff]
  %v28 = vld [vmem:[%s0 + $0xa0] sm:$0xff]
  %v29 = vld [vmem:[%s0 + $0xa8] sm:$0xff]
  %v30 = vld [vmem:[%s0 + $0xb0] sm:$0xff]
  %v31 = vld [vmem:[%s0 + $0xb8] sm:$0xff]
  %v32 = vld [vmem:[%s0 + $0xc0] sm:$0xff]
  %v33 = vld [vmem:[%s0 + $0xc8] sm:$0xff]
  %v34 = vld [vmem:[%s0 + $0xd0] sm:$0xff]
  %v35 = vld [vmem:[%s0 + $0xd8] sm:$0xff]
  %v36 = vld [vmem:[%s0 + $0xe0] sm:$0xff]
  %v37 = vld [vmem:[%s0 + $0xe8] sm:$0xff]
  %v38 = vld [vmem:[%s0 + $0xf0] sm:$0xff]
  %v39 = vld [vmem:[%s0 + $0xf8] sm:$0xff]
  %v40 = vld [vmem:[%s0 + $0x100] sm:$0xff]
  %v41 = vld [vmem:[%s0 + $0x108] sm:$0xff]
  %v42 = vld [vmem:[%s0 + $0x110] sm:$0xff]
  %v43 = vld [vmem:[%s0 + $0x118] sm:$0xff]
  %v44 = vld [vmem:[%s0 + $0x120] sm:$0xff]
  %v45 = vld [vmem:[%s0 + $0x128] sm:$0xff]
  %v46 = vld [vmem:[%s0 + $0x130] sm:$0xff]
  %v47 = vld [vmem:[%s0 + $0x138] sm:$0xff]
  %v48 = vld [vmem:[%s0 + $0x140] sm:$0xff]
  %v49 = vld [vmem:[%s0 + $0x148] sm:$0xff]
  %v50 = vld [vmem:[%s0 + $0x150] sm:$0xff]
  %v51 = vld [vmem:[%s0 + $0x158] sm:$0xff]
  %v52 = vld [vmem:[%s0 + $0x160] sm:$0xff]
  %v53 = vld [vmem:[%s0 + $0x168] sm:$0xff]
  %v54 = vld [vmem:[%s0 + $0x170] sm:$0xff]
  %v55 = vld [vmem:[%s0 + $0x178] sm:$0xff]
  %v56 = vld [vmem:[%s0 + $0x180] sm:$0xff]
  %v57 = vld [vmem:[%s0 + $0x188] sm:$0xff]
  %v58 = vld [vmem:[%s0 + $0x190] sm:$0xff]
  %v59 = vld [vmem:[%s0 + $0x198] sm:$0xff]
  %v60 = vld [vmem:[%s0 + $0x1a0] sm:$0xff]
  %v61 = vld [vmem:[%s0 + $0x1a8] sm:$0xff]
  %v62 = vld [vmem:[%s0 + $0x1b0] sm:$0xff]
  %v63 = vld [vmem:[%s0 + $0x1b8] sm:$0xff]
  %v64 = vmax.f32 %v8, %v22
  %v65 = vmax.f32 %v9, %v23
  %v66 = vmax.f32 %v10, %v24
  %v67 = vmax.f32 %v11, %v25
  %v68 = vmax.f32 %v12, %v26
  %v69 = vmax.f32 %v13, %v27
  %v70 = vmax.f32 %v14, %v28
  %v71 = vmax.f32 %v15, %v29
  %v72 = vmax.f32 %v16, %v30
  %v73 = vmax.f32 %v17, %v31
  %v74 = vmax.f32 %v18, %v32
  %v75 = vmax.f32 %v19, %v33
  %v76 = vmax.f32 %v20, %v34
  %v77 = vmax.f32 %v21, %v35
  %v78 = vmax.f32 %v36, %v50
  %v79 = vmax.f32 %v37, %v51
  %v80 = vmax.f32 %v38, %v52
  %v81 = vmax.f32 %v39, %v53
  %v82 = vmax.f32 %v40, %v54
  %v83 = vmax.f32 %v41, %v55
  %v84 = vmax.f32 %v42, %v56
  %v85 = vmax.f32 %v43, %v57
  %v86 = vmax.f32 %v44, %v58
  %v87 = vmax.f32 %v45, %v59
  %v88 = vmax.f32 %v46, %v60
  %v89 = vmax.f32 %v47, %v61
  %v90 = vmax.f32 %v48, %v62
  %v91 = vmax.f32 %v49, %v63
  %v92 = vmax.f32 %v64, %v65
  %v93 = vmax.f32 %v78, %v79
  %v94 = vmax.f32 %v66, %v67
  %v95 = vmax.f32 %v80, %v81
  %v96 = vmax.f32 %v68, %v69
  %v97 = vmax.f32 %v82, %v83
  %v98 = vmax.f32 %v70, %v71
  %v99 = vmax.f32 %v84, %v85
  %v100 = vmax.f32 %v72, %v73
  %v101 = vmax.f32 %v86, %v87
  %v102 = vmax.f32 %v74, %v75
  %v103 = vmax.f32 %v88, %v89
  %v104 = vmax.f32 %v76, %v77
  %v105 = vmax.f32 %v90, %v91
  %106 = vst [vmem:[%s1] sm:$0xff] %v92
  %107 = vst [vmem:[%s1 + $0x8] sm:$0xff] %v94
  %108 = vst [vmem:[%s1 + $0x10] sm:$0xff] %v96
  %109 = vst [vmem:[%s1 + $0x18] sm:$0xff] %v98
  %110 = vst [vmem:[%s1 + $0x20] sm:$0xff] %v100
  %111 = vst [vmem:[%s1 + $0x28] sm:$0xff] %v102
  %112 = vst [vmem:[%s1 + $0x30] sm:$0xff] %v104
  %113 = vst [vmem:[%s1 + $0x38] sm:$0xff] %v93
  %114 = vst [vmem:[%s1 + $0x40] sm:$0xff] %v95
  %115 = vst [vmem:[%s1 + $0x48] sm:$0xff] %v97
  %116 = vst [vmem:[%s1 + $0x50] sm:$0xff] %v99
  %117 = vst [vmem:[%s1 + $0x58] sm:$0xff] %v101
  %118 = vst [vmem:[%s1 + $0x60] sm:$0xff] %v103
  %119 = vst [vmem:[%s1 + $0x68] sm:$0xff] %v105
  // Predicated region
  $region6: #{mnist_cnn_forward.8} parent=0 // pred_check
    _
  $region7: #{mnist_cnn_forward.8} parent=0 // pred_check_branch
    %121 = sbr.rel (0) target = $region9
  $region8: #{mnist_cnn_forward.8} parent=0 // pred_region
    _
  $region9: #{mnist_cnn_forward.8} parent=0 // pred_fallthru
    _
  // Predicated region
  $region10: #{mnist_cnn_forward.8} parent=0 // pred_check
    _
  $region11: #{mnist_cnn_forward.8} parent=0 // pred_check_branch
    %123 = sbr.rel (0) target = $region13
  $region12: #{mnist_cnn_forward.8} parent=0 // pred_region
    _
  $region13: #{mnist_cnn_forward.8} parent=0 // pred_fallthru
    _

// kernel: mnist_cnn_forward.7
$region0: #{mnist_cnn_forward.7}
  #allocation0 [shape = 'u32[]', space=smem, size = 0x4, offset = 0x4, fixed_abs, tag = 'smem constant byte address 0x4 - core index']
  #allocation1 [shape = 'u32[72,128]{1,0:T(1,128)}', space=vmem, size = 0x9000, scoped, tag = 'internal scratch']
  #allocation2 [shape = 'f32[256,128]{1,0:T(8,128)}', space=vmem, size = 0x20000, scoped, tag = 'scratch operand']
  %s0 = inlined_call_operand.vmem [shape: bf16[512,896], index: 0, kind: input, shape index: {}]
  %s1 = inlined_call_operand.vmem [shape: bf16[896,128], index: 1, kind: input, shape index: {}]
  %s2 = inlined_call_operand.vmem [shape: f32[1,128], index: 2, kind: input, shape index: {}]
  %s3 = inlined_call_operand.vmem [shape: f32[512,128], index: 3, kind: output, shape index: {}]
  %s4 = sld [smem:[#allocation0]]
  $region53: #{mnist_cnn_forward.7} parent=0
    _
  %s6 = ssub.s32 1, %s4
  %s7 = scalar_select 0, %s6, %s4
  loop: start=0, step=1, limit=4
  $region2: #{mnist_cnn_forward.7} parent=0 // loop_pre_header
    _
  $region3: #{mnist_cnn_forward.7} parent=0 // loop_header
    %s9 = sphi 0, %s13
    %p10 = scmp.ge.s32.totalorder %s9, 4
    %s16 = sphi 0, %s35
    %s17 = sphi 0, %s31
    %s18 = sphi 0, %s27
    %s19 = sphi 0, %s16
    %s20 = sphi 0, %s17
    %s21 = sphi 0, %s18
    %s22 = sphi 0, %s19
    %s23 = sphi 0, %s20
    %s24 = sphi 0, %s21
    %s40 = sphi 0, %s42
    %s43 = sphi 0, %s40
    %s44 = sphi 0, %s43
    %s60 = sphi 0, %s44
    %s68 = sphi 0, %s70
    %s71 = sphi 0, %s68
    %s72 = sphi 0, %s71
    %s88 = sphi 0, %s72
    %s94 = sphi 0, %s96
    %s97 = sphi 0, %s94
    %s98 = sphi 0, %s97
    %s114 = sphi 0, %s98
    %s122 = sphi 0, %s124
    %s125 = sphi 0, %s122
    %s126 = sphi 0, %s125
    %s142 = sphi 0, %s126
  $region4: #{mnist_cnn_forward.7} parent=0 // loop_header_branch
    %12 = sbr.rel (%p10) target = $region8
  $region5: #{mnist_cnn_forward.7} parent=0 // loop_body
    %s14 = ssub.s32 %s9, 1
    %s15 = ssub.s32 %s9, 2
    %s25 = sadd.s32 1, %s18
    %p26 = scmp.ge.s32.totalorder %s25, 1
    %s27 = scalar_select %p26, 0, %s25
    %s28 = sadd.s32 1, %s17
    %s29 = scalar_select %p26, %s28, %s17
    %p30 = scmp.ge.s32.totalorder %s29, 1
    %s31 = scalar_select %p30, 0, %s29
    %s32 = sadd.s32 1, %s16
    %s33 = scalar_select %p30, %s32, %s16
    %p34 = scmp.ge.s32.totalorder %s33, 2
    %s35 = scalar_select %p34, 0, %s33
    %s36 = ssub.s32 %s16, %s35
    %s37 = ssub.s32 %s18, %s27
    %s38 = sor.u32 %s36, %s37
    %p39 = scmp.eq.s32.totalorder %s38, 0
    %s41 = sadd.s32 %s40, 1
    %s42 = scalar_select %p39, %s40, %s41
    %p45 = pneg %p39
    %p46 = scmp.eq.s32.totalorder %s9, 1
    %p47 = por %p45, %p46
    %p48 = scmp.ne.s32.totalorder %s40, %s43
    %p49 = scmp.eq.s32.totalorder %s9, 0
    %p50 = por %p48, %p49
    %p51 = scmp.ne.s32.totalorder %s40, %s43
    %p52 = scmp.eq.s32.totalorder %s14, 1
    %p53 = por %p51, %p52
    %p54 = scmp.ne.s32.totalorder %s43, %s44
    %p55 = scmp.eq.s32.totalorder %s14, 0
    %p56 = por %p54, %p55
    %p57 = scmp.ne.s32.totalorder %s43, %s44
    %p58 = scmp.eq.s32.totalorder %s15, 1
    %p59 = por %p57, %p58
    %p61 = scmp.ne.s32.totalorder %s44, %s60
    %p62 = scmp.eq.s32.totalorder %s15, 0
    %p63 = por %p61, %p62
    %s64 = ssub.s32 %s18, %s27
    %s65 = ssub.s32 %s17, %s31
    %s66 = sor.u32 %s64, %s65
    %p67 = scmp.eq.s32.totalorder %s66, 0
    %s69 = sadd.s32 %s68, 1
    %s70 = scalar_select %p67, %s68, %s69
    %p73 = pneg %p67
    %p74 = scmp.eq.s32.totalorder %s9, 1
    %p75 = por %p73, %p74
    %p76 = scmp.ne.s32.totalorder %s68, %s71
    %p77 = scmp.eq.s32.totalorder %s9, 0
    %p78 = por %p76, %p77
    %p79 = scmp.ne.s32.totalorder %s68, %s71
    %p80 = scmp.eq.s32.totalorder %s14, 1
    %p81 = por %p79, %p80
    %p82 = scmp.ne.s32.totalorder %s71, %s72
    %p83 = scmp.eq.s32.totalorder %s14, 0
    %p84 = por %p82, %p83
    %p85 = scmp.ne.s32.totalorder %s71, %s72
    %p86 = scmp.eq.s32.totalorder %s15, 1
    %p87 = por %p85, %p86
    %p89 = scmp.ne.s32.totalorder %s72, %s88
    %p90 = scmp.eq.s32.totalorder %s15, 0
    %p91 = por %p89, %p90
    %s92 = ssub.s32 %s17, %s31
    %p93 = scmp.eq.s32.totalorder %s92, 0
    %s95 = sadd.s32 %s94, 1
    %s96 = scalar_select %p93, %s94, %s95
    %p99 = pneg %p93
    %p100 = scmp.eq.s32.totalorder %s9, 1
    %p101 = por %p99, %p100
    %p102 = scmp.ne.s32.totalorder %s94, %s97
    %p103 = scmp.eq.s32.totalorder %s9, 0
    %p104 = por %p102, %p103
    %p105 = scmp.ne.s32.totalorder %s94, %s97
    %p106 = scmp.eq.s32.totalorder %s14, 1
    %p107 = por %p105, %p106
    %p108 = scmp.ne.s32.totalorder %s97, %s98
    %p109 = scmp.eq.s32.totalorder %s14, 0
    %p110 = por %p108, %p109
    %p111 = scmp.ne.s32.totalorder %s97, %s98
    %p112 = scmp.eq.s32.totalorder %s15, 1
    %p113 = por %p111, %p112
    %p115 = scmp.ne.s32.totalorder %s98, %s114
    %p116 = scmp.eq.s32.totalorder %s15, 0
    %p117 = por %p115, %p116
    %s118 = ssub.s32 %s16, %s35
    %s119 = ssub.s32 %s17, %s31
    %s120 = sor.u32 %s118, %s119
    %p121 = scmp.eq.s32.totalorder %s120, 0
    %s123 = sadd.s32 %s122, 1
    %s124 = scalar_select %p121, %s122, %s123
    %p127 = pneg %p121
    %p128 = scmp.eq.s32.totalorder %s9, 1
    %p129 = por %p127, %p128
    %p130 = scmp.ne.s32.totalorder %s122, %s125
    %p131 = scmp.eq.s32.totalorder %s9, 0
    %p132 = por %p130, %p131
    %p133 = scmp.ne.s32.totalorder %s122, %s125
    %p134 = scmp.eq.s32.totalorder %s14, 1
    %p135 = por %p133, %p134
    %p136 = scmp.ne.s32.totalorder %s125, %s126
    %p137 = scmp.eq.s32.totalorder %s14, 0
    %p138 = por %p136, %p137
    %p139 = scmp.ne.s32.totalorder %s125, %s126
    %p140 = scmp.eq.s32.totalorder %s15, 1
    %p141 = por %p139, %p140
    %p143 = scmp.ne.s32.totalorder %s126, %s142
    %p144 = scmp.eq.s32.totalorder %s15, 0
    %p145 = por %p143, %p144
    %p146 = scmp.le.s32.totalorder 1, %s9
    %p147 = scmp.lt.s32.totalorder %s9, 3
    %p148 = pnand %p146, %p147
    %p149 = pneg %p148
    // Predicated region
    $region9: #{mnist_cnn_forward.7} parent=5 // pred_check
      _
    $region10: #{mnist_cnn_forward.7} parent=5 // pred_check_branch
      %151 = sbr.rel (%p148) target = $region12
    $region11: #{mnist_cnn_forward.7} parent=5 // pred_region
      %s152 = ssub.s32 %s9, 1
      // Predicated region
      $region13: #{mnist_cnn_forward.7} parent=11 // pred_check
        %p153 = pneg %p84
      $region14: #{mnist_cnn_forward.7} parent=11 // pred_check_branch
        %155 = sbr.rel (%p153) target = $region16
      $region15: #{mnist_cnn_forward.7} parent=11 // pred_region
        %s156 = smul.u32 112, %s21
        %p157 = scmp.lt.s32.totalorder %s156, 111
        %s158 = scalar_select %p157, %s156, 111
        %p159 = scmp.lt.s32.totalorder %s20, 0
        %s160 = scalar_select %p159, %s20, 0
        %s161 = sadd.s32 %s160, %s158
        %s162 = smul.addr %s161, 4
        %s163 = scalar_lea.vmem %s1, %s162
        %s164 = smul.u32 112, %s21
      $region16: #{mnist_cnn_forward.7} parent=11 // pred_fallthru
        _
      // Predicated region
      $region17: #{mnist_cnn_forward.7} parent=11 // pred_check
        %p165 = pneg %p110
      $region18: #{mnist_cnn_forward.7} parent=11 // pred_check_branch
        %167 = sbr.rel (%p165) target = $region20
      $region19: #{mnist_cnn_forward.7} parent=11 // pred_region
        %p168 = scmp.lt.s32.totalorder %s20, 0
        %s169 = scalar_select %p168, %s20, 0
        %s170 = scalar_lea.vmem %s2, %s169
      $region20: #{mnist_cnn_forward.7} parent=11 // pred_fallthru
        _
    $region12: #{mnist_cnn_forward.7} parent=5 // pred_fallthru
      _
    %p171 = scmp.lt.s32.totalorder %s9, 2
    // Predicated region
    $region21: #{mnist_cnn_forward.7} parent=5 // pred_check
      %p172 = pneg %p171
    $region22: #{mnist_cnn_forward.7} parent=5 // pred_check_branch
      %174 = sbr.rel (%p172) target = $region24
    $region23: #{mnist_cnn_forward.7} parent=5 // pred_region
      // Predicated region
      $region25: #{mnist_cnn_forward.7} parent=23 // pred_check
        %p175 = pneg %p50
      $region26: #{mnist_cnn_forward.7} parent=23 // pred_check_branch
        %177 = sbr.rel (%p175) target = $region28
      $region27: #{mnist_cnn_forward.7} parent=23 // pred_region
        %s178 = smul.u32 32, %s16
        %s179 = smul.u32 7, %s18
        %p180 = scmp.lt.s32.totalorder %s178, 63
        %s181 = scalar_select %p180, %s178, 63
        %p182 = scmp.lt.s32.totalorder %s179, 6
        %s183 = scalar_select %p182, %s179, 6
        %s184 = smul.addr %s181, 7
        %s185 = sadd.s32 %s183, %s184
        %s186 = smul.addr %s185, 4
        %s187 = scalar_lea.vmem %s0, %s186
        %s188 = smul.u32 32, %s16
        %s189 = smul.u32 7, %s18
      $region28: #{mnist_cnn_forward.7} parent=23 // pred_fallthru
        _
    $region24: #{mnist_cnn_forward.7} parent=5 // pred_fallthru
      _
    %p190 = scmp.le.s32.totalorder 1, %s9
    %p191 = scmp.lt.s32.totalorder %s9, 3
    %p192 = pnand %p190, %p191
    %p193 = pneg %p192
    // Predicated region
    $region29: #{mnist_cnn_forward.7} parent=5 // pred_check
      _
    $region30: #{mnist_cnn_forward.7} parent=5 // pred_check_branch
      %195 = sbr.rel (%p192) target = $region32
    $region31: #{mnist_cnn_forward.7} parent=5 // pred_region
      %s196 = ssub.s32 %s9, 1
      %s197 = smul.u32 32, %s19
      %s198 = smul.u32 7, %s21
      %p199 = scmp.lt.s32.totalorder %s197, 63
      %s200 = scalar_select %p199, %s197, 63
      %p201 = scmp.lt.s32.totalorder %s198, 6
      %s202 = scalar_select %p201, %s198, 6
      %s203 = smul.addr %s200, 7
      %s204 = sadd.s32 %s202, %s203
      %s205 = smul.addr %s204, 4
      %s206 = scalar_lea.vmem %s0, %s205
      %p207 = pneg %p56
      %p208 = pneg %p53
      %s209 = smul.u32 112, %s21
      %p210 = scmp.lt.s32.totalorder %s209, 111
      %s211 = scalar_select %p210, %s209, 111
      %p212 = scmp.lt.s32.totalorder %s20, 0
      %s213 = scalar_select %p212, %s20, 0
      %s214 = sadd.s32 %s213, %s211
      %s215 = smul.addr %s214, 4
      %s216 = scalar_lea.vmem %s1, %s215
      %p217 = pneg %p84
      %p218 = pneg %p81
      %p219 = scmp.lt.s32.totalorder %s20, 0
      %s220 = scalar_select %p219, %s20, 0
      %s221 = scalar_lea.vmem %s2, %s220
      %p222 = pneg %p110
      %p223 = pneg %p107
      %p224 = pneg %p138
      %p225 = pneg %p135
      %s226 = smul.u32 32, %s19
      %p227 = scmp.lt.s32.totalorder %s226, 63
      %s228 = scalar_select %p227, %s226, 63
      %p229 = scmp.lt.s32.totalorder %s20, 0
      %s230 = scalar_select %p229, %s20, 0
      %s231 = sadd.s32 %s230, %s228
      %s232 = smul.addr %s231, 8
      %s233 = scalar_lea.vmem %s3, %s232
      %s234 = smul.u32 32, %s19
      %s235 = smul.u32 7, %s21
      %p236 = scmp.lt.s32.totalorder %s234, 63
      %s237 = scalar_select %p236, %s234, 63
      %p238 = scmp.lt.s32.totalorder %s235, 6
      %s239 = scalar_select %p238, %s235, 6
      %s240 = smul.addr %s237, 7
      %s241 = sadd.s32 %s239, %s240
      %s242 = smul.addr %s241, 4
      %s243 = scalar_lea.vmem %s0, %s242
      %s244 = smul.u32 32, %s19
      %s245 = smul.u32 7, %s21
      %s246 = smul.u32 112, %s21
      %p247 = scmp.lt.s32.totalorder %s246, 111
      %s248 = scalar_select %p247, %s246, 111
      %p249 = scmp.lt.s32.totalorder %s20, 0
      %s250 = scalar_select %p249, %s20, 0
      %s251 = sadd.s32 %s250, %s248
      %s252 = smul.addr %s251, 4
      %s253 = scalar_lea.vmem %s1, %s252
      %s254 = smul.u32 112, %s21
      %p255 = scmp.lt.s32.totalorder %s20, 0
      %s256 = scalar_select %p255, %s20, 0
      %s257 = scalar_lea.vmem %s2, %s256
      %s258 = smul.u32 32, %s19
      %p259 = scmp.lt.s32.totalorder %s258, 63
      %s260 = scalar_select %p259, %s258, 63
      %p261 = scmp.lt.s32.totalorder %s20, 0
      %s262 = scalar_select %p261, %s20, 0
      %s263 = sadd.s32 %s262, %s260
      %s264 = smul.addr %s263, 8
      %s265 = scalar_lea.vmem %s3, %s264
      %s266 = smul.u32 32, %s19
      %p267 = scmp.eq.s32.totalorder %s21, 0
      // Predicated region
      $region33: #{mnist_cnn_forward.7} parent=31 // pred_check
        %p268 = pneg %p267
      $region34: #{mnist_cnn_forward.7} parent=31 // pred_check_branch
        %270 = sbr.rel (%p268) target = $region36
      $region35: #{mnist_cnn_forward.7} parent=31 // pred_region
        %271 = vst [vmem:[#allocation2] sm:$0xff] 0.0
        %272 = vst [vmem:[#allocation2 + $0x8] sm:$0xff] 0.0
        %273 = vst [vmem:[#allocation2 + $0x10] sm:$0xff] 0.0
        %274 = vst [vmem:[#allocation2 + $0x18] sm:$0xff] 0.0
        %275 = vst [vmem:[#allocation2 + $0x20] sm:$0xff] 0.0
        %276 = vst [vmem:[#allocation2 + $0x28] sm:$0xff] 0.0
        %277 = vst [vmem:[#allocation2 + $0x30] sm:$0xff] 0.0
        %278 = vst [vmem:[#allocation2 + $0x38] sm:$0xff] 0.0
        %279 = vst [vmem:[#allocation2 + $0x40] sm:$0xff] 0.0
        %280 = vst [vmem:[#allocation2 + $0x48] sm:$0xff] 0.0
        %281 = vst [vmem:[#allocation2 + $0x50] sm:$0xff] 0.0
        %282 = vst [vmem:[#allocation2 + $0x58] sm:$0xff] 0.0
        %283 = vst [vmem:[#allocation2 + $0x60] sm:$0xff] 0.0
        %284 = vst [vmem:[#allocation2 + $0x68] sm:$0xff] 0.0
        %285 = vst [vmem:[#allocation2 + $0x70] sm:$0xff] 0.0
        %286 = vst [vmem:[#allocation2 + $0x78] sm:$0xff] 0.0
        %287 = vst [vmem:[#allocation2 + $0x80] sm:$0xff] 0.0
        %288 = vst [vmem:[#allocation2 + $0x88] sm:$0xff] 0.0
        %289 = vst [vmem:[#allocation2 + $0x90] sm:$0xff] 0.0
        %290 = vst [vmem:[#allocation2 + $0x98] sm:$0xff] 0.0
        %291 = vst [vmem:[#allocation2 + $0xa0] sm:$0xff] 0.0
        %292 = vst [vmem:[#allocation2 + $0xa8] sm:$0xff] 0.0
        %293 = vst [vmem:[#allocation2 + $0xb0] sm:$0xff] 0.0
        %294 = vst [vmem:[#allocation2 + $0xb8] sm:$0xff] 0.0
        %295 = vst [vmem:[#allocation2 + $0xc0] sm:$0xff] 0.0
        %296 = vst [vmem:[#allocation2 + $0xc8] sm:$0xff] 0.0
        %297 = vst [vmem:[#allocation2 + $0xd0] sm:$0xff] 0.0
        %298 = vst [vmem:[#allocation2 + $0xd8] sm:$0xff] 0.0
        %299 = vst [vmem:[#allocation2 + $0xe0] sm:$0xff] 0.0
        %300 = vst [vmem:[#allocation2 + $0xe8] sm:$0xff] 0.0
        %301 = vst [vmem:[#allocation2 + $0xf0] sm:$0xff] 0.0
        %302 = vst [vmem:[#allocation2 + $0xf8] sm:$0xff] 0.0
      $region36: #{mnist_cnn_forward.7} parent=31 // pred_fallthru
        _
      %v303 = vld [vmem:[#allocation2] sm:$0xff]
      %v304 = vld [vmem:[#allocation2 + $0x8] sm:$0xff]
      %v305 = vld [vmem:[#allocation2 + $0x10] sm:$0xff]
      %v306 = vld [vmem:[#allocation2 + $0x18] sm:$0xff]
      %v307 = vld [vmem:[#allocation2 + $0x20] sm:$0xff]
      %v308 = vld [vmem:[#allocation2 + $0x28] sm:$0xff]
      %v309 = vld [vmem:[#allocation2 + $0x30] sm:$0xff]
      %v310 = vld [vmem:[#allocation2 + $0x38] sm:$0xff]
      %v311 = vld [vmem:[#allocation2 + $0x40] sm:$0xff]
      %v312 = vld [vmem:[#allocation2 + $0x48] sm:$0xff]
      %v313 = vld [vmem:[#allocation2 + $0x50] sm:$0xff]
      %v314 = vld [vmem:[#allocation2 + $0x58] sm:$0xff]
      %v315 = vld [vmem:[#allocation2 + $0x60] sm:$0xff]
      %v316 = vld [vmem:[#allocation2 + $0x68] sm:$0xff]
      %v317 = vld [vmem:[#allocation2 + $0x70] sm:$0xff]
      %v318 = vld [vmem:[#allocation2 + $0x78] sm:$0xff]
      %v319 = vld [vmem:[#allocation2 + $0x80] sm:$0xff]
      %v320 = vld [vmem:[#allocation2 + $0x88] sm:$0xff]
      %v321 = vld [vmem:[#allocation2 + $0x90] sm:$0xff]
      %v322 = vld [vmem:[#allocation2 + $0x98] sm:$0xff]
      %v323 = vld [vmem:[#allocation2 + $0xa0] sm:$0xff]
      %v324 = vld [vmem:[#allocation2 + $0xa8] sm:$0xff]
      %v325 = vld [vmem:[#allocation2 + $0xb0] sm:$0xff]
      %v326 = vld [vmem:[#allocation2 + $0xb8] sm:$0xff]
      %v327 = vld [vmem:[#allocation2 + $0xc0] sm:$0xff]
      %v328 = vld [vmem:[#allocation2 + $0xc8] sm:$0xff]
      %v329 = vld [vmem:[#allocation2 + $0xd0] sm:$0xff]
      %v330 = vld [vmem:[#allocation2 + $0xd8] sm:$0xff]
      %v331 = vld [vmem:[#allocation2 + $0xe0] sm:$0xff]
      %v332 = vld [vmem:[#allocation2 + $0xe8] sm:$0xff]
      %v333 = vld [vmem:[#allocation2 + $0xf0] sm:$0xff]
      %v334 = vld [vmem:[#allocation2 + $0xf8] sm:$0xff]
      %v335 = vld [vmem:[%s243] sm:$0xff]
      %v336 = vld [vmem:[%s243 + $0x8] sm:$0xff]
      %v337 = vld [vmem:[%s243 + $0x10] sm:$0xff]
      %v338 = vld [vmem:[%s243 + $0x18] sm:$0xf]
      %v339 = vld [vmem:[%s243 + $0x1c] sm:$0xff]
      %v340 = vld [vmem:[%s243 + $0x24] sm:$0xff]
      %v341 = vld [vmem:[%s243 + $0x2c] sm:$0xff]
      %v342 = vld [vmem:[%s243 + $0x34] sm:$0xf]
      %v343 = vld [vmem:[%s243 + $0x38] sm:$0xff]
      %v344 = vld [vmem:[%s243 + $0x40] sm:$0xff]
      %v345 = vld [vmem:[%s243 + $0x48] sm:$0xff]
      %v346 = vld [vmem:[%s243 + $0x50] sm:$0xf]
      %v347 = vld [vmem:[%s243 + $0x54] sm:$0xff]
      %v348 = vld [vmem:[%s243 + $0x5c] sm:$0xff]
      %v349 = vld [vmem:[%s243 + $0x64] sm:$0xff]
      %v350 = vld [vmem:[%s243 + $0x6c] sm:$0xf]
      %v351 = vld [vmem:[%s243 + $0x70] sm:$0xff]
      %v352 = vld [vmem:[%s243 + $0x78] sm:$0xff]
      %v353 = vld [vmem:[%s243 + $0x80] sm:$0xff]
      %v354 = vld [vmem:[%s243 + $0x88] sm:$0xf]
      %v355 = vld [vmem:[%s243 + $0x8c] sm:$0xff]
      %v356 = vld [vmem:[%s243 + $0x94] sm:$0xff]
      %v357 = vld [vmem:[%s243 + $0x9c] sm:$0xff]
      %v358 = vld [vmem:[%s243 + $0xa4] sm:$0xf]
      %v359 = vld [vmem:[%s243 + $0xa8] sm:$0xff]
      %v360 = vld [vmem:[%s243 + $0xb0] sm:$0xff]
      %v361 = vld [vmem:[%s243 + $0xb8] sm:$0xff]
      %v362 = vld [vmem:[%s243 + $0xc0] sm:$0xf]
      %v363 = vld [vmem:[%s243 + $0xc4] sm:$0xff]
      %v364 = vld [vmem:[%s243 + $0xcc] sm:$0xff]
      %v365 = vld [vmem:[%s243 + $0xd4] sm:$0xff]
      %v366 = vld [vmem:[%s243 + $0xdc] sm:$0xf]
      %v367 = vld [vmem:[%s243 + $0xe0] sm:$0xff]
      %v368 = vld [vmem:[%s243 + $0xe8] sm:$0xff]
      %v369 = vld [vmem:[%s243 + $0xf0] sm:$0xff]
      %v370 = vld [vmem:[%s243 + $0xf8] sm:$0xf]
      %v371 = vld [vmem:[%s243 + $0xfc] sm:$0xff]
      %v372 = vld [vmem:[%s243 + $0x104] sm:$0xff]
      %v373 = vld [vmem:[%s243 + $0x10c] sm:$0xff]
      %v374 = vld [vmem:[%s243 + $0x114] sm:$0xf]
      %v375 = vld [vmem:[%s243 + $0x118] sm:$0xff]
      %v376 = vld [vmem:[%s243 + $0x120] sm:$0xff]
      %v377 = vld [vmem:[%s243 + $0x128] sm:$0xff]
      %v378 = vld [vmem:[%s243 + $0x130] sm:$0xf]
      %v379 = vld [vmem:[%s243 + $0x134] sm:$0xff]
      %v380 = vld [vmem:[%s243 + $0x13c] sm:$0xff]
      %v381 = vld [vmem:[%s243 + $0x144] sm:$0xff]
      %v382 = vld [vmem:[%s243 + $0x14c] sm:$0xf]
      %v383 = vld [vmem:[%s243 + $0x150] sm:$0xff]
      %v384 = vld [vmem:[%s243 + $0x158] sm:$0xff]
      %v385 = vld [vmem:[%s243 + $0x160] sm:$0xff]
      %v386 = vld [vmem:[%s243 + $0x168] sm:$0xf]
      %v387 = vld [vmem:[%s243 + $0x16c] sm:$0xff]
      %v388 = vld [vmem:[%s243 + $0x174] sm:$0xff]
      %v389 = vld [vmem:[%s243 + $0x17c] sm:$0xff]
      %v390 = vld [vmem:[%s243 + $0x184] sm:$0xf]
      %v391 = vld [vmem:[%s243 + $0x188] sm:$0xff]
      %v392 = vld [vmem:[%s243 + $0x190] sm:$0xff]
      %v393 = vld [vmem:[%s243 + $0x198] sm:$0xff]
      %v394 = vld [vmem:[%s243 + $0x1a0] sm:$0xf]
      %v395 = vld [vmem:[%s243 + $0x1a4] sm:$0xff]
      %v396 = vld [vmem:[%s243 + $0x1ac] sm:$0xff]
      %v397 = vld [vmem:[%s243 + $0x1b4] sm:$0xff]
      %v398 = vld [vmem:[%s243 + $0x1bc] sm:$0xf]
      %v399 = vld [vmem:[%s243 + $0x1c0] sm:$0xff]
      %v400 = vld [vmem:[%s243 + $0x1c8] sm:$0xff]
      %v401 = vld [vmem:[%s243 + $0x1d0] sm:$0xff]
      %v402 = vld [vmem:[%s243 + $0x1d8] sm:$0xf]
      %v403 = vld [vmem:[%s243 + $0x1dc] sm:$0xff]
      %v404 = vld [vmem:[%s243 + $0x1e4] sm:$0xff]
      %v405 = vld [vmem:[%s243 + $0x1ec] sm:$0xff]
      %v406 = vld [vmem:[%s243 + $0x1f4] sm:$0xf]
      %v407 = vld [vmem:[%s243 + $0x1f8] sm:$0xff]
      %v408 = vld [vmem:[%s243 + $0x200] sm:$0xff]
      %v409 = vld [vmem:[%s243 + $0x208] sm:$0xff]
      %v410 = vld [vmem:[%s243 + $0x210] sm:$0xf]
      %v411 = vld [vmem:[%s243 + $0x214] sm:$0xff]
      %v412 = vld [vmem:[%s243 + $0x21c] sm:$0xff]
      %v413 = vld [vmem:[%s243 + $0x224] sm:$0xff]
      %v414 = vld [vmem:[%s243 + $0x22c] sm:$0xf]
      %v415 = vld [vmem:[%s243 + $0x230] sm:$0xff]
      %v416 = vld [vmem:[%s243 + $0x238] sm:$0xff]
      %v417 = vld [vmem:[%s243 + $0x240] sm:$0xff]
      %v418 = vld [vmem:[%s243 + $0x248] sm:$0xf]
      %v419 = vld [vmem:[%s243 + $0x24c] sm:$0xff]
      %v420 = vld [vmem:[%s243 + $0x254] sm:$0xff]
      %v421 = vld [vmem:[%s243 + $0x25c] sm:$0xff]
      %v422 = vld [vmem:[%s243 + $0x264] sm:$0xf]
      %v423 = vld [vmem:[%s243 + $0x268] sm:$0xff]
      %v424 = vld [vmem:[%s243 + $0x270] sm:$0xff]
      %v425 = vld [vmem:[%s243 + $0x278] sm:$0xff]
      %v426 = vld [vmem:[%s243 + $0x280] sm:$0xf]
      %v427 = vld [vmem:[%s243 + $0x284] sm:$0xff]
      %v428 = vld [vmem:[%s243 + $0x28c] sm:$0xff]
      %v429 = vld [vmem:[%s243 + $0x294] sm:$0xff]
      %v430 = vld [vmem:[%s243 + $0x29c] sm:$0xf]
      %v431 = vld [vmem:[%s243 + $0x2a0] sm:$0xff]
      %v432 = vld [vmem:[%s243 + $0x2a8] sm:$0xff]
      %v433 = vld [vmem:[%s243 + $0x2b0] sm:$0xff]
      %v434 = vld [vmem:[%s243 + $0x2b8] sm:$0xf]
      %v435 = vld [vmem:[%s243 + $0x2bc] sm:$0xff]
      %v436 = vld [vmem:[%s243 + $0x2c4] sm:$0xff]
      %v437 = vld [vmem:[%s243 + $0x2cc] sm:$0xff]
      %v438 = vld [vmem:[%s243 + $0x2d4] sm:$0xf]
      %v439 = vld [vmem:[%s243 + $0x2d8] sm:$0xff]
      %v440 = vld [vmem:[%s243 + $0x2e0] sm:$0xff]
      %v441 = vld [vmem:[%s243 + $0x2e8] sm:$0xff]
      %v442 = vld [vmem:[%s243 + $0x2f0] sm:$0xf]
      %v443 = vld [vmem:[%s243 + $0x2f4] sm:$0xff]
      %v444 = vld [vmem:[%s243 + $0x2fc] sm:$0xff]
      %v445 = vld [vmem:[%s243 + $0x304] sm:$0xff]
      %v446 = vld [vmem:[%s243 + $0x30c] sm:$0xf]
      %v447 = vld [vmem:[%s243 + $0x310] sm:$0xff]
      %v448 = vld [vmem:[%s243 + $0x318] sm:$0xff]
      %v449 = vld [vmem:[%s243 + $0x320] sm:$0xff]
      %v450 = vld [vmem:[%s243 + $0x328] sm:$0xf]
      %v451 = vld [vmem:[%s243 + $0x32c] sm:$0xff]
      %v452 = vld [vmem:[%s243 + $0x334] sm:$0xff]
      %v453 = vld [vmem:[%s243 + $0x33c] sm:$0xff]
      %v454 = vld [vmem:[%s243 + $0x344] sm:$0xf]
      %v455 = vld [vmem:[%s243 + $0x348] sm:$0xff]
      %v456 = vld [vmem:[%s243 + $0x350] sm:$0xff]
      %v457 = vld [vmem:[%s243 + $0x358] sm:$0xff]
      %v458 = vld [vmem:[%s243 + $0x360] sm:$0xf]
      %v459 = vld [vmem:[%s243 + $0x364] sm:$0xff]
      %v460 = vld [vmem:[%s243 + $0x36c] sm:$0xff]
      %v461 = vld [vmem:[%s243 + $0x374] sm:$0xff]
      %v462 = vld [vmem:[%s243 + $0x37c] sm:$0xf]
      %v463 = vld [vmem:[%s253] sm:$0xf]
      %v464 = vld [vmem:[%s253 + $0x4] sm:$0xf]
      %v465 = vld [vmem:[%s253 + $0x8] sm:$0xf]
      %v466 = vld [vmem:[%s253 + $0xc] sm:$0xf]
      %v467 = vld [vmem:[%s253 + $0x10] sm:$0xf]
      %v468 = vld [vmem:[%s253 + $0x14] sm:$0xf]
      %v469 = vld [vmem:[%s253 + $0x18] sm:$0xf]
      %v470 = vld [vmem:[%s253 + $0x1c] sm:$0xf]
      %v471 = vld [vmem:[%s253 + $0x20] sm:$0xf]
      %v472 = vld [vmem:[%s253 + $0x24] sm:$0xf]
      %v473 = vld [vmem:[%s253 + $0x28] sm:$0xf]
      %v474 = vld [vmem:[%s253 + $0x2c] sm:$0xf]
      %v475 = vld [vmem:[%s253 + $0x30] sm:$0xf]
      %v476 = vld [vmem:[%s253 + $0x34] sm:$0xf]
      %v477 = vld [vmem:[%s253 + $0x38] sm:$0xf]
      %v478 = vld [vmem:[%s253 + $0x3c] sm:$0xf]
      %v479 = vld [vmem:[%s253 + $0x40] sm:$0xf]
      %v480 = vld [vmem:[%s253 + $0x44] sm:$0xf]
      %v481 = vld [vmem:[%s253 + $0x48] sm:$0xf]
      %v482 = vld [vmem:[%s253 + $0x4c] sm:$0xf]
      %v483 = vld [vmem:[%s253 + $0x50] sm:$0xf]
      %v484 = vld [vmem:[%s253 + $0x54] sm:$0xf]
      %v485 = vld [vmem:[%s253 + $0x58] sm:$0xf]
      %v486 = vld [vmem:[%s253 + $0x5c] sm:$0xf]
      %v487 = vld [vmem:[%s253 + $0x60] sm:$0xf]
      %v488 = vld [vmem:[%s253 + $0x64] sm:$0xf]
      %v489 = vld [vmem:[%s253 + $0x68] sm:$0xf]
      %v490 = vld [vmem:[%s253 + $0x6c] sm:$0xf]
      %v491 = vld [vmem:[%s253 + $0x70] sm:$0xf]
      %v492 = vld [vmem:[%s253 + $0x74] sm:$0xf]
      %v493 = vld [vmem:[%s253 + $0x78] sm:$0xf]
      %v494 = vld [vmem:[%s253 + $0x7c] sm:$0xf]
      %v495 = vld [vmem:[%s253 + $0x80] sm:$0xf]
      %v496 = vld [vmem:[%s253 + $0x84] sm:$0xf]
      %v497 = vld [vmem:[%s253 + $0x88] sm:$0xf]
      %v498 = vld [vmem:[%s253 + $0x8c] sm:$0xf]
      %v499 = vld [vmem:[%s253 + $0x90] sm:$0xf]
      %v500 = vld [vmem:[%s253 + $0x94] sm:$0xf]
      %v501 = vld [vmem:[%s253 + $0x98] sm:$0xf]
      %v502 = vld [vmem:[%s253 + $0x9c] sm:$0xf]
      %v503 = vld [vmem:[%s253 + $0xa0] sm:$0xf]
      %v504 = vld [vmem:[%s253 + $0xa4] sm:$0xf]
      %v505 = vld [vmem:[%s253 + $0xa8] sm:$0xf]
      %v506 = vld [vmem:[%s253 + $0xac] sm:$0xf]
      %v507 = vld [vmem:[%s253 + $0xb0] sm:$0xf]
      %v508 = vld [vmem:[%s253 + $0xb4] sm:$0xf]
      %v509 = vld [vmem:[%s253 + $0xb8] sm:$0xf]
      %v510 = vld [vmem:[%s253 + $0xbc] sm:$0xf]
      %v511 = vld [vmem:[%s253 + $0xc0] sm:$0xf]
      %v512 = vld [vmem:[%s253 + $0xc4] sm:$0xf]
      %v513 = vld [vmem:[%s253 + $0xc8] sm:$0xf]
      %v514 = vld [vmem:[%s253 + $0xcc] sm:$0xf]
      %v515 = vld [vmem:[%s253 + $0xd0] sm:$0xf]
      %v516 = vld [vmem:[%s253 + $0xd4] sm:$0xf]
      %v517 = vld [vmem:[%s253 + $0xd8] sm:$0xf]
      %v518 = vld [vmem:[%s253 + $0xdc] sm:$0xf]
      %v519 = vld [vmem:[%s253 + $0xe0] sm:$0xf]
      %v520 = vld [vmem:[%s253 + $0xe4] sm:$0xf]
      %v521 = vld [vmem:[%s253 + $0xe8] sm:$0xf]
      %v522 = vld [vmem:[%s253 + $0xec] sm:$0xf]
      %v523 = vld [vmem:[%s253 + $0xf0] sm:$0xf]
      %v524 = vld [vmem:[%s253 + $0xf4] sm:$0xf]
      %v525 = vld [vmem:[%s253 + $0xf8] sm:$0xf]
      %v526 = vld [vmem:[%s253 + $0xfc] sm:$0xf]
      %v527 = vld [vmem:[%s253 + $0x100] sm:$0xf]
      %v528 = vld [vmem:[%s253 + $0x104] sm:$0xf]
      %v529 = vld [vmem:[%s253 + $0x108] sm:$0xf]
      %v530 = vld [vmem:[%s253 + $0x10c] sm:$0xf]
      %v531 = vld [vmem:[%s253 + $0x110] sm:$0xf]
      %v532 = vld [vmem:[%s253 + $0x114] sm:$0xf]
      %v533 = vld [vmem:[%s253 + $0x118] sm:$0xf]
      %v534 = vld [vmem:[%s253 + $0x11c] sm:$0xf]
      %v535 = vld [vmem:[%s253 + $0x120] sm:$0xf]
      %v536 = vld [vmem:[%s253 + $0x124] sm:$0xf]
      %v537 = vld [vmem:[%s253 + $0x128] sm:$0xf]
      %v538 = vld [vmem:[%s253 + $0x12c] sm:$0xf]
      %v539 = vld [vmem:[%s253 + $0x130] sm:$0xf]
      %v540 = vld [vmem:[%s253 + $0x134] sm:$0xf]
      %v541 = vld [vmem:[%s253 + $0x138] sm:$0xf]
      %v542 = vld [vmem:[%s253 + $0x13c] sm:$0xf]
      %v543 = vld [vmem:[%s253 + $0x140] sm:$0xf]
      %v544 = vld [vmem:[%s253 + $0x144] sm:$0xf]
      %v545 = vld [vmem:[%s253 + $0x148] sm:$0xf]
      %v546 = vld [vmem:[%s253 + $0x14c] sm:$0xf]
      %v547 = vld [vmem:[%s253 + $0x150] sm:$0xf]
      %v548 = vld [vmem:[%s253 + $0x154] sm:$0xf]
      %v549 = vld [vmem:[%s253 + $0x158] sm:$0xf]
      %v550 = vld [vmem:[%s253 + $0x15c] sm:$0xf]
      %v551 = vld [vmem:[%s253 + $0x160] sm:$0xf]
      %v552 = vld [vmem:[%s253 + $0x164] sm:$0xf]
      %v553 = vld [vmem:[%s253 + $0x168] sm:$0xf]
      %v554 = vld [vmem:[%s253 + $0x16c] sm:$0xf]
      %v555 = vld [vmem:[%s253 + $0x170] sm:$0xf]
      %v556 = vld [vmem:[%s253 + $0x174] sm:$0xf]
      %v557 = vld [vmem:[%s253 + $0x178] sm:$0xf]
      %v558 = vld [vmem:[%s253 + $0x17c] sm:$0xf]
      %v559 = vld [vmem:[%s253 + $0x180] sm:$0xf]
      %v560 = vld [vmem:[%s253 + $0x184] sm:$0xf]
      %v561 = vld [vmem:[%s253 + $0x188] sm:$0xf]
      %v562 = vld [vmem:[%s253 + $0x18c] sm:$0xf]
      %v563 = vld [vmem:[%s253 + $0x190] sm:$0xf]
      %v564 = vld [vmem:[%s253 + $0x194] sm:$0xf]
      %v565 = vld [vmem:[%s253 + $0x198] sm:$0xf]
      %v566 = vld [vmem:[%s253 + $0x19c] sm:$0xf]
      %v567 = vld [vmem:[%s253 + $0x1a0] sm:$0xf]
      %v568 = vld [vmem:[%s253 + $0x1a4] sm:$0xf]
      %v569 = vld [vmem:[%s253 + $0x1a8] sm:$0xf]
      %v570 = vld [vmem:[%s253 + $0x1ac] sm:$0xf]
      %v571 = vld [vmem:[%s253 + $0x1b0] sm:$0xf]
      %v572 = vld [vmem:[%s253 + $0x1b4] sm:$0xf]
      %v573 = vld [vmem:[%s253 + $0x1b8] sm:$0xf]
      %v574 = vld [vmem:[%s253 + $0x1bc] sm:$0xf]
      %v703 = vunpack.c.l.b16 %v335
      %v704 = vunpack.c.h.b16 %v335
      %v705 = vunpack.c.l.b16 %v336
      %v706 = vunpack.c.h.b16 %v336
      %v707 = vunpack.c.l.b16 %v337
      %v708 = vunpack.c.h.b16 %v337
      %v709 = vunpack.c.l.b16 %v338
      %v710 = vunpack.c.l.b16 %v339
      %v711 = vunpack.c.h.b16 %v339
      %v712 = vunpack.c.l.b16 %v340
      %v713 = vunpack.c.h.b16 %v340
      %v714 = vunpack.c.l.b16 %v341
      %v715 = vunpack.c.h.b16 %v341
      %v716 = vunpack.c.l.b16 %v342
      %v717 = vunpack.c.l.b16 %v343
      %v718 = vunpack.c.h.b16 %v343
      %v719 = vunpack.c.l.b16 %v344
      %v720 = vunpack.c.h.b16 %v344
      %v721 = vunpack.c.l.b16 %v345
      %v722 = vunpack.c.h.b16 %v345
      %v723 = vunpack.c.l.b16 %v346
      %v724 = vunpack.c.l.b16 %v347
      %v725 = vunpack.c.h.b16 %v347
      %v726 = vunpack.c.l.b16 %v348
      %v727 = vunpack.c.h.b16 %v348
      %v728 = vunpack.c.l.b16 %v349
      %v729 = vunpack.c.h.b16 %v349
      %v730 = vunpack.c.l.b16 %v350
      %v731 = vunpack.c.l.b16 %v351
      %v732 = vunpack.c.h.b16 %v351
      %v733 = vunpack.c.l.b16 %v352
      %v734 = vunpack.c.h.b16 %v352
      %v735 = vunpack.c.l.b16 %v353
      %v736 = vunpack.c.h.b16 %v353
      %v737 = vunpack.c.l.b16 %v354
      %v738 = vunpack.c.l.b16 %v355
      %v739 = vunpack.c.h.b16 %v355
      %v740 = vunpack.c.l.b16 %v356
      %v741 = vunpack.c.h.b16 %v356
      %v742 = vunpack.c.l.b16 %v357
      %v743 = vunpack.c.h.b16 %v357
      %v744 = vunpack.c.l.b16 %v358
      %v745 = vunpack.c.l.b16 %v359
      %v746 = vunpack.c.h.b16 %v359
      %v747 = vunpack.c.l.b16 %v360
      %v748 = vunpack.c.h.b16 %v360
      %v749 = vunpack.c.l.b16 %v361
      %v750 = vunpack.c.h.b16 %v361
      %v751 = vunpack.c.l.b16 %v362
      %v752 = vunpack.c.l.b16 %v363
      %v753 = vunpack.c.h.b16 %v363
      %v754 = vunpack.c.l.b16 %v364
      %v755 = vunpack.c.h.b16 %v364
      %v756 = vunpack.c.l.b16 %v365
      %v757 = vunpack.c.h.b16 %v365
      %v758 = vunpack.c.l.b16 %v366
      %v759 = vunpack.c.l.b16 %v367
      %v760 = vunpack.c.h.b16 %v367
      %v761 = vunpack.c.l.b16 %v368
      %v762 = vunpack.c.h.b16 %v368
      %v763 = vunpack.c.l.b16 %v369
      %v764 = vunpack.c.h.b16 %v369
      %v765 = vunpack.c.l.b16 %v370
      %v766 = vunpack.c.l.b16 %v371
      %v767 = vunpack.c.h.b16 %v371
      %v768 = vunpack.c.l.b16 %v372
      %v769 = vunpack.c.h.b16 %v372
      %v770 = vunpack.c.l.b16 %v373
      %v771 = vunpack.c.h.b16 %v373
      %v772 = vunpack.c.l.b16 %v374
      %v773 = vunpack.c.l.b16 %v375
      %v774 = vunpack.c.h.b16 %v375
      %v775 = vunpack.c.l.b16 %v376
      %v776 = vunpack.c.h.b16 %v376
      %v777 = vunpack.c.l.b16 %v377
      %v778 = vunpack.c.h.b16 %v377
      %v779 = vunpack.c.l.b16 %v378
      %v780 = vunpack.c.l.b16 %v379
      %v781 = vunpack.c.h.b16 %v379
      %v782 = vunpack.c.l.b16 %v380
      %v783 = vunpack.c.h.b16 %v380
      %v784 = vunpack.c.l.b16 %v381
      %v785 = vunpack.c.h.b16 %v381
      %v786 = vunpack.c.l.b16 %v382
      %v787 = vunpack.c.l.b16 %v383
      %v788 = vunpack.c.h.b16 %v383
      %v789 = vunpack.c.l.b16 %v384
      %v790 = vunpack.c.h.b16 %v384
      %v791 = vunpack.c.l.b16 %v385
      %v792 = vunpack.c.h.b16 %v385
      %v793 = vunpack.c.l.b16 %v386
      %v794 = vunpack.c.l.b16 %v387
      %v795 = vunpack.c.h.b16 %v387
      %v796 = vunpack.c.l.b16 %v388
      %v797 = vunpack.c.h.b16 %v388
      %v798 = vunpack.c.l.b16 %v389
      %v799 = vunpack.c.h.b16 %v389
      %v800 = vunpack.c.l.b16 %v390
      %v801 = vunpack.c.l.b16 %v391
      %v802 = vunpack.c.h.b16 %v391
      %v803 = vunpack.c.l.b16 %v392
      %v804 = vunpack.c.h.b16 %v392
      %v805 = vunpack.c.l.b16 %v393
      %v806 = vunpack.c.h.b16 %v393
      %v807 = vunpack.c.l.b16 %v394
      %v808 = vunpack.c.l.b16 %v395
      %v809 = vunpack.c.h.b16 %v395
      %v810 = vunpack.c.l.b16 %v396
      %v811 = vunpack.c.h.b16 %v396
      %v812 = vunpack.c.l.b16 %v397
      %v813 = vunpack.c.h.b16 %v397
      %v814 = vunpack.c.l.b16 %v398
      %v815 = vunpack.c.l.b16 %v399
      %v816 = vunpack.c.h.b16 %v399
      %v817 = vunpack.c.l.b16 %v400
      %v818 = vunpack.c.h.b16 %v400
      %v819 = vunpack.c.l.b16 %v401
      %v820 = vunpack.c.h.b16 %v401
      %v821 = vunpack.c.l.b16 %v402
      %v822 = vunpack.c.l.b16 %v403
      %v823 = vunpack.c.h.b16 %v403
      %v824 = vunpack.c.l.b16 %v404
      %v825 = vunpack.c.h.b16 %v404
      %v826 = vunpack.c.l.b16 %v405
      %v827 = vunpack.c.h.b16 %v405
      %v828 = vunpack.c.l.b16 %v406
      %v829 = vunpack.c.l.b16 %v407
      %v830 = vunpack.c.h.b16 %v407
      %v831 = vunpack.c.l.b16 %v408
      %v832 = vunpack.c.h.b16 %v408
      %v833 = vunpack.c.l.b16 %v409
      %v834 = vunpack.c.h.b16 %v409
      %v835 = vunpack.c.l.b16 %v410
      %v836 = vunpack.c.l.b16 %v411
      %v837 = vunpack.c.h.b16 %v411
      %v838 = vunpack.c.l.b16 %v412
      %v839 = vunpack.c.h.b16 %v412
      %v840 = vunpack.c.l.b16 %v413
      %v841 = vunpack.c.h.b16 %v413
      %v842 = vunpack.c.l.b16 %v414
      %v843 = vunpack.c.l.b16 %v415
      %v844 = vunpack.c.h.b16 %v415
      %v845 = vunpack.c.l.b16 %v416
      %v846 = vunpack.c.h.b16 %v416
      %v847 = vunpack.c.l.b16 %v417
      %v848 = vunpack.c.h.b16 %v417
      %v849 = vunpack.c.l.b16 %v418
      %v850 = vunpack.c.l.b16 %v419
      %v851 = vunpack.c.h.b16 %v419
      %v852 = vunpack.c.l.b16 %v420
      %v853 = vunpack.c.h.b16 %v420
      %v854 = vunpack.c.l.b16 %v421
      %v855 = vunpack.c.h.b16 %v421
      %v856 = vunpack.c.l.b16 %v422
      %v857 = vunpack.c.l.b16 %v423
      %v858 = vunpack.c.h.b16 %v423
      %v859 = vunpack.c.l.b16 %v424
      %v860 = vunpack.c.h.b16 %v424
      %v861 = vunpack.c.l.b16 %v425
      %v862 = vunpack.c.h.b16 %v425
      %v863 = vunpack.c.l.b16 %v426
      %v864 = vunpack.c.l.b16 %v427
      %v865 = vunpack.c.h.b16 %v427
      %v866 = vunpack.c.l.b16 %v428
      %v867 = vunpack.c.h.b16 %v428
      %v868 = vunpack.c.l.b16 %v429
      %v869 = vunpack.c.h.b16 %v429
      %v870 = vunpack.c.l.b16 %v430
      %v871 = vunpack.c.l.b16 %v431
      %v872 = vunpack.c.h.b16 %v431
      %v873 = vunpack.c.l.b16 %v432
      %v874 = vunpack.c.h.b16 %v432
      %v875 = vunpack.c.l.b16 %v433
      %v876 = vunpack.c.h.b16 %v433
      %v877 = vunpack.c.l.b16 %v434
      %v878 = vunpack.c.l.b16 %v435
      %v879 = vunpack.c.h.b16 %v435
      %v880 = vunpack.c.l.b16 %v436
      %v881 = vunpack.c.h.b16 %v436
      %v882 = vunpack.c.l.b16 %v437
      %v883 = vunpack.c.h.b16 %v437
      %v884 = vunpack.c.l.b16 %v438
      %v885 = vunpack.c.l.b16 %v439
      %v886 = vunpack.c.h.b16 %v439
      %v887 = vunpack.c.l.b16 %v440
      %v888 = vunpack.c.h.b16 %v440
      %v889 = vunpack.c.l.b16 %v441
      %v890 = vunpack.c.h.b16 %v441
      %v891 = vunpack.c.l.b16 %v442
      %v892 = vunpack.c.l.b16 %v443
      %v893 = vunpack.c.h.b16 %v443
      %v894 = vunpack.c.l.b16 %v444
      %v895 = vunpack.c.h.b16 %v444
      %v896 = vunpack.c.l.b16 %v445
      %v897 = vunpack.c.h.b16 %v445
      %v898 = vunpack.c.l.b16 %v446
      %v899 = vunpack.c.l.b16 %v447
      %v900 = vunpack.c.h.b16 %v447
      %v901 = vunpack.c.l.b16 %v448
      %v902 = vunpack.c.h.b16 %v448
      %v903 = vunpack.c.l.b16 %v449
      %v904 = vunpack.c.h.b16 %v449
      %v905 = vunpack.c.l.b16 %v450
      %v906 = vunpack.c.l.b16 %v451
      %v907 = vunpack.c.h.b16 %v451
      %v908 = vunpack.c.l.b16 %v452
      %v909 = vunpack.c.h.b16 %v452
      %v910 = vunpack.c.l.b16 %v453
      %v911 = vunpack.c.h.b16 %v453
      %v912 = vunpack.c.l.b16 %v454
      %v913 = vunpack.c.l.b16 %v455
      %v914 = vunpack.c.h.b16 %v455
      %v915 = vunpack.c.l.b16 %v456
      %v916 = vunpack.c.h.b16 %v456
      %v917 = vunpack.c.l.b16 %v457
      %v918 = vunpack.c.h.b16 %v457
      %v919 = vunpack.c.l.b16 %v458
      %v920 = vunpack.c.l.b16 %v459
      %v921 = vunpack.c.h.b16 %v459
      %v922 = vunpack.c.l.b16 %v460
      %v923 = vunpack.c.h.b16 %v460
      %v924 = vunpack.c.l.b16 %v461
      %v925 = vunpack.c.h.b16 %v461
      %v926 = vunpack.c.l.b16 %v462
      %v927 = vpack.c.b16 %v710, %v703
      %v928 = vpack.c.b16 %v711, %v704
      %v929 = vpack.c.b16 %v712, %v705
      %v930 = vpack.c.b16 %v713, %v706
      %v931 = vpack.c.b16 %v714, %v707
      %v932 = vpack.c.b16 %v715, %v708
      %v933 = vpack.c.b16 %v716, %v709
      %v934 = vpack.c.b16 %v724, %v717
      %v935 = vpack.c.b16 %v725, %v718
      %v936 = vpack.c.b16 %v726, %v719
      %v937 = vpack.c.b16 %v727, %v720
      %v938 = vpack.c.b16 %v728, %v721
      %v939 = vpack.c.b16 %v729, %v722
      %v940 = vpack.c.b16 %v730, %v723
      %v941 = vpack.c.b16 %v738, %v731
      %v942 = vpack.c.b16 %v739, %v732
      %v943 = vpack.c.b16 %v740, %v733
      %v944 = vpack.c.b16 %v741, %v734
      %v945 = vpack.c.b16 %v742, %v735
      %v946 = vpack.c.b16 %v743, %v736
      %v947 = vpack.c.b16 %v744, %v737
      %v948 = vpack.c.b16 %v752, %v745
      %v949 = vpack.c.b16 %v753, %v746
      %v950 = vpack.c.b16 %v754, %v747
      %v951 = vpack.c.b16 %v755, %v748
      %v952 = vpack.c.b16 %v756, %v749
      %v953 = vpack.c.b16 %v757, %v750
      %v954 = vpack.c.b16 %v758, %v751
      %v955 = vpack.c.b16 %v766, %v759
      %v956 = vpack.c.b16 %v767, %v760
      %v957 = vpack.c.b16 %v768, %v761
      %v958 = vpack.c.b16 %v769, %v762
      %v959 = vpack.c.b16 %v770, %v763
      %v960 = vpack.c.b16 %v771, %v764
      %v961 = vpack.c.b16 %v772, %v765
      %v962 = vpack.c.b16 %v780, %v773
      %v963 = vpack.c.b16 %v781, %v774
      %v964 = vpack.c.b16 %v782, %v775
      %v965 = vpack.c.b16 %v783, %v776
      %v966 = vpack.c.b16 %v784, %v777
      %v967 = vpack.c.b16 %v785, %v778
      %v968 = vpack.c.b16 %v786, %v779
      %v969 = vpack.c.b16 %v794, %v787
      %v970 = vpack.c.b16 %v795, %v788
      %v971 = vpack.c.b16 %v796, %v789
      %v972 = vpack.c.b16 %v797, %v790
      %v973 = vpack.c.b16 %v798, %v791
      %v974 = vpack.c.b16 %v799, %v792
      %v975 = vpack.c.b16 %v800, %v793
      %v976 = vpack.c.b16 %v808, %v801
      %v977 = vpack.c.b16 %v809, %v802
      %v978 = vpack.c.b16 %v810, %v803
      %v979 = vpack.c.b16 %v811, %v804
      %v980 = vpack.c.b16 %v812, %v805
      %v981 = vpack.c.b16 %v813, %v806
      %v982 = vpack.c.b16 %v814, %v807
      %v983 = vpack.c.b16 %v822, %v815
      %v984 = vpack.c.b16 %v823, %v816
      %v985 = vpack.c.b16 %v824, %v817
      %v986 = vpack.c.b16 %v825, %v818
      %v987 = vpack.c.b16 %v826, %v819
      %v988 = vpack.c.b16 %v827, %v820
      %v989 = vpack.c.b16 %v828, %v821
      %v990 = vpack.c.b16 %v836, %v829
      %v991 = vpack.c.b16 %v837, %v830
      %v992 = vpack.c.b16 %v838, %v831
      %v993 = vpack.c.b16 %v839, %v832
      %v994 = vpack.c.b16 %v840, %v833
      %v995 = vpack.c.b16 %v841, %v834
      %v996 = vpack.c.b16 %v842, %v835
      %v997 = vpack.c.b16 %v850, %v843
      %v998 = vpack.c.b16 %v851, %v844
      %v999 = vpack.c.b16 %v852, %v845
      %v1000 = vpack.c.b16 %v853, %v846
      %v1001 = vpack.c.b16 %v854, %v847
      %v1002 = vpack.c.b16 %v855, %v848
      %v1003 = vpack.c.b16 %v856, %v849
      %v1004 = vpack.c.b16 %v864, %v857
      %v1005 = vpack.c.b16 %v865, %v858
      %v1006 = vpack.c.b16 %v866, %v859
      %v1007 = vpack.c.b16 %v867, %v860
      %v1008 = vpack.c.b16 %v868, %v861
      %v1009 = vpack.c.b16 %v869, %v862
      %v1010 = vpack.c.b16 %v870, %v863
      %v1011 = vpack.c.b16 %v878, %v871
      %v1012 = vpack.c.b16 %v879, %v872
      %v1013 = vpack.c.b16 %v880, %v873
      %v1014 = vpack.c.b16 %v881, %v874
      %v1015 = vpack.c.b16 %v882, %v875
      %v1016 = vpack.c.b16 %v883, %v876
      %v1017 = vpack.c.b16 %v884, %v877
      %v1018 = vpack.c.b16 %v892, %v885
      %v1019 = vpack.c.b16 %v893, %v886
      %v1020 = vpack.c.b16 %v894, %v887
      %v1021 = vpack.c.b16 %v895, %v888
      %v1022 = vpack.c.b16 %v896, %v889
      %v1023 = vpack.c.b16 %v897, %v890
      %v1024 = vpack.c.b16 %v898, %v891
      %v1025 = vpack.c.b16 %v906, %v899
      %v1026 = vpack.c.b16 %v907, %v900
      %v1027 = vpack.c.b16 %v908, %v901
      %v1028 = vpack.c.b16 %v909, %v902
      %v1029 = vpack.c.b16 %v910, %v903
      %v1030 = vpack.c.b16 %v911, %v904
      %v1031 = vpack.c.b16 %v912, %v905
      %v1032 = vpack.c.b16 %v920, %v913
      %v1033 = vpack.c.b16 %v921, %v914
      %v1034 = vpack.c.b16 %v922, %v915
      %v1035 = vpack.c.b16 %v923, %v916
      %v1036 = vpack.c.b16 %v924, %v917
      %v1037 = vpack.c.b16 %v925, %v918
      %v1038 = vpack.c.b16 %v926, %v919
      %v1263 = vunpack.c.l.b16 %v463
      %v1264 = vunpack.c.l.b16 %v464
      %v1265 = vunpack.c.l.b16 %v465
      %v1266 = vunpack.c.l.b16 %v466
      %v1267 = vunpack.c.l.b16 %v467
      %v1268 = vunpack.c.l.b16 %v468
      %v1269 = vunpack.c.l.b16 %v469
      %v1270 = vunpack.c.l.b16 %v470
      %v1271 = vunpack.c.l.b16 %v471
      %v1272 = vunpack.c.l.b16 %v472
      %v1273 = vunpack.c.l.b16 %v473
      %v1274 = vunpack.c.l.b16 %v474
      %v1275 = vunpack.c.l.b16 %v475
      %v1276 = vunpack.c.l.b16 %v476
      %v1277 = vunpack.c.l.b16 %v477
      %v1278 = vunpack.c.l.b16 %v478
      %v1279 = vunpack.c.l.b16 %v479
      %v1280 = vunpack.c.l.b16 %v480
      %v1281 = vunpack.c.l.b16 %v481
      %v1282 = vunpack.c.l.b16 %v482
      %v1283 = vunpack.c.l.b16 %v483
      %v1284 = vunpack.c.l.b16 %v484
      %v1285 = vunpack.c.l.b16 %v485
      %v1286 = vunpack.c.l.b16 %v486
      %v1287 = vunpack.c.l.b16 %v487
      %v1288 = vunpack.c.l.b16 %v488
      %v1289 = vunpack.c.l.b16 %v489
      %v1290 = vunpack.c.l.b16 %v490
      %v1291 = vunpack.c.l.b16 %v491
      %v1292 = vunpack.c.l.b16 %v492
      %v1293 = vunpack.c.l.b16 %v493
      %v1294 = vunpack.c.l.b16 %v494
      %v1295 = vunpack.c.l.b16 %v495
      %v1296 = vunpack.c.l.b16 %v496
      %v1297 = vunpack.c.l.b16 %v497
      %v1298 = vunpack.c.l.b16 %v498
      %v1299 = vunpack.c.l.b16 %v499
      %v1300 = vunpack.c.l.b16 %v500
      %v1301 = vunpack.c.l.b16 %v501
      %v1302 = vunpack.c.l.b16 %v502
      %v1303 = vunpack.c.l.b16 %v503
      %v1304 = vunpack.c.l.b16 %v504
      %v1305 = vunpack.c.l.b16 %v505
      %v1306 = vunpack.c.l.b16 %v506
      %v1307 = vunpack.c.l.b16 %v507
      %v1308 = vunpack.c.l.b16 %v508
      %v1309 = vunpack.c.l.b16 %v509
      %v1310 = vunpack.c.l.b16 %v510
      %v1311 = vunpack.c.l.b16 %v511
      %v1312 = vunpack.c.l.b16 %v512
      %v1313 = vunpack.c.l.b16 %v513
      %v1314 = vunpack.c.l.b16 %v514
      %v1315 = vunpack.c.l.b16 %v515
      %v1316 = vunpack.c.l.b16 %v516
      %v1317 = vunpack.c.l.b16 %v517
      %v1318 = vunpack.c.l.b16 %v518
      %v1319 = vunpack.c.l.b16 %v519
      %v1320 = vunpack.c.l.b16 %v520
      %v1321 = vunpack.c.l.b16 %v521
      %v1322 = vunpack.c.l.b16 %v522
      %v1323 = vunpack.c.l.b16 %v523
      %v1324 = vunpack.c.l.b16 %v524
      %v1325 = vunpack.c.l.b16 %v525
      %v1326 = vunpack.c.l.b16 %v526
      %v1327 = vunpack.c.l.b16 %v527
      %v1328 = vunpack.c.l.b16 %v528
      %v1329 = vunpack.c.l.b16 %v529
      %v1330 = vunpack.c.l.b16 %v530
      %v1331 = vunpack.c.l.b16 %v531
      %v1332 = vunpack.c.l.b16 %v532
      %v1333 = vunpack.c.l.b16 %v533
      %v1334 = vunpack.c.l.b16 %v534
      %v1335 = vunpack.c.l.b16 %v535
      %v1336 = vunpack.c.l.b16 %v536
      %v1337 = vunpack.c.l.b16 %v537
      %v1338 = vunpack.c.l.b16 %v538
      %v1339 = vunpack.c.l.b16 %v539
      %v1340 = vunpack.c.l.b16 %v540
      %v1341 = vunpack.c.l.b16 %v541
      %v1342 = vunpack.c.l.b16 %v542
      %v1343 = vunpack.c.l.b16 %v543
      %v1344 = vunpack.c.l.b16 %v544
      %v1345 = vunpack.c.l.b16 %v545
      %v1346 = vunpack.c.l.b16 %v546
      %v1347 = vunpack.c.l.b16 %v547
      %v1348 = vunpack.c.l.b16 %v548
      %v1349 = vunpack.c.l.b16 %v549
      %v1350 = vunpack.c.l.b16 %v550
      %v1351 = vunpack.c.l.b16 %v551
      %v1352 = vunpack.c.l.b16 %v552
      %v1353 = vunpack.c.l.b16 %v553
      %v1354 = vunpack.c.l.b16 %v554
      %v1355 = vunpack.c.l.b16 %v555
      %v1356 = vunpack.c.l.b16 %v556
      %v1357 = vunpack.c.l.b16 %v557
      %v1358 = vunpack.c.l.b16 %v558
      %v1359 = vunpack.c.l.b16 %v559
      %v1360 = vunpack.c.l.b16 %v560
      %v1361 = vunpack.c.l.b16 %v561
      %v1362 = vunpack.c.l.b16 %v562
      %v1363 = vunpack.c.l.b16 %v563
      %v1364 = vunpack.c.l.b16 %v564
      %v1365 = vunpack.c.l.b16 %v565
      %v1366 = vunpack.c.l.b16 %v566
      %v1367 = vunpack.c.l.b16 %v567
      %v1368 = vunpack.c.l.b16 %v568
      %v1369 = vunpack.c.l.b16 %v569
      %v1370 = vunpack.c.l.b16 %v570
      %v1371 = vunpack.c.l.b16 %v571
      %v1372 = vunpack.c.l.b16 %v572
      %v1373 = vunpack.c.l.b16 %v573
      %v1374 = vunpack.c.l.b16 %v574
      %v1375 = vpack.c.b16 %v1264, %v1263
      %v1376 = vpack.c.b16 %v1266, %v1265
      %v1377 = vpack.c.b16 %v1268, %v1267
      %v1378 = vpack.c.b16 %v1270, %v1269
      %v1379 = vpack.c.b16 %v1272, %v1271
      %v1380 = vpack.c.b16 %v1274, %v1273
      %v1381 = vpack.c.b16 %v1276, %v1275
      %v1382 = vpack.c.b16 %v1278, %v1277
      %v1383 = vpack.c.b16 %v1280, %v1279
      %v1384 = vpack.c.b16 %v1282, %v1281
      %v1385 = vpack.c.b16 %v1284, %v1283
      %v1386 = vpack.c.b16 %v1286, %v1285
      %v1387 = vpack.c.b16 %v1288, %v1287
      %v1388 = vpack.c.b16 %v1290, %v1289
      %v1389 = vpack.c.b16 %v1292, %v1291
      %v1390 = vpack.c.b16 %v1294, %v1293
      %v1391 = vpack.c.b16 %v1296, %v1295
      %v1392 = vpack.c.b16 %v1298, %v1297
      %v1393 = vpack.c.b16 %v1300, %v1299
      %v1394 = vpack.c.b16 %v1302, %v1301
      %v1395 = vpack.c.b16 %v1304, %v1303
      %v1396 = vpack.c.b16 %v1306, %v1305
      %v1397 = vpack.c.b16 %v1308, %v1307
      %v1398 = vpack.c.b16 %v1310, %v1309
      %v1399 = vpack.c.b16 %v1312, %v1311
      %v1400 = vpack.c.b16 %v1314, %v1313
      %v1401 = vpack.c.b16 %v1316, %v1315
      %v1402 = vpack.c.b16 %v1318, %v1317
      %v1403 = vpack.c.b16 %v1320, %v1319
      %v1404 = vpack.c.b16 %v1322, %v1321
      %v1405 = vpack.c.b16 %v1324, %v1323
      %v1406 = vpack.c.b16 %v1326, %v1325
      %v1407 = vpack.c.b16 %v1328, %v1327
      %v1408 = vpack.c.b16 %v1330, %v1329
      %v1409 = vpack.c.b16 %v1332, %v1331
      %v1410 = vpack.c.b16 %v1334, %v1333
      %v1411 = vpack.c.b16 %v1336, %v1335
      %v1412 = vpack.c.b16 %v1338, %v1337
      %v1413 = vpack.c.b16 %v1340, %v1339
      %v1414 = vpack.c.b16 %v1342, %v1341
      %v1415 = vpack.c.b16 %v1344, %v1343
      %v1416 = vpack.c.b16 %v1346, %v1345
      %v1417 = vpack.c.b16 %v1348, %v1347
      %v1418 = vpack.c.b16 %v1350, %v1349
      %v1419 = vpack.c.b16 %v1352, %v1351
      %v1420 = vpack.c.b16 %v1354, %v1353
      %v1421 = vpack.c.b16 %v1356, %v1355
      %v1422 = vpack.c.b16 %v1358, %v1357
      %v1423 = vpack.c.b16 %v1360, %v1359
      %v1424 = vpack.c.b16 %v1362, %v1361
      %v1425 = vpack.c.b16 %v1364, %v1363
      %v1426 = vpack.c.b16 %v1366, %v1365
      %v1427 = vpack.c.b16 %v1368, %v1367
      %v1428 = vpack.c.b16 %v1370, %v1369
      %v1429 = vpack.c.b16 %v1372, %v1371
      %v1430 = vpack.c.b16 %v1374, %v1373
      %1487 = vmatpush.bf16.msra.mxu0 %v1382
      %1488 = vmatpush.bf16.msra.mxu0 %v1381
      %1489 = vmatpush.bf16.msra.mxu0 %v1380
      %1490 = vmatpush.bf16.msra.mxu0 %v1379
      %1491 = vmatpush.bf16.msra.mxu0 %v1378
      %1492 = vmatpush.bf16.msra.mxu0 %v1377
      %1493 = vmatpush.bf16.msra.mxu0 %v1376
      %1494 = vmatpush.bf16.msra.mxu0 %v1375
      %1495 = vmatmul.bf16.gmra.mxu0 %v927
      %v1496 = vpop.f32.mrf.mxu0
      %v1497 = vadd.f32 0.0, %v1496
      %v1498 = vpop.f32.mrf.mxu0
      %v1499 = vadd.f32 0.0, %v1498
      %1500 = vmatmul.bf16.gmra.mxu0 %v934
      %v1501 = vpop.f32.mrf.mxu0
      %v1502 = vadd.f32 0.0, %v1501
      %v1503 = vpop.f32.mrf.mxu0
      %v1504 = vadd.f32 0.0, %v1503
      %1505 = vmatmul.bf16.gmra.mxu0 %v941
      %v1506 = vpop.f32.mrf.mxu0
      %v1507 = vadd.f32 0.0, %v1506
      %v1508 = vpop.f32.mrf.mxu0
      %v1509 = vadd.f32 0.0, %v1508
      %1510 = vmatmul.bf16.gmra.mxu0 %v948
      %v1511 = vpop.f32.mrf.mxu0
      %v1512 = vadd.f32 0.0, %v1511
      %v1513 = vpop.f32.mrf.mxu0
      %v1514 = vadd.f32 0.0, %v1513
      %1515 = vmatmul.bf16.gmra.mxu0 %v955
      %v1516 = vpop.f32.mrf.mxu0
      %v1517 = vadd.f32 0.0, %v1516
      %v1518 = vpop.f32.mrf.mxu0
      %v1519 = vadd.f32 0.0, %v1518
      %1520 = vmatmul.bf16.gmra.mxu0 %v962
      %v1521 = vpop.f32.mrf.mxu0
      %v1522 = vadd.f32 0.0, %v1521
      %v1523 = vpop.f32.mrf.mxu0
      %v1524 = vadd.f32 0.0, %v1523
      %1525 = vmatmul.bf16.gmra.mxu0 %v969
      %v1526 = vpop.f32.mrf.mxu0
      %v1527 = vadd.f32 0.0, %v1526
      %v1528 = vpop.f32.mrf.mxu0
      %v1529 = vadd.f32 0.0, %v1528
      %1530 = vmatmul.bf16.gmra.mxu0 %v976
      %v1531 = vpop.f32.mrf.mxu0
      %v1532 = vadd.f32 0.0, %v1531
      %v1533 = vpop.f32.mrf.mxu0
      %v1534 = vadd.f32 0.0, %v1533
      %1535 = vmatmul.bf16.gmra.mxu0 %v983
      %v1536 = vpop.f32.mrf.mxu0
      %v1537 = vadd.f32 0.0, %v1536
      %v1538 = vpop.f32.mrf.mxu0
      %v1539 = vadd.f32 0.0, %v1538
      %1540 = vmatmul.bf16.gmra.mxu0 %v990
      %v1541 = vpop.f32.mrf.mxu0
      %v1542 = vadd.f32 0.0, %v1541
      %v1543 = vpop.f32.mrf.mxu0
      %v1544 = vadd.f32 0.0, %v1543
      %1545 = vmatmul.bf16.gmra.mxu0 %v997
      %v1546 = vpop.f32.mrf.mxu0
      %v1547 = vadd.f32 0.0, %v1546
      %v1548 = vpop.f32.mrf.mxu0
      %v1549 = vadd.f32 0.0, %v1548
      %1550 = vmatmul.bf16.gmra.mxu0 %v1004
      %v1551 = vpop.f32.mrf.mxu0
      %v1552 = vadd.f32 0.0, %v1551
      %v1553 = vpop.f32.mrf.mxu0
      %v1554 = vadd.f32 0.0, %v1553
      %1555 = vmatmul.bf16.gmra.mxu0 %v1011
      %v1556 = vpop.f32.mrf.mxu0
      %v1557 = vadd.f32 0.0, %v1556
      %v1558 = vpop.f32.mrf.mxu0
      %v1559 = vadd.f32 0.0, %v1558
      %1560 = vmatmul.bf16.gmra.mxu0 %v1018
      %v1561 = vpop.f32.mrf.mxu0
      %v1562 = vadd.f32 0.0, %v1561
      %v1563 = vpop.f32.mrf.mxu0
      %v1564 = vadd.f32 0.0, %v1563
      %1565 = vmatmul.bf16.gmra.mxu0 %v1025
      %v1566 = vpop.f32.mrf.mxu0
      %v1567 = vadd.f32 0.0, %v1566
      %v1568 = vpop.f32.mrf.mxu0
      %v1569 = vadd.f32 0.0, %v1568
      %1570 = vmatmul.bf16.gmra.mxu0 %v1032
      %v1571 = vpop.f32.mrf.mxu0
      %v1572 = vadd.f32 0.0, %v1571
      %v1573 = vpop.f32.mrf.mxu0
      %v1574 = vadd.f32 0.0, %v1573
      %1575 = vdwg.mxu0
      %1576 = vmatpush.bf16.msra.mxu0 %v1390
      %1577 = vmatpush.bf16.msra.mxu0 %v1389
      %1578 = vmatpush.bf16.msra.mxu0 %v1388
      %1579 = vmatpush.bf16.msra.mxu0 %v1387
      %1580 = vmatpush.bf16.msra.mxu0 %v1386
      %1581 = vmatpush.bf16.msra.mxu0 %v1385
      %1582 = vmatpush.bf16.msra.mxu0 %v1384
      %1583 = vmatpush.bf16.msra.mxu0 %v1383
      %1584 = vmatmul.bf16.gmra.mxu0 %v928
      %v1585 = vpop.f32.mrf.mxu0
      %v1586 = vadd.f32 %v1497, %v1585
      %v1587 = vpop.f32.mrf.mxu0
      %v1588 = vadd.f32 %v1499, %v1587
      %1589 = vmatmul.bf16.gmra.mxu0 %v935
      %v1590 = vpop.f32.mrf.mxu0
      %v1591 = vadd.f32 %v1502, %v1590
      %v1592 = vpop.f32.mrf.mxu0
      %v1593 = vadd.f32 %v1504, %v1592
      %1594 = vmatmul.bf16.gmra.mxu0 %v942
      %v1595 = vpop.f32.mrf.mxu0
      %v1596 = vadd.f32 %v1507, %v1595
      %v1597 = vpop.f32.mrf.mxu0
      %v1598 = vadd.f32 %v1509, %v1597
      %1599 = vmatmul.bf16.gmra.mxu0 %v949
      %v1600 = vpop.f32.mrf.mxu0
      %v1601 = vadd.f32 %v1512, %v1600
      %v1602 = vpop.f32.mrf.mxu0
      %v1603 = vadd.f32 %v1514, %v1602
      %1604 = vmatmul.bf16.gmra.mxu0 %v956
      %v1605 = vpop.f32.mrf.mxu0
      %v1606 = vadd.f32 %v1517, %v1605
      %v1607 = vpop.f32.mrf.mxu0
      %v1608 = vadd.f32 %v1519, %v1607
      %1609 = vmatmul.bf16.gmra.mxu0 %v963
      %v1610 = vpop.f32.mrf.mxu0
      %v1611 = vadd.f32 %v1522, %v1610
      %v1612 = vpop.f32.mrf.mxu0
      %v1613 = vadd.f32 %v1524, %v1612
      %1614 = vmatmul.bf16.gmra.mxu0 %v970
      %v1615 = vpop.f32.mrf.mxu0
      %v1616 = vadd.f32 %v1527, %v1615
      %v1617 = vpop.f32.mrf.mxu0
      %v1618 = vadd.f32 %v1529, %v1617
      %1619 = vmatmul.bf16.gmra.mxu0 %v977
      %v1620 = vpop.f32.mrf.mxu0
      %v1621 = vadd.f32 %v1532, %v1620
      %v1622 = vpop.f32.mrf.mxu0
      %v1623 = vadd.f32 %v1534, %v1622
      %1624 = vmatmul.bf16.gmra.mxu0 %v984
      %v1625 = vpop.f32.mrf.mxu0
      %v1626 = vadd.f32 %v1537, %v1625
      %v1627 = vpop.f32.mrf.mxu0
      %v1628 = vadd.f32 %v1539, %v1627
      %1629 = vmatmul.bf16.gmra.mxu0 %v991
      %v1630 = vpop.f32.mrf.mxu0
      %v1631 = vadd.f32 %v1542, %v1630
      %v1632 = vpop.f32.mrf.mxu0
      %v1633 = vadd.f32 %v1544, %v1632
      %1634 = vmatmul.bf16.gmra.mxu0 %v998
      %v1635 = vpop.f32.mrf.mxu0
      %v1636 = vadd.f32 %v1547, %v1635
      %v1637 = vpop.f32.mrf.mxu0
      %v1638 = vadd.f32 %v1549, %v1637
      %1639 = vmatmul.bf16.gmra.mxu0 %v1005
      %v1640 = vpop.f32.mrf.mxu0
      %v1641 = vadd.f32 %v1552, %v1640
      %v1642 = vpop.f32.mrf.mxu0
      %v1643 = vadd.f32 %v1554, %v1642
      %1644 = vmatmul.bf16.gmra.mxu0 %v1012
      %v1645 = vpop.f32.mrf.mxu0
      %v1646 = vadd.f32 %v1557, %v1645
      %v1647 = vpop.f32.mrf.mxu0
      %v1648 = vadd.f32 %v1559, %v1647
      %1649 = vmatmul.bf16.gmra.mxu0 %v1019
      %v1650 = vpop.f32.mrf.mxu0
      %v1651 = vadd.f32 %v1562, %v1650
      %v1652 = vpop.f32.mrf.mxu0
      %v1653 = vadd.f32 %v1564, %v1652
      %1654 = vmatmul.bf16.gmra.mxu0 %v1026
      %v1655 = vpop.f32.mrf.mxu0
      %v1656 = vadd.f32 %v1567, %v1655
      %v1657 = vpop.f32.mrf.mxu0
      %v1658 = vadd.f32 %v1569, %v1657
      %1659 = vmatmul.bf16.gmra.mxu0 %v1033
      %v1660 = vpop.f32.mrf.mxu0
      %v1661 = vadd.f32 %v1572, %v1660
      %v1662 = vpop.f32.mrf.mxu0
      %v1663 = vadd.f32 %v1574, %v1662
      %1664 = vdwg.mxu0
      %1665 = vmatpush.bf16.msra.mxu0 %v1398
      %1666 = vmatpush.bf16.msra.mxu0 %v1397
      %1667 = vmatpush.bf16.msra.mxu0 %v1396
      %1668 = vmatpush.bf16.msra.mxu0 %v1395
      %1669 = vmatpush.bf16.msra.mxu0 %v1394
      %1670 = vmatpush.bf16.msra.mxu0 %v1393
      %1671 = vmatpush.bf16.msra.mxu0 %v1392
      %1672 = vmatpush.bf16.msra.mxu0 %v1391
      %1673 = vmatmul.bf16.gmra.mxu0 %v929
      %v1674 = vpop.f32.mrf.mxu0
      %v1675 = vadd.f32 %v1586, %v1674
      %v1676 = vpop.f32.mrf.mxu0
      %v1677 = vadd.f32 %v1588, %v1676
      %1678 = vmatmul.bf16.gmra.mxu0 %v936
      %v1679 = vpop.f32.mrf.mxu0
      %v1680 = vadd.f32 %v1591, %v1679
      %v1681 = vpop.f32.mrf.mxu0
      %v1682 = vadd.f32 %v1593, %v1681
      %1683 = vmatmul.bf16.gmra.mxu0 %v943
      %v1684 = vpop.f32.mrf.mxu0
      %v1685 = vadd.f32 %v1596, %v1684
      %v1686 = vpop.f32.mrf.mxu0
      %v1687 = vadd.f32 %v1598, %v1686
      %1688 = vmatmul.bf16.gmra.mxu0 %v950
      %v1689 = vpop.f32.mrf.mxu0
      %v1690 = vadd.f32 %v1601, %v1689
      %v1691 = vpop.f32.mrf.mxu0
      %v1692 = vadd.f32 %v1603, %v1691
      %1693 = vmatmul.bf16.gmra.mxu0 %v957
      %v1694 = vpop.f32.mrf.mxu0
      %v1695 = vadd.f32 %v1606, %v1694
      %v1696 = vpop.f32.mrf.mxu0
      %v1697 = vadd.f32 %v1608, %v1696
      %1698 = vmatmul.bf16.gmra.mxu0 %v964
      %v1699 = vpop.f32.mrf.mxu0
      %v1700 = vadd.f32 %v1611, %v1699
      %v1701 = vpop.f32.mrf.mxu0
      %v1702 = vadd.f32 %v1613, %v1701
      %1703 = vmatmul.bf16.gmra.mxu0 %v971
      %v1704 = vpop.f32.mrf.mxu0
      %v1705 = vadd.f32 %v1616, %v1704
      %v1706 = vpop.f32.mrf.mxu0
      %v1707 = vadd.f32 %v1618, %v1706
      %1708 = vmatmul.bf16.gmra.mxu0 %v978
      %v1709 = vpop.f32.mrf.mxu0
      %v1710 = vadd.f32 %v1621, %v1709
      %v1711 = vpop.f32.mrf.mxu0
      %v1712 = vadd.f32 %v1623, %v1711
      %1713 = vmatmul.bf16.gmra.mxu0 %v985
      %v1714 = vpop.f32.mrf.mxu0
      %v1715 = vadd.f32 %v1626, %v1714
      %v1716 = vpop.f32.mrf.mxu0
      %v1717 = vadd.f32 %v1628, %v1716
      %1718 = vmatmul.bf16.gmra.mxu0 %v992
      %v1719 = vpop.f32.mrf.mxu0
      %v1720 = vadd.f32 %v1631, %v1719
      %v1721 = vpop.f32.mrf.mxu0
      %v1722 = vadd.f32 %v1633, %v1721
      %1723 = vmatmul.bf16.gmra.mxu0 %v999
      %v1724 = vpop.f32.mrf.mxu0
      %v1725 = vadd.f32 %v1636, %v1724
      %v1726 = vpop.f32.mrf.mxu0
      %v1727 = vadd.f32 %v1638, %v1726
      %1728 = vmatmul.bf16.gmra.mxu0 %v1006
      %v1729 = vpop.f32.mrf.mxu0
      %v1730 = vadd.f32 %v1641, %v1729
      %v1731 = vpop.f32.mrf.mxu0
      %v1732 = vadd.f32 %v1643, %v1731
      %1733 = vmatmul.bf16.gmra.mxu0 %v1013
      %v1734 = vpop.f32.mrf.mxu0
      %v1735 = vadd.f32 %v1646, %v1734
      %v1736 = vpop.f32.mrf.mxu0
      %v1737 = vadd.f32 %v1648, %v1736
      %1738 = vmatmul.bf16.gmra.mxu0 %v1020
      %v1739 = vpop.f32.mrf.mxu0
      %v1740 = vadd.f32 %v1651, %v1739
      %v1741 = vpop.f32.mrf.mxu0
      %v1742 = vadd.f32 %v1653, %v1741
      %1743 = vmatmul.bf16.gmra.mxu0 %v1027
      %v1744 = vpop.f32.mrf.mxu0
      %v1745 = vadd.f32 %v1656, %v1744
      %v1746 = vpop.f32.mrf.mxu0
      %v1747 = vadd.f32 %v1658, %v1746
      %1748 = vmatmul.bf16.gmra.mxu0 %v1034
      %v1749 = vpop.f32.mrf.mxu0
      %v1750 = vadd.f32 %v1661, %v1749
      %v1751 = vpop.f32.mrf.mxu0
      %v1752 = vadd.f32 %v1663, %v1751
      %1753 = vdwg.mxu0
      %1754 = vmatpush.bf16.msra.mxu0 %v1406
      %1755 = vmatpush.bf16.msra.mxu0 %v1405
      %1756 = vmatpush.bf16.msra.mxu0 %v1404
      %1757 = vmatpush.bf16.msra.mxu0 %v1403
      %1758 = vmatpush.bf16.msra.mxu0 %v1402
      %1759 = vmatpush.bf16.msra.mxu0 %v1401
      %1760 = vmatpush.bf16.msra.mxu0 %v1400
      %1761 = vmatpush.bf16.msra.mxu0 %v1399
      %1762 = vmatmul.bf16.gmra.mxu0 %v930
      %v1763 = vpop.f32.mrf.mxu0
      %v1764 = vadd.f32 %v1675, %v1763
      %v1765 = vpop.f32.mrf.mxu0
      %v1766 = vadd.f32 %v1677, %v1765
      %1767 = vmatmul.bf16.gmra.mxu0 %v937
      %v1768 = vpop.f32.mrf.mxu0
      %v1769 = vadd.f32 %v1680, %v1768
      %v1770 = vpop.f32.mrf.mxu0
      %v1771 = vadd.f32 %v1682, %v1770
      %1772 = vmatmul.bf16.gmra.mxu0 %v944
      %v1773 = vpop.f32.mrf.mxu0
      %v1774 = vadd.f32 %v1685, %v1773
      %v1775 = vpop.f32.mrf.mxu0
      %v1776 = vadd.f32 %v1687, %v1775
      %1777 = vmatmul.bf16.gmra.mxu0 %v951
      %v1778 = vpop.f32.mrf.mxu0
      %v1779 = vadd.f32 %v1690, %v1778
      %v1780 = vpop.f32.mrf.mxu0
      %v1781 = vadd.f32 %v1692, %v1780
      %1782 = vmatmul.bf16.gmra.mxu0 %v958
      %v1783 = vpop.f32.mrf.mxu0
      %v1784 = vadd.f32 %v1695, %v1783
      %v1785 = vpop.f32.mrf.mxu0
      %v1786 = vadd.f32 %v1697, %v1785
      %1787 = vmatmul.bf16.gmra.mxu0 %v965
      %v1788 = vpop.f32.mrf.mxu0
      %v1789 = vadd.f32 %v1700, %v1788
      %v1790 = vpop.f32.mrf.mxu0
      %v1791 = vadd.f32 %v1702, %v1790
      %1792 = vmatmul.bf16.gmra.mxu0 %v972
      %v1793 = vpop.f32.mrf.mxu0
      %v1794 = vadd.f32 %v1705, %v1793
      %v1795 = vpop.f32.mrf.mxu0
      %v1796 = vadd.f32 %v1707, %v1795
      %1797 = vmatmul.bf16.gmra.mxu0 %v979
      %v1798 = vpop.f32.mrf.mxu0
      %v1799 = vadd.f32 %v1710, %v1798
      %v1800 = vpop.f32.mrf.mxu0
      %v1801 = vadd.f32 %v1712, %v1800
      %1802 = vmatmul.bf16.gmra.mxu0 %v986
      %v1803 = vpop.f32.mrf.mxu0
      %v1804 = vadd.f32 %v1715, %v1803
      %v1805 = vpop.f32.mrf.mxu0
      %v1806 = vadd.f32 %v1717, %v1805
      %1807 = vmatmul.bf16.gmra.mxu0 %v993
      %v1808 = vpop.f32.mrf.mxu0
      %v1809 = vadd.f32 %v1720, %v1808
      %v1810 = vpop.f32.mrf.mxu0
      %v1811 = vadd.f32 %v1722, %v1810
      %1812 = vmatmul.bf16.gmra.mxu0 %v1000
      %v1813 = vpop.f32.mrf.mxu0
      %v1814 = vadd.f32 %v1725, %v1813
      %v1815 = vpop.f32.mrf.mxu0
      %v1816 = vadd.f32 %v1727, %v1815
      %1817 = vmatmul.bf16.gmra.mxu0 %v1007
      %v1818 = vpop.f32.mrf.mxu0
      %v1819 = vadd.f32 %v1730, %v1818
      %v1820 = vpop.f32.mrf.mxu0
      %v1821 = vadd.f32 %v1732, %v1820
      %1822 = vmatmul.bf16.gmra.mxu0 %v1014
      %v1823 = vpop.f32.mrf.mxu0
      %v1824 = vadd.f32 %v1735, %v1823
      %v1825 = vpop.f32.mrf.mxu0
      %v1826 = vadd.f32 %v1737, %v1825
      %1827 = vmatmul.bf16.gmra.mxu0 %v1021
      %v1828 = vpop.f32.mrf.mxu0
      %v1829 = vadd.f32 %v1740, %v1828
      %v1830 = vpop.f32.mrf.mxu0
      %v1831 = vadd.f32 %v1742, %v1830
      %1832 = vmatmul.bf16.gmra.mxu0 %v1028
      %v1833 = vpop.f32.mrf.mxu0
      %v1834 = vadd.f32 %v1745, %v1833
      %v1835 = vpop.f32.mrf.mxu0
      %v1836 = vadd.f32 %v1747, %v1835
      %1837 = vmatmul.bf16.gmra.mxu0 %v1035
      %v1838 = vpop.f32.mrf.mxu0
      %v1839 = vadd.f32 %v1750, %v1838
      %v1840 = vpop.f32.mrf.mxu0
      %v1841 = vadd.f32 %v1752, %v1840
      %1842 = vdwg.mxu0
      %1843 = vmatpush.bf16.msra.mxu0 %v1414
      %1844 = vmatpush.bf16.msra.mxu0 %v1413
      %1845 = vmatpush.bf16.msra.mxu0 %v1412
      %1846 = vmatpush.bf16.msra.mxu0 %v1411
      %1847 = vmatpush.bf16.msra.mxu0 %v1410
      %1848 = vmatpush.bf16.msra.mxu0 %v1409
      %1849 = vmatpush.bf16.msra.mxu0 %v1408
      %1850 = vmatpush.bf16.msra.mxu0 %v1407
      %1851 = vmatmul.bf16.gmra.mxu0 %v931
      %v1852 = vpop.f32.mrf.mxu0
      %v1853 = vadd.f32 %v1764, %v1852
      %v1854 = vpop.f32.mrf.mxu0
      %v1855 = vadd.f32 %v1766, %v1854
      %1856 = vmatmul.bf16.gmra.mxu0 %v938
      %v1857 = vpop.f32.mrf.mxu0
      %v1858 = vadd.f32 %v1769, %v1857
      %v1859 = vpop.f32.mrf.mxu0
      %v1860 = vadd.f32 %v1771, %v1859
      %1861 = vmatmul.bf16.gmra.mxu0 %v945
      %v1862 = vpop.f32.mrf.mxu0
      %v1863 = vadd.f32 %v1774, %v1862
      %v1864 = vpop.f32.mrf.mxu0
      %v1865 = vadd.f32 %v1776, %v1864
      %1866 = vmatmul.bf16.gmra.mxu0 %v952
      %v1867 = vpop.f32.mrf.mxu0
      %v1868 = vadd.f32 %v1779, %v1867
      %v1869 = vpop.f32.mrf.mxu0
      %v1870 = vadd.f32 %v1781, %v1869
      %1871 = vmatmul.bf16.gmra.mxu0 %v959
      %v1872 = vpop.f32.mrf.mxu0
      %v1873 = vadd.f32 %v1784, %v1872
      %v1874 = vpop.f32.mrf.mxu0
      %v1875 = vadd.f32 %v1786, %v1874
      %1876 = vmatmul.bf16.gmra.mxu0 %v966
      %v1877 = vpop.f32.mrf.mxu0
      %v1878 = vadd.f32 %v1789, %v1877
      %v1879 = vpop.f32.mrf.mxu0
      %v1880 = vadd.f32 %v1791, %v1879
      %1881 = vmatmul.bf16.gmra.mxu0 %v973
      %v1882 = vpop.f32.mrf.mxu0
      %v1883 = vadd.f32 %v1794, %v1882
      %v1884 = vpop.f32.mrf.mxu0
      %v1885 = vadd.f32 %v1796, %v1884
      %1886 = vmatmul.bf16.gmra.mxu0 %v980
      %v1887 = vpop.f32.mrf.mxu0
      %v1888 = vadd.f32 %v1799, %v1887
      %v1889 = vpop.f32.mrf.mxu0
      %v1890 = vadd.f32 %v1801, %v1889
      %1891 = vmatmul.bf16.gmra.mxu0 %v987
      %v1892 = vpop.f32.mrf.mxu0
      %v1893 = vadd.f32 %v1804, %v1892
      %v1894 = vpop.f32.mrf.mxu0
      %v1895 = vadd.f32 %v1806, %v1894
      %1896 = vmatmul.bf16.gmra.mxu0 %v994
      %v1897 = vpop.f32.mrf.mxu0
      %v1898 = vadd.f32 %v1809, %v1897
      %v1899 = vpop.f32.mrf.mxu0
      %v1900 = vadd.f32 %v1811, %v1899
      %1901 = vmatmul.bf16.gmra.mxu0 %v1001
      %v1902 = vpop.f32.mrf.mxu0
      %v1903 = vadd.f32 %v1814, %v1902
      %v1904 = vpop.f32.mrf.mxu0
      %v1905 = vadd.f32 %v1816, %v1904
      %1906 = vmatmul.bf16.gmra.mxu0 %v1008
      %v1907 = vpop.f32.mrf.mxu0
      %v1908 = vadd.f32 %v1819, %v1907
      %v1909 = vpop.f32.mrf.mxu0
      %v1910 = vadd.f32 %v1821, %v1909
      %1911 = vmatmul.bf16.gmra.mxu0 %v1015
      %v1912 = vpop.f32.mrf.mxu0
      %v1913 = vadd.f32 %v1824, %v1912
      %v1914 = vpop.f32.mrf.mxu0
      %v1915 = vadd.f32 %v1826, %v1914
      %1916 = vmatmul.bf16.gmra.mxu0 %v1022
      %v1917 = vpop.f32.mrf.mxu0
      %v1918 = vadd.f32 %v1829, %v1917
      %v1919 = vpop.f32.mrf.mxu0
      %v1920 = vadd.f32 %v1831, %v1919
      %1921 = vmatmul.bf16.gmra.mxu0 %v1029
      %v1922 = vpop.f32.mrf.mxu0
      %v1923 = vadd.f32 %v1834, %v1922
      %v1924 = vpop.f32.mrf.mxu0
      %v1925 = vadd.f32 %v1836, %v1924
      %1926 = vmatmul.bf16.gmra.mxu0 %v1036
      %v1927 = vpop.f32.mrf.mxu0
      %v1928 = vadd.f32 %v1839, %v1927
      %v1929 = vpop.f32.mrf.mxu0
      %v1930 = vadd.f32 %v1841, %v1929
      %1931 = vdwg.mxu0
      %1932 = vmatpush.bf16.msra.mxu0 %v1422
      %1933 = vmatpush.bf16.msra.mxu0 %v1421
      %1934 = vmatpush.bf16.msra.mxu0 %v1420
      %1935 = vmatpush.bf16.msra.mxu0 %v1419
      %1936 = vmatpush.bf16.msra.mxu0 %v1418
      %1937 = vmatpush.bf16.msra.mxu0 %v1417
      %1938 = vmatpush.bf16.msra.mxu0 %v1416
      %1939 = vmatpush.bf16.msra.mxu0 %v1415
      %1940 = vmatmul.bf16.gmra.mxu0 %v932
      %v1941 = vpop.f32.mrf.mxu0
      %v1942 = vadd.f32 %v1853, %v1941
      %v1943 = vpop.f32.mrf.mxu0
      %v1944 = vadd.f32 %v1855, %v1943
      %1945 = vmatmul.bf16.gmra.mxu0 %v939
      %v1946 = vpop.f32.mrf.mxu0
      %v1947 = vadd.f32 %v1858, %v1946
      %v1948 = vpop.f32.mrf.mxu0
      %v1949 = vadd.f32 %v1860, %v1948
      %1950 = vmatmul.bf16.gmra.mxu0 %v946
      %v1951 = vpop.f32.mrf.mxu0
      %v1952 = vadd.f32 %v1863, %v1951
      %v1953 = vpop.f32.mrf.mxu0
      %v1954 = vadd.f32 %v1865, %v1953
      %1955 = vmatmul.bf16.gmra.mxu0 %v953
      %v1956 = vpop.f32.mrf.mxu0
      %v1957 = vadd.f32 %v1868, %v1956
      %v1958 = vpop.f32.mrf.mxu0
      %v1959 = vadd.f32 %v1870, %v1958
      %1960 = vmatmul.bf16.gmra.mxu0 %v960
      %v1961 = vpop.f32.mrf.mxu0
      %v1962 = vadd.f32 %v1873, %v1961
      %v1963 = vpop.f32.mrf.mxu0
      %v1964 = vadd.f32 %v1875, %v1963
      %1965 = vmatmul.bf16.gmra.mxu0 %v967
      %v1966 = vpop.f32.mrf.mxu0
      %v1967 = vadd.f32 %v1878, %v1966
      %v1968 = vpop.f32.mrf.mxu0
      %v1969 = vadd.f32 %v1880, %v1968
      %1970 = vmatmul.bf16.gmra.mxu0 %v974
      %v1971 = vpop.f32.mrf.mxu0
      %v1972 = vadd.f32 %v1883, %v1971
      %v1973 = vpop.f32.mrf.mxu0
      %v1974 = vadd.f32 %v1885, %v1973
      %1975 = vmatmul.bf16.gmra.mxu0 %v981
      %v1976 = vpop.f32.mrf.mxu0
      %v1977 = vadd.f32 %v1888, %v1976
      %v1978 = vpop.f32.mrf.mxu0
      %v1979 = vadd.f32 %v1890, %v1978
      %1980 = vmatmul.bf16.gmra.mxu0 %v988
      %v1981 = vpop.f32.mrf.mxu0
      %v1982 = vadd.f32 %v1893, %v1981
      %v1983 = vpop.f32.mrf.mxu0
      %v1984 = vadd.f32 %v1895, %v1983
      %1985 = vmatmul.bf16.gmra.mxu0 %v995
      %v1986 = vpop.f32.mrf.mxu0
      %v1987 = vadd.f32 %v1898, %v1986
      %v1988 = vpop.f32.mrf.mxu0
      %v1989 = vadd.f32 %v1900, %v1988
      %1990 = vmatmul.bf16.gmra.mxu0 %v1002
      %v1991 = vpop.f32.mrf.mxu0
      %v1992 = vadd.f32 %v1903, %v1991
      %v1993 = vpop.f32.mrf.mxu0
      %v1994 = vadd.f32 %v1905, %v1993
      %1995 = vmatmul.bf16.gmra.mxu0 %v1009
      %v1996 = vpop.f32.mrf.mxu0
      %v1997 = vadd.f32 %v1908, %v1996
      %v1998 = vpop.f32.mrf.mxu0
      %v1999 = vadd.f32 %v1910, %v1998
      %2000 = vmatmul.bf16.gmra.mxu0 %v1016
      %v2001 = vpop.f32.mrf.mxu0
      %v2002 = vadd.f32 %v1913, %v2001
      %v2003 = vpop.f32.mrf.mxu0
      %v2004 = vadd.f32 %v1915, %v2003
      %2005 = vmatmul.bf16.gmra.mxu0 %v1023
      %v2006 = vpop.f32.mrf.mxu0
      %v2007 = vadd.f32 %v1918, %v2006
      %v2008 = vpop.f32.mrf.mxu0
      %v2009 = vadd.f32 %v1920, %v2008
      %2010 = vmatmul.bf16.gmra.mxu0 %v1030
      %v2011 = vpop.f32.mrf.mxu0
      %v2012 = vadd.f32 %v1923, %v2011
      %v2013 = vpop.f32.mrf.mxu0
      %v2014 = vadd.f32 %v1925, %v2013
      %2015 = vmatmul.bf16.gmra.mxu0 %v1037
      %v2016 = vpop.f32.mrf.mxu0
      %v2017 = vadd.f32 %v1928, %v2016
      %v2018 = vpop.f32.mrf.mxu0
      %v2019 = vadd.f32 %v1930, %v2018
      %2020 = vdwg.mxu0
      %2021 = vmatpush.bf16.msra.mxu0 %v1430
      %2022 = vmatpush.bf16.msra.mxu0 %v1429
      %2023 = vmatpush.bf16.msra.mxu0 %v1428
      %2024 = vmatpush.bf16.msra.mxu0 %v1427
      %2025 = vmatpush.bf16.msra.mxu0 %v1426
      %2026 = vmatpush.bf16.msra.mxu0 %v1425
      %2027 = vmatpush.bf16.msra.mxu0 %v1424
      %2028 = vmatpush.bf16.msra.mxu0 %v1423
      %2029 = vmatmul.bf16.gmra.mxu0 %v933
      %v2030 = vpop.f32.mrf.mxu0
      %v2031 = vadd.f32 %v1942, %v2030
      %v2032 = vpop.f32.mrf.mxu0
      %v2033 = vadd.f32 %v1944, %v2032
      %2034 = vmatmul.bf16.gmra.mxu0 %v940
      %v2035 = vpop.f32.mrf.mxu0
      %v2036 = vadd.f32 %v1947, %v2035
      %v2037 = vpop.f32.mrf.mxu0
      %v2038 = vadd.f32 %v1949, %v2037
      %2039 = vmatmul.bf16.gmra.mxu0 %v947
      %v2040 = vpop.f32.mrf.mxu0
      %v2041 = vadd.f32 %v1952, %v2040
      %v2042 = vpop.f32.mrf.mxu0
      %v2043 = vadd.f32 %v1954, %v2042
      %2044 = vmatmul.bf16.gmra.mxu0 %v954
      %v2045 = vpop.f32.mrf.mxu0
      %v2046 = vadd.f32 %v1957, %v2045
      %v2047 = vpop.f32.mrf.mxu0
      %v2048 = vadd.f32 %v1959, %v2047
      %2049 = vmatmul.bf16.gmra.mxu0 %v961
      %v2050 = vpop.f32.mrf.mxu0
      %v2051 = vadd.f32 %v1962, %v2050
      %v2052 = vpop.f32.mrf.mxu0
      %v2053 = vadd.f32 %v1964, %v2052
      %2054 = vmatmul.bf16.gmra.mxu0 %v968
      %v2055 = vpop.f32.mrf.mxu0
      %v2056 = vadd.f32 %v1967, %v2055
      %v2057 = vpop.f32.mrf.mxu0
      %v2058 = vadd.f32 %v1969, %v2057
      %2059 = vmatmul.bf16.gmra.mxu0 %v975
      %v2060 = vpop.f32.mrf.mxu0
      %v2061 = vadd.f32 %v1972, %v2060
      %v2062 = vpop.f32.mrf.mxu0
      %v2063 = vadd.f32 %v1974, %v2062
      %2064 = vmatmul.bf16.gmra.mxu0 %v982
      %v2065 = vpop.f32.mrf.mxu0
      %v2066 = vadd.f32 %v1977, %v2065
      %v2067 = vpop.f32.mrf.mxu0
      %v2068 = vadd.f32 %v1979, %v2067
      %2069 = vmatmul.bf16.gmra.mxu0 %v989
      %v2070 = vpop.f32.mrf.mxu0
      %v2071 = vadd.f32 %v1982, %v2070
      %v2072 = vpop.f32.mrf.mxu0
      %v2073 = vadd.f32 %v1984, %v2072
      %2074 = vmatmul.bf16.gmra.mxu0 %v996
      %v2075 = vpop.f32.mrf.mxu0
      %v2076 = vadd.f32 %v1987, %v2075
      %v2077 = vpop.f32.mrf.mxu0
      %v2078 = vadd.f32 %v1989, %v2077
      %2079 = vmatmul.bf16.gmra.mxu0 %v1003
      %v2080 = vpop.f32.mrf.mxu0
      %v2081 = vadd.f32 %v1992, %v2080
      %v2082 = vpop.f32.mrf.mxu0
      %v2083 = vadd.f32 %v1994, %v2082
      %2084 = vmatmul.bf16.gmra.mxu0 %v1010
      %v2085 = vpop.f32.mrf.mxu0
      %v2086 = vadd.f32 %v1997, %v2085
      %v2087 = vpop.f32.mrf.mxu0
      %v2088 = vadd.f32 %v1999, %v2087
      %2089 = vmatmul.bf16.gmra.mxu0 %v1017
      %v2090 = vpop.f32.mrf.mxu0
      %v2091 = vadd.f32 %v2002, %v2090
      %v2092 = vpop.f32.mrf.mxu0
      %v2093 = vadd.f32 %v2004, %v2092
      %2094 = vmatmul.bf16.gmra.mxu0 %v1024
      %v2095 = vpop.f32.mrf.mxu0
      %v2096 = vadd.f32 %v2007, %v2095
      %v2097 = vpop.f32.mrf.mxu0
      %v2098 = vadd.f32 %v2009, %v2097
      %2099 = vmatmul.bf16.gmra.mxu0 %v1031
      %v2100 = vpop.f32.mrf.mxu0
      %v2101 = vadd.f32 %v2012, %v2100
      %v2102 = vpop.f32.mrf.mxu0
      %v2103 = vadd.f32 %v2014, %v2102
      %2104 = vmatmul.bf16.gmra.mxu0 %v1038
      %v2105 = vpop.f32.mrf.mxu0
      %v2106 = vadd.f32 %v2017, %v2105
      %v2107 = vpop.f32.mrf.mxu0
      %v2108 = vadd.f32 %v2019, %v2107
      %2109 = vdwg.mxu0
      %v2110 = vadd.f32 %v303, %v2031
      %v2111 = vadd.f32 %v304, %v2033
      %v2112 = vadd.f32 %v305, %v2036
      %v2113 = vadd.f32 %v306, %v2038
      %v2114 = vadd.f32 %v307, %v2041
      %v2115 = vadd.f32 %v308, %v2043
      %v2116 = vadd.f32 %v309, %v2046
      %v2117 = vadd.f32 %v310, %v2048
      %v2118 = vadd.f32 %v311, %v2051
      %v2119 = vadd.f32 %v312, %v2053
      %v2120 = vadd.f32 %v313, %v2056
      %v2121 = vadd.f32 %v314, %v2058
      %v2122 = vadd.f32 %v315, %v2061
      %v2123 = vadd.f32 %v316, %v2063
      %v2124 = vadd.f32 %v317, %v2066
      %v2125 = vadd.f32 %v318, %v2068
      %v2126 = vadd.f32 %v319, %v2071
      %v2127 = vadd.f32 %v320, %v2073
      %v2128 = vadd.f32 %v321, %v2076
      %v2129 = vadd.f32 %v322, %v2078
      %v2130 = vadd.f32 %v323, %v2081
      %v2131 = vadd.f32 %v324, %v2083
      %v2132 = vadd.f32 %v325, %v2086
      %v2133 = vadd.f32 %v326, %v2088
      %v2134 = vadd.f32 %v327, %v2091
      %v2135 = vadd.f32 %v328, %v2093
      %v2136 = vadd.f32 %v329, %v2096
      %v2137 = vadd.f32 %v330, %v2098
      %v2138 = vadd.f32 %v331, %v2101
      %v2139 = vadd.f32 %v332, %v2103
      %v2140 = vadd.f32 %v333, %v2106
      %v2141 = vadd.f32 %v334, %v2108
      %2142 = vst [vmem:[#allocation2] sm:$0xff] %v2110
      %2143 = vst [vmem:[#allocation2 + $0x8] sm:$0xff] %v2111
      %2144 = vst [vmem:[#allocation2 + $0x10] sm:$0xff] %v2112
      %2145 = vst [vmem:[#allocation2 + $0x18] sm:$0xff] %v2113
      %2146 = vst [vmem:[#allocation2 + $0x20] sm:$0xff] %v2114
      %2147 = vst [vmem:[#allocation2 + $0x28] sm:$0xff] %v2115
      %2148 = vst [vmem:[#allocation2 + $0x30] sm:$0xff] %v2116
      %2149 = vst [vmem:[#allocation2 + $0x38] sm:$0xff] %v2117
      %2150 = vst [vmem:[#allocation2 + $0x40] sm:$0xff] %v2118
      %2151 = vst [vmem:[#allocation2 + $0x48] sm:$0xff] %v2119
      %2152 = vst [vmem:[#allocation2 + $0x50] sm:$0xff] %v2120
      %2153 = vst [vmem:[#allocation2 + $0x58] sm:$0xff] %v2121
      %2154 = vst [vmem:[#allocation2 + $0x60] sm:$0xff] %v2122
      %2155 = vst [vmem:[#allocation2 + $0x68] sm:$0xff] %v2123
      %2156 = vst [vmem:[#allocation2 + $0x70] sm:$0xff] %v2124
      %2157 = vst [vmem:[#allocation2 + $0x78] sm:$0xff] %v2125
      %2158 = vst [vmem:[#allocation2 + $0x80] sm:$0xff] %v2126
      %2159 = vst [vmem:[#allocation2 + $0x88] sm:$0xff] %v2127
      %2160 = vst [vmem:[#allocation2 + $0x90] sm:$0xff] %v2128
      %2161 = vst [vmem:[#allocation2 + $0x98] sm:$0xff] %v2129
      %2162 = vst [vmem:[#allocation2 + $0xa0] sm:$0xff] %v2130
      %2163 = vst [vmem:[#allocation2 + $0xa8] sm:$0xff] %v2131
      %2164 = vst [vmem:[#allocation2 + $0xb0] sm:$0xff] %v2132
      %2165 = vst [vmem:[#allocation2 + $0xb8] sm:$0xff] %v2133
      %2166 = vst [vmem:[#allocation2 + $0xc0] sm:$0xff] %v2134
      %2167 = vst [vmem:[#allocation2 + $0xc8] sm:$0xff] %v2135
      %2168 = vst [vmem:[#allocation2 + $0xd0] sm:$0xff] %v2136
      %2169 = vst [vmem:[#allocation2 + $0xd8] sm:$0xff] %v2137
      %2170 = vst [vmem:[#allocation2 + $0xe0] sm:$0xff] %v2138
      %2171 = vst [vmem:[#allocation2 + $0xe8] sm:$0xff] %v2139
      %2172 = vst [vmem:[#allocation2 + $0xf0] sm:$0xff] %v2140
      %2173 = vst [vmem:[#allocation2 + $0xf8] sm:$0xff] %v2141
      // Predicated region
      $region37: #{mnist_cnn_forward.7} parent=31 // pred_check
        %p2174 = pneg %p267
      $region38: #{mnist_cnn_forward.7} parent=31 // pred_check_branch
        %2176 = sbr.rel (%p2174) target = $region40
      $region39: #{mnist_cnn_forward.7} parent=31 // pred_region
        %v2177 = vld [vmem:[#allocation2] sm:$0xff]
        %v2178 = vld [vmem:[#allocation2 + $0x8] sm:$0xff]
        %v2179 = vld [vmem:[#allocation2 + $0x10] sm:$0xff]
        %v2180 = vld [vmem:[#allocation2 + $0x18] sm:$0xff]
        %v2181 = vld [vmem:[#allocation2 + $0x20] sm:$0xff]
        %v2182 = vld [vmem:[#allocation2 + $0x28] sm:$0xff]
        %v2183 = vld [vmem:[#allocation2 + $0x30] sm:$0xff]
        %v2184 = vld [vmem:[#allocation2 + $0x38] sm:$0xff]
        %v2185 = vld [vmem:[#allocation2 + $0x40] sm:$0xff]
        %v2186 = vld [vmem:[#allocation2 + $0x48] sm:$0xff]
        %v2187 = vld [vmem:[#allocation2 + $0x50] sm:$0xff]
        %v2188 = vld [vmem:[#allocation2 + $0x58] sm:$0xff]
        %v2189 = vld [vmem:[#allocation2 + $0x60] sm:$0xff]
        %v2190 = vld [vmem:[#allocation2 + $0x68] sm:$0xff]
        %v2191 = vld [vmem:[#allocation2 + $0x70] sm:$0xff]
        %v2192 = vld [vmem:[#allocation2 + $0x78] sm:$0xff]
        %v2193 = vld [vmem:[#allocation2 + $0x80] sm:$0xff]
        %v2194 = vld [vmem:[#allocation2 + $0x88] sm:$0xff]
        %v2195 = vld [vmem:[#allocation2 + $0x90] sm:$0xff]
        %v2196 = vld [vmem:[#allocation2 + $0x98] sm:$0xff]
        %v2197 = vld [vmem:[#allocation2 + $0xa0] sm:$0xff]
        %v2198 = vld [vmem:[#allocation2 + $0xa8] sm:$0xff]
        %v2199 = vld [vmem:[#allocation2 + $0xb0] sm:$0xff]
        %v2200 = vld [vmem:[#allocation2 + $0xb8] sm:$0xff]
        %v2201 = vld [vmem:[#allocation2 + $0xc0] sm:$0xff]
        %v2202 = vld [vmem:[#allocation2 + $0xc8] sm:$0xff]
        %v2203 = vld [vmem:[#allocation2 + $0xd0] sm:$0xff]
        %v2204 = vld [vmem:[#allocation2 + $0xd8] sm:$0xff]
        %v2205 = vld [vmem:[#allocation2 + $0xe0] sm:$0xff]
        %v2206 = vld [vmem:[#allocation2 + $0xe8] sm:$0xff]
        %v2207 = vld [vmem:[#allocation2 + $0xf0] sm:$0xff]
        %v2208 = vld [vmem:[#allocation2 + $0xf8] sm:$0xff]
        %v2209 = vld [vmem:[%s257] sm:$0x1]
        %v2211 = vperm.slane %v2209, 0
        %v2213 = vadd.f32 %v2177, %v2211
        %v2214 = vadd.f32 %v2178, %v2211
        %v2215 = vadd.f32 %v2179, %v2211
        %v2216 = vadd.f32 %v2180, %v2211
        %v2217 = vadd.f32 %v2181, %v2211
        %v2218 = vadd.f32 %v2182, %v2211
        %v2219 = vadd.f32 %v2183, %v2211
        %v2220 = vadd.f32 %v2184, %v2211
        %v2221 = vadd.f32 %v2185, %v2211
        %v2222 = vadd.f32 %v2186, %v2211
        %v2223 = vadd.f32 %v2187, %v2211
        %v2224 = vadd.f32 %v2188, %v2211
        %v2225 = vadd.f32 %v2189, %v2211
        %v2226 = vadd.f32 %v2190, %v2211
        %v2227 = vadd.f32 %v2191, %v2211
        %v2228 = vadd.f32 %v2192, %v2211
        %v2229 = vadd.f32 %v2193, %v2211
        %v2230 = vadd.f32 %v2194, %v2211
        %v2231 = vadd.f32 %v2195, %v2211
        %v2232 = vadd.f32 %v2196, %v2211
        %v2233 = vadd.f32 %v2197, %v2211
        %v2234 = vadd.f32 %v2198, %v2211
        %v2235 = vadd.f32 %v2199, %v2211
        %v2236 = vadd.f32 %v2200, %v2211
        %v2237 = vadd.f32 %v2201, %v2211
        %v2238 = vadd.f32 %v2202, %v2211
        %v2239 = vadd.f32 %v2203, %v2211
        %v2240 = vadd.f32 %v2204, %v2211
        %v2241 = vadd.f32 %v2205, %v2211
        %v2242 = vadd.f32 %v2206, %v2211
        %v2243 = vadd.f32 %v2207, %v2211
        %v2244 = vadd.f32 %v2208, %v2211
        %v2245 = vmax.f32 %v2213, 0.0
        %v2246 = vmax.f32 %v2214, 0.0
        %v2247 = vmax.f32 %v2215, 0.0
        %v2248 = vmax.f32 %v2216, 0.0
        %v2249 = vmax.f32 %v2217, 0.0
        %v2250 = vmax.f32 %v2218, 0.0
        %v2251 = vmax.f32 %v2219, 0.0
        %v2252 = vmax.f32 %v2220, 0.0
        %v2253 = vmax.f32 %v2221, 0.0
        %v2254 = vmax.f32 %v2222, 0.0
        %v2255 = vmax.f32 %v2223, 0.0
        %v2256 = vmax.f32 %v2224, 0.0
        %v2257 = vmax.f32 %v2225, 0.0
        %v2258 = vmax.f32 %v2226, 0.0
        %v2259 = vmax.f32 %v2227, 0.0
        %v2260 = vmax.f32 %v2228, 0.0
        %v2261 = vmax.f32 %v2229, 0.0
        %v2262 = vmax.f32 %v2230, 0.0
        %v2263 = vmax.f32 %v2231, 0.0
        %v2264 = vmax.f32 %v2232, 0.0
        %v2265 = vmax.f32 %v2233, 0.0
        %v2266 = vmax.f32 %v2234, 0.0
        %v2267 = vmax.f32 %v2235, 0.0
        %v2268 = vmax.f32 %v2236, 0.0
        %v2269 = vmax.f32 %v2237, 0.0
        %v2270 = vmax.f32 %v2238, 0.0
        %v2271 = vmax.f32 %v2239, 0.0
        %v2272 = vmax.f32 %v2240, 0.0
        %v2273 = vmax.f32 %v2241, 0.0
        %v2274 = vmax.f32 %v2242, 0.0
        %v2275 = vmax.f32 %v2243, 0.0
        %v2276 = vmax.f32 %v2244, 0.0
        %2277 = vst [vmem:[%s265] sm:$0xff] %v2245
        %2278 = vst [vmem:[%s265 + $0x8] sm:$0xff] %v2246
        %2279 = vst [vmem:[%s265 + $0x10] sm:$0xff] %v2247
        %2280 = vst [vmem:[%s265 + $0x18] sm:$0xff] %v2248
        %2281 = vst [vmem:[%s265 + $0x20] sm:$0xff] %v2249
        %2282 = vst [vmem:[%s265 + $0x28] sm:$0xff] %v2250
        %2283 = vst [vmem:[%s265 + $0x30] sm:$0xff] %v2251
        %2284 = vst [vmem:[%s265 + $0x38] sm:$0xff] %v2252
        %2285 = vst [vmem:[%s265 + $0x40] sm:$0xff] %v2253
        %2286 = vst [vmem:[%s265 + $0x48] sm:$0xff] %v2254
        %2287 = vst [vmem:[%s265 + $0x50] sm:$0xff] %v2255
        %2288 = vst [vmem:[%s265 + $0x58] sm:$0xff] %v2256
        %2289 = vst [vmem:[%s265 + $0x60] sm:$0xff] %v2257
        %2290 = vst [vmem:[%s265 + $0x68] sm:$0xff] %v2258
        %2291 = vst [vmem:[%s265 + $0x70] sm:$0xff] %v2259
        %2292 = vst [vmem:[%s265 + $0x78] sm:$0xff] %v2260
        %2293 = vst [vmem:[%s265 + $0x80] sm:$0xff] %v2261
        %2294 = vst [vmem:[%s265 + $0x88] sm:$0xff] %v2262
        %2295 = vst [vmem:[%s265 + $0x90] sm:$0xff] %v2263
        %2296 = vst [vmem:[%s265 + $0x98] sm:$0xff] %v2264
        %2297 = vst [vmem:[%s265 + $0xa0] sm:$0xff] %v2265
        %2298 = vst [vmem:[%s265 + $0xa8] sm:$0xff] %v2266
        %2299 = vst [vmem:[%s265 + $0xb0] sm:$0xff] %v2267
        %2300 = vst [vmem:[%s265 + $0xb8] sm:$0xff] %v2268
        %2301 = vst [vmem:[%s265 + $0xc0] sm:$0xff] %v2269
        %2302 = vst [vmem:[%s265 + $0xc8] sm:$0xff] %v2270
        %2303 = vst [vmem:[%s265 + $0xd0] sm:$0xff] %v2271
        %2304 = vst [vmem:[%s265 + $0xd8] sm:$0xff] %v2272
        %2305 = vst [vmem:[%s265 + $0xe0] sm:$0xff] %v2273
        %2306 = vst [vmem:[%s265 + $0xe8] sm:$0xff] %v2274
        %2307 = vst [vmem:[%s265 + $0xf0] sm:$0xff] %v2275
        %2308 = vst [vmem:[%s265 + $0xf8] sm:$0xff] %v2276
      $region40: #{mnist_cnn_forward.7} parent=31 // pred_fallthru
        _
      %s2309 = smul.u32 32, %s19
      %p2310 = scmp.lt.s32.totalorder %s2309, 63
      %s2311 = scalar_select %p2310, %s2309, 63
      %p2312 = scmp.lt.s32.totalorder %s20, 0
      %s2313 = scalar_select %p2312, %s20, 0
      %s2314 = sadd.s32 %s2313, %s2311
      %s2315 = smul.addr %s2314, 8
      %s2316 = scalar_lea.vmem %s3, %s2315
      // Predicated region
      $region41: #{mnist_cnn_forward.7} parent=31 // pred_check
        %p2317 = pneg %p135
      $region42: #{mnist_cnn_forward.7} parent=31 // pred_check_branch
        %2319 = sbr.rel (%p2317) target = $region44
      $region43: #{mnist_cnn_forward.7} parent=31 // pred_region
        %s2320 = smul.u32 32, %s19
      $region44: #{mnist_cnn_forward.7} parent=31 // pred_fallthru
        _
    $region32: #{mnist_cnn_forward.7} parent=5 // pred_fallthru
      _
    %p2321 = scmp.le.s32.totalorder 2, %s9
    // Predicated region
    $region45: #{mnist_cnn_forward.7} parent=5 // pred_check
      %p2322 = pneg %p2321
    $region46: #{mnist_cnn_forward.7} parent=5 // pred_check_branch
      %2324 = sbr.rel (%p2322) target = $region48
    $region47: #{mnist_cnn_forward.7} parent=5 // pred_region
      %s2325 = ssub.s32 %s9, 2
      // Predicated region
      $region49: #{mnist_cnn_forward.7} parent=47 // pred_check
        %p2326 = pneg %p141
      $region50: #{mnist_cnn_forward.7} parent=47 // pred_check_branch
        %2328 = sbr.rel (%p2326) target = $region52
      $region51: #{mnist_cnn_forward.7} parent=47 // pred_region
        %s2329 = smul.u32 32, %s22
        %p2330 = scmp.lt.s32.totalorder %s2329, 63
        %s2331 = scalar_select %p2330, %s2329, 63
        %p2332 = scmp.lt.s32.totalorder %s23, 0
        %s2333 = scalar_select %p2332, %s23, 0
        %s2334 = sadd.s32 %s2333, %s2331
        %s2335 = smul.addr %s2334, 8
        %s2336 = scalar_lea.vmem %s3, %s2335
      $region52: #{mnist_cnn_forward.7} parent=47 // pred_fallthru
        _
    $region48: #{mnist_cnn_forward.7} parent=5 // pred_fallthru
      _
  $region6: #{mnist_cnn_forward.7} parent=0 // loop_footer
    %s13 = sadd.s32 1, %s9
  $region7: #{mnist_cnn_forward.7} parent=0 // loop_footer_branch
    %8 = sbr.rel target = $region3
  $region8: #{mnist_cnn_forward.7} parent=0 // loop_exit
    _

// kernel: mnist_cnn_forward.9
$region0: #{mnist_cnn_forward.9}
  #allocation0 [shape = 'u32[]', space=smem, size = 0x4, offset = 0x4, fixed_abs, tag = 'smem constant byte address 0x4 - core index']
  #allocation1 [shape = 'u32[72,128]{1,0:T(1,128)}', space=vmem, size = 0x9000, scoped, tag = 'internal scratch']
  #allocation2 [shape = 'f32[16,512]{1,0:T(8,128)}', space=vmem, size = 0x8000, scoped, tag = 'scratch operand']
  %s0 = inlined_call_operand.vmem [shape: bf16[16,3584], index: 0, kind: input, shape index: {}]
  %s1 = inlined_call_operand.vmem [shape: bf16[3584,512], index: 1, kind: input, shape index: {}]
  %s2 = inlined_call_operand.vmem [shape: f32[1,512], index: 2, kind: input, shape index: {}]
  %s3 = inlined_call_operand.vmem [shape: bf16[512,128], index: 3, kind: input, shape index: {}]
  %s4 = inlined_call_operand.vmem [shape: f32[1,128], index: 4, kind: input, shape index: {}]
  %s5 = inlined_call_operand.vmem [shape: f32[16,128], index: 5, kind: output, shape index: {}]
  %s6 = sld [smem:[#allocation0]]
  $region84: #{mnist_cnn_forward.9} parent=0
    _
  %s8 = ssub.s32 1, %s6
  %s9 = scalar_select 0, %s8, %s6
  $region1: #{mnist_cnn_forward.9} parent=0
    #allocation3 [shape = 'u8[32768]{0}', space=vmem, size = 0x8000, scoped, tag = 'input window, operand 0']
    loop: start=0, step=1, limit=9
    $region2: #{mnist_cnn_forward.9} parent=1 // loop_pre_header
      _
    $region3: #{mnist_cnn_forward.9} parent=1 // loop_header
      %s11 = sphi 0, %s15
      %p12 = scmp.ge.s32.totalorder %s11, 9
      %s18 = sphi 0, %s30
      %s19 = sphi 0, %s26
      %s20 = sphi 0, %s18
      %s21 = sphi 0, %s19
      %s22 = sphi 0, %s20
      %s23 = sphi 0, %s21
      %s35 = sphi 0, %s37
      %s38 = sphi 0, %s35
      %s39 = sphi 0, %s38
      %s55 = sphi 0, %s39
      %s61 = sphi 0, %s63
      %s64 = sphi 0, %s61
      %s65 = sphi 0, %s64
      %s81 = sphi 0, %s65
      %s85 = sphi 0, %s85
      %s87 = sphi 0, %s85
      %s88 = sphi 0, %s87
      %s102 = sphi 0, %s88
      %s106 = sphi 0, %s106
      %s108 = sphi 0, %s106
      %s109 = sphi 0, %s108
      %s123 = sphi 0, %s109
      %s127 = sphi 0, %s127
      %s129 = sphi 0, %s127
      %s130 = sphi 0, %s129
      %s144 = sphi 0, %s130
      %s150 = sphi 0, %s152
      %s153 = sphi 0, %s150
      %s154 = sphi 0, %s153
      %s170 = sphi 0, %s154
    $region4: #{mnist_cnn_forward.9} parent=1 // loop_header_branch
      %14 = sbr.rel (%p12) target = $region8
    $region5: #{mnist_cnn_forward.9} parent=1 // loop_body
      %s16 = ssub.s32 %s11, 1
      %s17 = ssub.s32 %s11, 2
      %s24 = sadd.s32 1, %s19
      %p25 = scmp.ge.s32.totalorder %s24, 7
      %s26 = scalar_select %p25, 0, %s24
      %s27 = sadd.s32 1, %s18
      %s28 = scalar_select %p25, %s27, %s18
      %p29 = scmp.ge.s32.totalorder %s28, 1
      %s30 = scalar_select %p29, 0, %s28
      %s31 = ssub.s32 %s18, %s30
      %s32 = ssub.s32 %s19, %s26
      %s33 = sor.u32 %s31, %s32
      %p34 = scmp.eq.s32.totalorder %s33, 0
      %s36 = sadd.s32 %s35, 1
      %s37 = scalar_select %p34, %s35, %s36
      %p40 = pneg %p34
      %p41 = scmp.eq.s32.totalorder %s11, 6
      %p42 = por %p40, %p41
      %p43 = scmp.ne.s32.totalorder %s35, %s38
      %p44 = scmp.eq.s32.totalorder %s11, 0
      %p45 = por %p43, %p44
      %p46 = scmp.ne.s32.totalorder %s35, %s38
      %p47 = scmp.eq.s32.totalorder %s16, 6
      %p48 = por %p46, %p47
      %p49 = scmp.ne.s32.totalorder %s38, %s39
      %p50 = scmp.eq.s32.totalorder %s16, 0
      %p51 = por %p49, %p50
      %p52 = scmp.ne.s32.totalorder %s38, %s39
      %p53 = scmp.eq.s32.totalorder %s17, 6
      %p54 = por %p52, %p53
      %p56 = scmp.ne.s32.totalorder %s39, %s55
      %p57 = scmp.eq.s32.totalorder %s17, 0
      %p58 = por %p56, %p57
      %s59 = ssub.s32 %s19, %s26
      %p60 = scmp.eq.s32.totalorder %s59, 0
      %s62 = sadd.s32 %s61, 1
      %s63 = scalar_select %p60, %s61, %s62
      %p66 = pneg %p60
      %p67 = scmp.eq.s32.totalorder %s11, 6
      %p68 = por %p66, %p67
      %p69 = scmp.ne.s32.totalorder %s61, %s64
      %p70 = scmp.eq.s32.totalorder %s11, 0
      %p71 = por %p69, %p70
      %p72 = scmp.ne.s32.totalorder %s61, %s64
      %p73 = scmp.eq.s32.totalorder %s16, 6
      %p74 = por %p72, %p73
      %p75 = scmp.ne.s32.totalorder %s64, %s65
      %p76 = scmp.eq.s32.totalorder %s16, 0
      %p77 = por %p75, %p76
      %p78 = scmp.ne.s32.totalorder %s64, %s65
      %p79 = scmp.eq.s32.totalorder %s17, 6
      %p80 = por %p78, %p79
      %p82 = scmp.ne.s32.totalorder %s65, %s81
      %p83 = scmp.eq.s32.totalorder %s17, 0
      %p84 = por %p82, %p83
      %s86 = sadd.s32 %s85, 1
      %p89 = scmp.eq.s32.totalorder %s11, 6
      %p90 = scmp.ne.s32.totalorder %s85, %s87
      %p91 = scmp.eq.s32.totalorder %s11, 0
      %p92 = por %p90, %p91
      %p93 = scmp.ne.s32.totalorder %s85, %s87
      %p94 = scmp.eq.s32.totalorder %s16, 6
      %p95 = por %p93, %p94
      %p96 = scmp.ne.s32.totalorder %s87, %s88
      %p97 = scmp.eq.s32.totalorder %s16, 0
      %p98 = por %p96, %p97
      %p99 = scmp.ne.s32.totalorder %s87, %s88
      %p100 = scmp.eq.s32.totalorder %s17, 6
      %p101 = por %p99, %p100
      %p103 = scmp.ne.s32.totalorder %s88, %s102
      %p104 = scmp.eq.s32.totalorder %s17, 0
      %p105 = por %p103, %p104
      %s107 = sadd.s32 %s106, 1
      %p110 = scmp.eq.s32.totalorder %s11, 6
      %p111 = scmp.ne.s32.totalorder %s106, %s108
      %p112 = scmp.eq.s32.totalorder %s11, 0
      %p113 = por %p111, %p112
      %p114 = scmp.ne.s32.totalorder %s106, %s108
      %p115 = scmp.eq.s32.totalorder %s16, 6
      %p116 = por %p114, %p115
      %p117 = scmp.ne.s32.totalorder %s108, %s109
      %p118 = scmp.eq.s32.totalorder %s16, 0
      %p119 = por %p117, %p118
      %p120 = scmp.ne.s32.totalorder %s108, %s109
      %p121 = scmp.eq.s32.totalorder %s17, 6
      %p122 = por %p120, %p121
      %p124 = scmp.ne.s32.totalorder %s109, %s123
      %p125 = scmp.eq.s32.totalorder %s17, 0
      %p126 = por %p124, %p125
      %s128 = sadd.s32 %s127, 1
      %p131 = scmp.eq.s32.totalorder %s11, 6
      %p132 = scmp.ne.s32.totalorder %s127, %s129
      %p133 = scmp.eq.s32.totalorder %s11, 0
      %p134 = por %p132, %p133
      %p135 = scmp.ne.s32.totalorder %s127, %s129
      %p136 = scmp.eq.s32.totalorder %s16, 6
      %p137 = por %p135, %p136
      %p138 = scmp.ne.s32.totalorder %s129, %s130
      %p139 = scmp.eq.s32.totalorder %s16, 0
      %p140 = por %p138, %p139
      %p141 = scmp.ne.s32.totalorder %s129, %s130
      %p142 = scmp.eq.s32.totalorder %s17, 6
      %p143 = por %p141, %p142
      %p145 = scmp.ne.s32.totalorder %s130, %s144
      %p146 = scmp.eq.s32.totalorder %s17, 0
      %p147 = por %p145, %p146
      %s148 = ssub.s32 %s18, %s30
      %p149 = scmp.eq.s32.totalorder %s148, 0
      %s151 = sadd.s32 %s150, 1
      %s152 = scalar_select %p149, %s150, %s151
      %p155 = pneg %p149
      %p156 = scmp.eq.s32.totalorder %s11, 6
      %p157 = por %p155, %p156
      %p158 = scmp.ne.s32.totalorder %s150, %s153
      %p159 = scmp.eq.s32.totalorder %s11, 0
      %p160 = por %p158, %p159
      %p161 = scmp.ne.s32.totalorder %s150, %s153
      %p162 = scmp.eq.s32.totalorder %s16, 6
      %p163 = por %p161, %p162
      %p164 = scmp.ne.s32.totalorder %s153, %s154
      %p165 = scmp.eq.s32.totalorder %s16, 0
      %p166 = por %p164, %p165
      %p167 = scmp.ne.s32.totalorder %s153, %s154
      %p168 = scmp.eq.s32.totalorder %s17, 6
      %p169 = por %p167, %p168
      %p171 = scmp.ne.s32.totalorder %s154, %s170
      %p172 = scmp.eq.s32.totalorder %s17, 0
      %p173 = por %p171, %p172
      %p174 = scmp.le.s32.totalorder 1, %s11
      %p175 = scmp.lt.s32.totalorder %s11, 8
      %p176 = pnand %p174, %p175
      %p177 = pneg %p176
      // Predicated region
      $region9: #{mnist_cnn_forward.9} parent=5 // pred_check
        _
      $region10: #{mnist_cnn_forward.9} parent=5 // pred_check_branch
        %179 = sbr.rel (%p176) target = $region12
      $region11: #{mnist_cnn_forward.9} parent=5 // pred_region
        %s180 = ssub.s32 %s11, 1
        // Predicated region
        $region13: #{mnist_cnn_forward.9} parent=11 // pred_check
          %p181 = pneg %p98
        $region14: #{mnist_cnn_forward.9} parent=11 // pred_check_branch
          %183 = sbr.rel (%p181) target = $region16
        $region15: #{mnist_cnn_forward.9} parent=11 // pred_region
          _
        $region16: #{mnist_cnn_forward.9} parent=11 // pred_fallthru
          _
        // Predicated region
        $region17: #{mnist_cnn_forward.9} parent=11 // pred_check
          %p184 = pneg %p119
        $region18: #{mnist_cnn_forward.9} parent=11 // pred_check_branch
          %186 = sbr.rel (%p184) target = $region20
        $region19: #{mnist_cnn_forward.9} parent=11 // pred_region
          _
        $region20: #{mnist_cnn_forward.9} parent=11 // pred_fallthru
          _
        // Predicated region
        $region21: #{mnist_cnn_forward.9} parent=11 // pred_check
          %p187 = pneg %p140
        $region22: #{mnist_cnn_forward.9} parent=11 // pred_check_branch
          %189 = sbr.rel (%p187) target = $region24
        $region23: #{mnist_cnn_forward.9} parent=11 // pred_region
          _
        $region24: #{mnist_cnn_forward.9} parent=11 // pred_fallthru
          _
      $region12: #{mnist_cnn_forward.9} parent=5 // pred_fallthru
        _
      %p190 = scmp.lt.s32.totalorder %s11, 7
      // Predicated region
      $region25: #{mnist_cnn_forward.9} parent=5 // pred_check
        %p191 = pneg %p190
      $region26: #{mnist_cnn_forward.9} parent=5 // pred_check_branch
        %193 = sbr.rel (%p191) target = $region28
      $region27: #{mnist_cnn_forward.9} parent=5 // pred_region
        // Predicated region
        $region29: #{mnist_cnn_forward.9} parent=27 // pred_check
          %p194 = pneg %p45
        $region30: #{mnist_cnn_forward.9} parent=27 // pred_check_branch
          %196 = sbr.rel (%p194) target = $region32
        $region31: #{mnist_cnn_forward.9} parent=27 // pred_region
          %s197 = sand.u32 %s35, 1
          %s198 = sand.u32 %s35, 1
          %s199 = smul.addr %s198, 32
          %s200 = scalar_lea.vmem [#allocation3], %s199
          %s201 = smul.u32 2, %s18
          %s202 = smul.u32 4, %s19
          %s203 = smul.addr %s201, 28
          %s204 = sadd.s32 %s202, %s203
          %s205 = smul.addr %s204, 4
          %s206 = scalar_lea.vmem %s0, %s205
          // Predicated region
          $region33: #{mnist_cnn_forward.9} parent=31 // pred_check
            _
          $region34: #{mnist_cnn_forward.9} parent=31 // pred_check_branch
            %208 = sbr.rel (0) target = $region36
          $region35: #{mnist_cnn_forward.9} parent=31 // pred_region
            // Predicated region
            $region37: #{mnist_cnn_forward.9} parent=35 // pred_check
              _
            $region38: #{mnist_cnn_forward.9} parent=35 // pred_check_branch
              %210 = sbr.rel (0) target = $region40
            $region39: #{mnist_cnn_forward.9} parent=35 // pred_region
              loop: start=0, step=1, limit=1
              $region41: #{mnist_cnn_forward.9} parent=39 // loop_pre_header
                _
              $region42: #{mnist_cnn_forward.9} parent=39 // loop_header
                %s212 = sphi 0, %s216
                %p213 = scmp.ge.s32.totalorder %s212, 1
                %s217 = sphi %s206, %s206
                %s218 = sphi %s200, %s200
              $region43: #{mnist_cnn_forward.9} parent=39 // loop_header_branch
                %215 = sbr.rel (%p213) target = $region47
              $region44: #{mnist_cnn_forward.9} parent=39 // loop_body
                %v219 = vld [vmem:[%s217] sm:$0xff]
                %220 = vst [vmem:[%s218] sm:$0xff] %v219
                %v221 = vld [vmem:[%s217 + $0x8] sm:$0xff]
                %222 = vst [vmem:[%s218 + $0x8] sm:$0xff] %v221
                %v223 = vld [vmem:[%s217 + $0x70] sm:$0xff]
                %224 = vst [vmem:[%s218 + $0x10] sm:$0xff] %v223
                %v225 = vld [vmem:[%s217 + $0x78] sm:$0xff]
                %226 = vst [vmem:[%s218 + $0x18] sm:$0xff] %v225
              $region45: #{mnist_cnn_forward.9} parent=39 // loop_footer
                %s216 = sadd.s32 1, %s212
              $region46: #{mnist_cnn_forward.9} parent=39 // loop_footer_branch
                %211 = sbr.rel target = $region42
              $region47: #{mnist_cnn_forward.9} parent=39 // loop_exit
                _
            $region40: #{mnist_cnn_forward.9} parent=35 // pred_fallthru
              _
            // Predicated region
            $region48: #{mnist_cnn_forward.9} parent=35 // pred_check
              _
            $region49: #{mnist_cnn_forward.9} parent=35 // pred_check_branch
              %228 = sbr.rel target = $region51
            $region50: #{mnist_cnn_forward.9} parent=35 // pred_region
              _
            $region51: #{mnist_cnn_forward.9} parent=35 // pred_fallthru
              _
          $region36: #{mnist_cnn_forward.9} parent=31 // pred_fallthru
            _
          %229 = vnop
        $region32: #{mnist_cnn_forward.9} parent=27 // pred_fallthru
          _
        // Predicated region
        $region52: #{mnist_cnn_forward.9} parent=27 // pred_check
          %p230 = pneg %p71
        $region53: #{mnist_cnn_forward.9} parent=27 // pred_check_branch
          %232 = sbr.rel (%p230) target = $region55
        $region54: #{mnist_cnn_forward.9} parent=27 // pred_region
          %s233 = smul.u32 64, %s19
          %p234 = scmp.lt.s32.totalorder %s233, 447
          %s235 = scalar_select %p234, %s233, 447
          %s236 = smul.addr %s235, 4
          %s237 = smul.addr %s236, 4
          %s238 = scalar_lea.vmem %s1, %s237
          %s239 = smul.u32 64, %s19
        $region55: #{mnist_cnn_forward.9} parent=27 // pred_fallthru
          _
      $region28: #{mnist_cnn_forward.9} parent=5 // pred_fallthru
        _
      %p240 = scmp.le.s32.totalorder 1, %s11
      %p241 = scmp.lt.s32.totalorder %s11, 8
      %p242 = pnand %p240, %p241
      %p243 = pneg %p242
      // Predicated region
      $region56: #{mnist_cnn_forward.9} parent=5 // pred_check
        _
      $region57: #{mnist_cnn_forward.9} parent=5 // pred_check_branch
        %245 = sbr.rel (%p242) target = $region59
      $region58: #{mnist_cnn_forward.9} parent=5 // pred_region
        %s246 = ssub.s32 %s11, 1
        %s247 = sand.u32 %s38, 1
        %s248 = sand.u32 %s38, 1
        %s249 = smul.addr %s248, 32
        %s250 = scalar_lea.vmem [#allocation3], %s249
        // Predicated region
        $region60: #{mnist_cnn_forward.9} parent=58 // pred_check
          %p251 = pneg %p51
        $region61: #{mnist_cnn_forward.9} parent=58 // pred_check_branch
          %253 = sbr.rel (%p251) target = $region63
        $region62: #{mnist_cnn_forward.9} parent=58 // pred_region
          _
        $region63: #{mnist_cnn_forward.9} parent=58 // pred_fallthru
          _
        %s254 = sand.u32 %s38, 1
        %s255 = sand.u32 %s38, 1
        %s256 = smul.addr %s255, 32
        %s257 = scalar_lea.vmem [#allocation3], %s256
        %p258 = pneg %p51
        %p259 = pneg %p48
        %s260 = smul.u32 64, %s21
        %p261 = scmp.lt.s32.totalorder %s260, 447
        %s262 = scalar_select %p261, %s260, 447
        %s263 = smul.addr %s262, 4
        %s264 = smul.addr %s263, 4
        %s265 = scalar_lea.vmem %s1, %s264
        %p266 = pneg %p77
        %p267 = pneg %p74
        %p268 = pneg %p98
        %p269 = pneg %p95
        %p270 = pneg %p119
        %p271 = pneg %p116
        %p272 = pneg %p140
        %p273 = pneg %p137
        %p274 = pneg %p166
        %p275 = pneg %p163
        %s276 = smul.u32 2, %s20
        %p277 = scmp.lt.s32.totalorder %s276, 1
        %s278 = scalar_select %p277, %s276, 1
        %s279 = smul.addr %s278, 8
        %s280 = scalar_lea.vmem %s5, %s279
        %s281 = smul.u32 2, %s20
        %s282 = smul.u32 4, %s21
        %s283 = smul.u32 64, %s21
        %p284 = scmp.lt.s32.totalorder %s283, 447
        %s285 = scalar_select %p284, %s283, 447
        %s286 = smul.addr %s285, 4
        %s287 = smul.addr %s286, 4
        %s288 = scalar_lea.vmem %s1, %s287
        %s289 = smul.u32 64, %s21
        %s290 = smul.u32 2, %s20
        %p291 = scmp.lt.s32.totalorder %s290, 1
        %s292 = scalar_select %p291, %s290, 1
        %s293 = smul.addr %s292, 8
        %s294 = scalar_lea.vmem %s5, %s293
        %s295 = smul.u32 2, %s20
        %p296 = scmp.eq.s32.totalorder %s21, 0
        // Predicated region
        $region64: #{mnist_cnn_forward.9} parent=58 // pred_check
          %p297 = pneg %p296
        $region65: #{mnist_cnn_forward.9} parent=58 // pred_check_branch
          %299 = sbr.rel (%p297) target = $region67
        $region66: #{mnist_cnn_forward.9} parent=58 // pred_region
          %300 = vst [vmem:[#allocation2] sm:$0xff] 0.0
          %301 = vst [vmem:[#allocation2 + $0x8] sm:$0xff] 0.0
          %302 = vst [vmem:[#allocation2 + $0x10] sm:$0xff] 0.0
          %303 = vst [vmem:[#allocation2 + $0x18] sm:$0xff] 0.0
          %304 = vst [vmem:[#allocation2 + $0x20] sm:$0xff] 0.0
          %305 = vst [vmem:[#allocation2 + $0x28] sm:$0xff] 0.0
          %306 = vst [vmem:[#allocation2 + $0x30] sm:$0xff] 0.0
          %307 = vst [vmem:[#allocation2 + $0x38] sm:$0xff] 0.0
        $region67: #{mnist_cnn_forward.9} parent=58 // pred_fallthru
          _
        %v308 = vld [vmem:[#allocation2] sm:$0xff]
        %v309 = vld [vmem:[#allocation2 + $0x8] sm:$0xff]
        %v310 = vld [vmem:[#allocation2 + $0x10] sm:$0xff]
        %v311 = vld [vmem:[#allocation2 + $0x18] sm:$0xff]
        %v312 = vld [vmem:[#allocation2 + $0x20] sm:$0xff]
        %v313 = vld [vmem:[#allocation2 + $0x28] sm:$0xff]
        %v314 = vld [vmem:[#allocation2 + $0x30] sm:$0xff]
        %v315 = vld [vmem:[#allocation2 + $0x38] sm:$0xff]
        %v316 = vld [vmem:[%s250] sm:$0xff]
        %v317 = vld [vmem:[%s250 + $0x8] sm:$0xff]
        %v318 = vld [vmem:[%s250 + $0x10] sm:$0xff]
        %v319 = vld [vmem:[%s250 + $0x18] sm:$0xff]
        %v320 = vld [vmem:[%s288] sm:$0xff]
        %v321 = vld [vmem:[%s288 + $0x8] sm:$0xff]
        %v322 = vld [vmem:[%s288 + $0x10] sm:$0xff]
        %v323 = vld [vmem:[%s288 + $0x18] sm:$0xff]
        %v324 = vld [vmem:[%s288 + $0x20] sm:$0xff]
        %v325 = vld [vmem:[%s288 + $0x28] sm:$0xff]
        %v326 = vld [vmem:[%s288 + $0x30] sm:$0xff]
        %v327 = vld [vmem:[%s288 + $0x38] sm:$0xff]
        %v328 = vld [vmem:[%s288 + $0x40] sm:$0xff]
        %v329 = vld [vmem:[%s288 + $0x48] sm:$0xff]
        %v330 = vld [vmem:[%s288 + $0x50] sm:$0xff]
        %v331 = vld [vmem:[%s288 + $0x58] sm:$0xff]
        %v332 = vld [vmem:[%s288 + $0x60] sm:$0xff]
        %v333 = vld [vmem:[%s288 + $0x68] sm:$0xff]
        %v334 = vld [vmem:[%s288 + $0x70] sm:$0xff]
        %v335 = vld [vmem:[%s288 + $0x78] sm:$0xff]
        %v336 = vld [vmem:[%s288 + $0x80] sm:$0xff]
        %v337 = vld [vmem:[%s288 + $0x88] sm:$0xff]
        %v338 = vld [vmem:[%s288 + $0x90] sm:$0xff]
        %v339 = vld [vmem:[%s288 + $0x98] sm:$0xff]
        %v340 = vld [vmem:[%s288 + $0xa0] sm:$0xff]
        %v341 = vld [vmem:[%s288 + $0xa8] sm:$0xff]
        %v342 = vld [vmem:[%s288 + $0xb0] sm:$0xff]
        %v343 = vld [vmem:[%s288 + $0xb8] sm:$0xff]
        %v344 = vld [vmem:[%s288 + $0xc0] sm:$0xff]
        %v345 = vld [vmem:[%s288 + $0xc8] sm:$0xff]
        %v346 = vld [vmem:[%s288 + $0xd0] sm:$0xff]
        %v347 = vld [vmem:[%s288 + $0xd8] sm:$0xff]
        %v348 = vld [vmem:[%s288 + $0xe0] sm:$0xff]
        %v349 = vld [vmem:[%s288 + $0xe8] sm:$0xff]
        %v350 = vld [vmem:[%s288 + $0xf0] sm:$0xff]
        %v351 = vld [vmem:[%s288 + $0xf8] sm:$0xff]
        %v352 = vld [vmem:[%s288 + $0x100] sm:$0xff]
        %v353 = vld [vmem:[%s288 + $0x108] sm:$0xff]
        %v354 = vld [vmem:[%s288 + $0x110] sm:$0xff]
        %v355 = vld [vmem:[%s288 + $0x118] sm:$0xff]
        %v356 = vld [vmem:[%s288 + $0x120] sm:$0xff]
        %v357 = vld [vmem:[%s288 + $0x128] sm:$0xff]
        %v358 = vld [vmem:[%s288 + $0x130] sm:$0xff]
        %v359 = vld [vmem:[%s288 + $0x138] sm:$0xff]
        %v360 = vld [vmem:[%s288 + $0x140] sm:$0xff]
        %v361 = vld [vmem:[%s288 + $0x148] sm:$0xff]
        %v362 = vld [vmem:[%s288 + $0x150] sm:$0xff]
        %v363 = vld [vmem:[%s288 + $0x158] sm:$0xff]
        %v364 = vld [vmem:[%s288 + $0x160] sm:$0xff]
        %v365 = vld [vmem:[%s288 + $0x168] sm:$0xff]
        %v366 = vld [vmem:[%s288 + $0x170] sm:$0xff]
        %v367 = vld [vmem:[%s288 + $0x178] sm:$0xff]
        %v368 = vld [vmem:[%s288 + $0x180] sm:$0xff]
        %v369 = vld [vmem:[%s288 + $0x188] sm:$0xff]
        %v370 = vld [vmem:[%s288 + $0x190] sm:$0xff]
        %v371 = vld [vmem:[%s288 + $0x198] sm:$0xff]
        %v372 = vld [vmem:[%s288 + $0x1a0] sm:$0xff]
        %v373 = vld [vmem:[%s288 + $0x1a8] sm:$0xff]
        %v374 = vld [vmem:[%s288 + $0x1b0] sm:$0xff]
        %v375 = vld [vmem:[%s288 + $0x1b8] sm:$0xff]
        %v376 = vld [vmem:[%s288 + $0x1c0] sm:$0xff]
        %v377 = vld [vmem:[%s288 + $0x1c8] sm:$0xff]
        %v378 = vld [vmem:[%s288 + $0x1d0] sm:$0xff]
        %v379 = vld [vmem:[%s288 + $0x1d8] sm:$0xff]
        %v380 = vld [vmem:[%s288 + $0x1e0] sm:$0xff]
        %v381 = vld [vmem:[%s288 + $0x1e8] sm:$0xff]
        %v382 = vld [vmem:[%s288 + $0x1f0] sm:$0xff]
        %v383 = vld [vmem:[%s288 + $0x1f8] sm:$0xff]
        %v384 = vld [vmem:[%s288 + $0x200] sm:$0xff]
        %v385 = vld [vmem:[%s288 + $0x208] sm:$0xff]
        %v386 = vld [vmem:[%s288 + $0x210] sm:$0xff]
        %v387 = vld [vmem:[%s288 + $0x218] sm:$0xff]
        %v388 = vld [vmem:[%s288 + $0x220] sm:$0xff]
        %v389 = vld [vmem:[%s288 + $0x228] sm:$0xff]
        %v390 = vld [vmem:[%s288 + $0x230] sm:$0xff]
        %v391 = vld [vmem:[%s288 + $0x238] sm:$0xff]
        %v392 = vld [vmem:[%s288 + $0x240] sm:$0xff]
        %v393 = vld [vmem:[%s288 + $0x248] sm:$0xff]
        %v394 = vld [vmem:[%s288 + $0x250] sm:$0xff]
        %v395 = vld [vmem:[%s288 + $0x258] sm:$0xff]
        %v396 = vld [vmem:[%s288 + $0x260] sm:$0xff]
        %v397 = vld [vmem:[%s288 + $0x268] sm:$0xff]
        %v398 = vld [vmem:[%s288 + $0x270] sm:$0xff]
        %v399 = vld [vmem:[%s288 + $0x278] sm:$0xff]
        %v400 = vld [vmem:[%s288 + $0x280] sm:$0xff]
        %v401 = vld [vmem:[%s288 + $0x288] sm:$0xff]
        %v402 = vld [vmem:[%s288 + $0x290] sm:$0xff]
        %v403 = vld [vmem:[%s288 + $0x298] sm:$0xff]
        %v404 = vld [vmem:[%s288 + $0x2a0] sm:$0xff]
        %v405 = vld [vmem:[%s288 + $0x2a8] sm:$0xff]
        %v406 = vld [vmem:[%s288 + $0x2b0] sm:$0xff]
        %v407 = vld [vmem:[%s288 + $0x2b8] sm:$0xff]
        %v408 = vld [vmem:[%s288 + $0x2c0] sm:$0xff]
        %v409 = vld [vmem:[%s288 + $0x2c8] sm:$0xff]
        %v410 = vld [vmem:[%s288 + $0x2d0] sm:$0xff]
        %v411 = vld [vmem:[%s288 + $0x2d8] sm:$0xff]
        %v412 = vld [vmem:[%s288 + $0x2e0] sm:$0xff]
        %v413 = vld [vmem:[%s288 + $0x2e8] sm:$0xff]
        %v414 = vld [vmem:[%s288 + $0x2f0] sm:$0xff]
        %v415 = vld [vmem:[%s288 + $0x2f8] sm:$0xff]
        %v416 = vld [vmem:[%s288 + $0x300] sm:$0xff]
        %v417 = vld [vmem:[%s288 + $0x308] sm:$0xff]
        %v418 = vld [vmem:[%s288 + $0x310] sm:$0xff]
        %v419 = vld [vmem:[%s288 + $0x318] sm:$0xff]
        %v420 = vld [vmem:[%s288 + $0x320] sm:$0xff]
        %v421 = vld [vmem:[%s288 + $0x328] sm:$0xff]
        %v422 = vld [vmem:[%s288 + $0x330] sm:$0xff]
        %v423 = vld [vmem:[%s288 + $0x338] sm:$0xff]
        %v424 = vld [vmem:[%s288 + $0x340] sm:$0xff]
        %v425 = vld [vmem:[%s288 + $0x348] sm:$0xff]
        %v426 = vld [vmem:[%s288 + $0x350] sm:$0xff]
        %v427 = vld [vmem:[%s288 + $0x358] sm:$0xff]
        %v428 = vld [vmem:[%s288 + $0x360] sm:$0xff]
        %v429 = vld [vmem:[%s288 + $0x368] sm:$0xff]
        %v430 = vld [vmem:[%s288 + $0x370] sm:$0xff]
        %v431 = vld [vmem:[%s288 + $0x378] sm:$0xff]
        %v432 = vld [vmem:[%s288 + $0x380] sm:$0xff]
        %v433 = vld [vmem:[%s288 + $0x388] sm:$0xff]
        %v434 = vld [vmem:[%s288 + $0x390] sm:$0xff]
        %v435 = vld [vmem:[%s288 + $0x398] sm:$0xff]
        %v436 = vld [vmem:[%s288 + $0x3a0] sm:$0xff]
        %v437 = vld [vmem:[%s288 + $0x3a8] sm:$0xff]
        %v438 = vld [vmem:[%s288 + $0x3b0] sm:$0xff]
        %v439 = vld [vmem:[%s288 + $0x3b8] sm:$0xff]
        %v440 = vld [vmem:[%s288 + $0x3c0] sm:$0xff]
        %v441 = vld [vmem:[%s288 + $0x3c8] sm:$0xff]
        %v442 = vld [vmem:[%s288 + $0x3d0] sm:$0xff]
        %v443 = vld [vmem:[%s288 + $0x3d8] sm:$0xff]
        %v444 = vld [vmem:[%s288 + $0x3e0] sm:$0xff]
        %v445 = vld [vmem:[%s288 + $0x3e8] sm:$0xff]
        %v446 = vld [vmem:[%s288 + $0x3f0] sm:$0xff]
        %v447 = vld [vmem:[%s288 + $0x3f8] sm:$0xff]
        %v452 = vunpack.c.l.b16 %v316
        %v453 = vunpack.c.h.b16 %v316
        %v454 = vunpack.c.l.b16 %v317
        %v455 = vunpack.c.h.b16 %v317
        %v456 = vunpack.c.l.b16 %v318
        %v457 = vunpack.c.h.b16 %v318
        %v458 = vunpack.c.l.b16 %v319
        %v459 = vunpack.c.h.b16 %v319
        %v460 = vpack.c.b16 %v456, %v452
        %v461 = vpack.c.b16 %v457, %v453
        %v462 = vpack.c.b16 %v458, %v454
        %v463 = vpack.c.b16 %v459, %v455
        %v596 = vunpack.c.l.b16 %v320
        %v597 = vunpack.c.h.b16 %v320
        %v598 = vunpack.c.l.b16 %v321
        %v599 = vunpack.c.h.b16 %v321
        %v600 = vunpack.c.l.b16 %v322
        %v601 = vunpack.c.h.b16 %v322
        %v602 = vunpack.c.l.b16 %v323
        %v603 = vunpack.c.h.b16 %v323
        %v604 = vunpack.c.l.b16 %v324
        %v605 = vunpack.c.h.b16 %v324
        %v606 = vunpack.c.l.b16 %v325
        %v607 = vunpack.c.h.b16 %v325
        %v608 = vunpack.c.l.b16 %v326
        %v609 = vunpack.c.h.b16 %v326
        %v610 = vunpack.c.l.b16 %v327
        %v611 = vunpack.c.h.b16 %v327
        %v612 = vunpack.c.l.b16 %v328
        %v613 = vunpack.c.h.b16 %v328
        %v614 = vunpack.c.l.b16 %v329
        %v615 = vunpack.c.h.b16 %v329
        %v616 = vunpack.c.l.b16 %v330
        %v617 = vunpack.c.h.b16 %v330
        %v618 = vunpack.c.l.b16 %v331
        %v619 = vunpack.c.h.b16 %v331
        %v620 = vunpack.c.l.b16 %v332
        %v621 = vunpack.c.h.b16 %v332
        %v622 = vunpack.c.l.b16 %v333
        %v623 = vunpack.c.h.b16 %v333
        %v624 = vunpack.c.l.b16 %v334
        %v625 = vunpack.c.h.b16 %v334
        %v626 = vunpack.c.l.b16 %v335
        %v627 = vunpack.c.h.b16 %v335
        %v628 = vunpack.c.l.b16 %v336
        %v629 = vunpack.c.h.b16 %v336
        %v630 = vunpack.c.l.b16 %v337
        %v631 = vunpack.c.h.b16 %v337
        %v632 = vunpack.c.l.b16 %v338
        %v633 = vunpack.c.h.b16 %v338
        %v634 = vunpack.c.l.b16 %v339
        %v635 = vunpack.c.h.b16 %v339
        %v636 = vunpack.c.l.b16 %v340
        %v637 = vunpack.c.h.b16 %v340
        %v638 = vunpack.c.l.b16 %v341
        %v639 = vunpack.c.h.b16 %v341
        %v640 = vunpack.c.l.b16 %v342
        %v641 = vunpack.c.h.b16 %v342
        %v642 = vunpack.c.l.b16 %v343
        %v643 = vunpack.c.h.b16 %v343
        %v644 = vunpack.c.l.b16 %v344
        %v645 = vunpack.c.h.b16 %v344
        %v646 = vunpack.c.l.b16 %v345
        %v647 = vunpack.c.h.b16 %v345
        %v648 = vunpack.c.l.b16 %v346
        %v649 = vunpack.c.h.b16 %v346
        %v650 = vunpack.c.l.b16 %v347
        %v651 = vunpack.c.h.b16 %v347
        %v652 = vunpack.c.l.b16 %v348
        %v653 = vunpack.c.h.b16 %v348
        %v654 = vunpack.c.l.b16 %v349
        %v655 = vunpack.c.h.b16 %v349
        %v656 = vunpack.c.l.b16 %v350
        %v657 = vunpack.c.h.b16 %v350
        %v658 = vunpack.c.l.b16 %v351
        %v659 = vunpack.c.h.b16 %v351
        %v660 = vunpack.c.l.b16 %v352
        %v661 = vunpack.c.h.b16 %v352
        %v662 = vunpack.c.l.b16 %v353
        %v663 = vunpack.c.h.b16 %v353
        %v664 = vunpack.c.l.b16 %v354
        %v665 = vunpack.c.h.b16 %v354
        %v666 = vunpack.c.l.b16 %v355
        %v667 = vunpack.c.h.b16 %v355
        %v668 = vunpack.c.l.b16 %v356
        %v669 = vunpack.c.h.b16 %v356
        %v670 = vunpack.c.l.b16 %v357
        %v671 = vunpack.c.h.b16 %v357
        %v672 = vunpack.c.l.b16 %v358
        %v673 = vunpack.c.h.b16 %v358
        %v674 = vunpack.c.l.b16 %v359
        %v675 = vunpack.c.h.b16 %v359
        %v676 = vunpack.c.l.b16 %v360
        %v677 = vunpack.c.h.b16 %v360
        %v678 = vunpack.c.l.b16 %v361
        %v679 = vunpack.c.h.b16 %v361
        %v680 = vunpack.c.l.b16 %v362
        %v681 = vunpack.c.h.b16 %v362
        %v682 = vunpack.c.l.b16 %v363
        %v683 = vunpack.c.h.b16 %v363
        %v684 = vunpack.c.l.b16 %v364
        %v685 = vunpack.c.h.b16 %v364
        %v686 = vunpack.c.l.b16 %v365
        %v687 = vunpack.c.h.b16 %v365
        %v688 = vunpack.c.l.b16 %v366
        %v689 = vunpack.c.h.b16 %v366
        %v690 = vunpack.c.l.b16 %v367
        %v691 = vunpack.c.h.b16 %v367
        %v692 = vunpack.c.l.b16 %v368
        %v693 = vunpack.c.h.b16 %v368
        %v694 = vunpack.c.l.b16 %v369
        %v695 = vunpack.c.h.b16 %v369
        %v696 = vunpack.c.l.b16 %v370
        %v697 = vunpack.c.h.b16 %v370
        %v698 = vunpack.c.l.b16 %v371
        %v699 = vunpack.c.h.b16 %v371
        %v700 = vunpack.c.l.b16 %v372
        %v701 = vunpack.c.h.b16 %v372
        %v702 = vunpack.c.l.b16 %v373
        %v703 = vunpack.c.h.b16 %v373
        %v704 = vunpack.c.l.b16 %v374
        %v705 = vunpack.c.h.b16 %v374
        %v706 = vunpack.c.l.b16 %v375
        %v707 = vunpack.c.h.b16 %v375
        %v708 = vunpack.c.l.b16 %v376
        %v709 = vunpack.c.h.b16 %v376
        %v710 = vunpack.c.l.b16 %v377
        %v711 = vunpack.c.h.b16 %v377
        %v712 = vunpack.c.l.b16 %v378
        %v713 = vunpack.c.h.b16 %v378
        %v714 = vunpack.c.l.b16 %v379
        %v715 = vunpack.c.h.b16 %v379
        %v716 = vunpack.c.l.b16 %v380
        %v717 = vunpack.c.h.b16 %v380
        %v718 = vunpack.c.l.b16 %v381
        %v719 = vunpack.c.h.b16 %v381
        %v720 = vunpack.c.l.b16 %v382
        %v721 = vunpack.c.h.b16 %v382
        %v722 = vunpack.c.l.b16 %v383
        %v723 = vunpack.c.h.b16 %v383
        %v724 = vunpack.c.l.b16 %v384
        %v725 = vunpack.c.h.b16 %v384
        %v726 = vunpack.c.l.b16 %v385
        %v727 = vunpack.c.h.b16 %v385
        %v728 = vunpack.c.l.b16 %v386
        %v729 = vunpack.c.h.b16 %v386
        %v730 = vunpack.c.l.b16 %v387
        %v731 = vunpack.c.h.b16 %v387
        %v732 = vunpack.c.l.b16 %v388
        %v733 = vunpack.c.h.b16 %v388
        %v734 = vunpack.c.l.b16 %v389
        %v735 = vunpack.c.h.b16 %v389
        %v736 = vunpack.c.l.b16 %v390
        %v737 = vunpack.c.h.b16 %v390
        %v738 = vunpack.c.l.b16 %v391
        %v739 = vunpack.c.h.b16 %v391
        %v740 = vunpack.c.l.b16 %v392
        %v741 = vunpack.c.h.b16 %v392
        %v742 = vunpack.c.l.b16 %v393
        %v743 = vunpack.c.h.b16 %v393
        %v744 = vunpack.c.l.b16 %v394
        %v745 = vunpack.c.h.b16 %v394
        %v746 = vunpack.c.l.b16 %v395
        %v747 = vunpack.c.h.b16 %v395
        %v748 = vunpack.c.l.b16 %v396
        %v749 = vunpack.c.h.b16 %v396
        %v750 = vunpack.c.l.b16 %v397
        %v751 = vunpack.c.h.b16 %v397
        %v752 = vunpack.c.l.b16 %v398
        %v753 = vunpack.c.h.b16 %v398
        %v754 = vunpack.c.l.b16 %v399
        %v755 = vunpack.c.h.b16 %v399
        %v756 = vunpack.c.l.b16 %v400
        %v757 = vunpack.c.h.b16 %v400
        %v758 = vunpack.c.l.b16 %v401
        %v759 = vunpack.c.h.b16 %v401
        %v760 = vunpack.c.l.b16 %v402
        %v761 = vunpack.c.h.b16 %v402
        %v762 = vunpack.c.l.b16 %v403
        %v763 = vunpack.c.h.b16 %v403
        %v764 = vunpack.c.l.b16 %v404
        %v765 = vunpack.c.h.b16 %v404
        %v766 = vunpack.c.l.b16 %v405
        %v767 = vunpack.c.h.b16 %v405
        %v768 = vunpack.c.l.b16 %v406
        %v769 = vunpack.c.h.b16 %v406
        %v770 = vunpack.c.l.b16 %v407
        %v771 = vunpack.c.h.b16 %v407
        %v772 = vunpack.c.l.b16 %v408
        %v773 = vunpack.c.h.b16 %v408
        %v774 = vunpack.c.l.b16 %v409
        %v775 = vunpack.c.h.b16 %v409
        %v776 = vunpack.c.l.b16 %v410
        %v777 = vunpack.c.h.b16 %v410
        %v778 = vunpack.c.l.b16 %v411
        %v779 = vunpack.c.h.b16 %v411
        %v780 = vunpack.c.l.b16 %v412
        %v781 = vunpack.c.h.b16 %v412
        %v782 = vunpack.c.l.b16 %v413
        %v783 = vunpack.c.h.b16 %v413
        %v784 = vunpack.c.l.b16 %v414
        %v785 = vunpack.c.h.b16 %v414
        %v786 = vunpack.c.l.b16 %v415
        %v787 = vunpack.c.h.b16 %v415
        %v788 = vunpack.c.l.b16 %v416
        %v789 = vunpack.c.h.b16 %v416
        %v790 = vunpack.c.l.b16 %v417
        %v791 = vunpack.c.h.b16 %v417
        %v792 = vunpack.c.l.b16 %v418
        %v793 = vunpack.c.h.b16 %v418
        %v794 = vunpack.c.l.b16 %v419
        %v795 = vunpack.c.h.b16 %v419
        %v796 = vunpack.c.l.b16 %v420
        %v797 = vunpack.c.h.b16 %v420
        %v798 = vunpack.c.l.b16 %v421
        %v799 = vunpack.c.h.b16 %v421
        %v800 = vunpack.c.l.b16 %v422
        %v801 = vunpack.c.h.b16 %v422
        %v802 = vunpack.c.l.b16 %v423
        %v803 = vunpack.c.h.b16 %v423
        %v804 = vunpack.c.l.b16 %v424
        %v805 = vunpack.c.h.b16 %v424
        %v806 = vunpack.c.l.b16 %v425
        %v807 = vunpack.c.h.b16 %v425
        %v808 = vunpack.c.l.b16 %v426
        %v809 = vunpack.c.h.b16 %v426
        %v810 = vunpack.c.l.b16 %v427
        %v811 = vunpack.c.h.b16 %v427
        %v812 = vunpack.c.l.b16 %v428
        %v813 = vunpack.c.h.b16 %v428
        %v814 = vunpack.c.l.b16 %v429
        %v815 = vunpack.c.h.b16 %v429
        %v816 = vunpack.c.l.b16 %v430
        %v817 = vunpack.c.h.b16 %v430
        %v818 = vunpack.c.l.b16 %v431
        %v819 = vunpack.c.h.b16 %v431
        %v820 = vunpack.c.l.b16 %v432
        %v821 = vunpack.c.h.b16 %v432
        %v822 = vunpack.c.l.b16 %v433
        %v823 = vunpack.c.h.b16 %v433
        %v824 = vunpack.c.l.b16 %v434
        %v825 = vunpack.c.h.b16 %v434
        %v826 = vunpack.c.l.b16 %v435
        %v827 = vunpack.c.h.b16 %v435
        %v828 = vunpack.c.l.b16 %v436
        %v829 = vunpack.c.h.b16 %v436
        %v830 = vunpack.c.l.b16 %v437
        %v831 = vunpack.c.h.b16 %v437
        %v832 = vunpack.c.l.b16 %v438
        %v833 = vunpack.c.h.b16 %v438
        %v834 = vunpack.c.l.b16 %v439
        %v835 = vunpack.c.h.b16 %v439
        %v836 = vunpack.c.l.b16 %v440
        %v837 = vunpack.c.h.b16 %v440
        %v838 = vunpack.c.l.b16 %v441
        %v839 = vunpack.c.h.b16 %v441
        %v840 = vunpack.c.l.b16 %v442
        %v841 = vunpack.c.h.b16 %v442
        %v842 = vunpack.c.l.b16 %v443
        %v843 = vunpack.c.h.b16 %v443
        %v844 = vunpack.c.l.b16 %v444
        %v845 = vunpack.c.h.b16 %v444
        %v846 = vunpack.c.l.b16 %v445
        %v847 = vunpack.c.h.b16 %v445
        %v848 = vunpack.c.l.b16 %v446
        %v849 = vunpack.c.h.b16 %v446
        %v850 = vunpack.c.l.b16 %v447
        %v851 = vunpack.c.h.b16 %v447
        %v852 = vpack.c.b16 %v600, %v596
        %v853 = vpack.c.b16 %v601, %v597
        %v854 = vpack.c.b16 %v602, %v598
        %v855 = vpack.c.b16 %v603, %v599
        %v856 = vpack.c.b16 %v608, %v604
        %v857 = vpack.c.b16 %v609, %v605
        %v858 = vpack.c.b16 %v610, %v606
        %v859 = vpack.c.b16 %v611, %v607
        %v860 = vpack.c.b16 %v616, %v612
        %v861 = vpack.c.b16 %v617, %v613
        %v862 = vpack.c.b16 %v618, %v614
        %v863 = vpack.c.b16 %v619, %v615
        %v864 = vpack.c.b16 %v624, %v620
        %v865 = vpack.c.b16 %v625, %v621
        %v866 = vpack.c.b16 %v626, %v622
        %v867 = vpack.c.b16 %v627, %v623
        %v868 = vpack.c.b16 %v632, %v628
        %v869 = vpack.c.b16 %v633, %v629
        %v870 = vpack.c.b16 %v634, %v630
        %v871 = vpack.c.b16 %v635, %v631
        %v872 = vpack.c.b16 %v640, %v636
        %v873 = vpack.c.b16 %v641, %v637
        %v874 = vpack.c.b16 %v642, %v638
        %v875 = vpack.c.b16 %v643, %v639
        %v876 = vpack.c.b16 %v648, %v644
        %v877 = vpack.c.b16 %v649, %v645
        %v878 = vpack.c.b16 %v650, %v646
        %v879 = vpack.c.b16 %v651, %v647
        %v880 = vpack.c.b16 %v656, %v652
        %v881 = vpack.c.b16 %v657, %v653
        %v882 = vpack.c.b16 %v658, %v654
        %v883 = vpack.c.b16 %v659, %v655
        %v884 = vpack.c.b16 %v664, %v660
        %v885 = vpack.c.b16 %v665, %v661
        %v886 = vpack.c.b16 %v666, %v662
        %v887 = vpack.c.b16 %v667, %v663
        %v888 = vpack.c.b16 %v672, %v668
        %v889 = vpack.c.b16 %v673, %v669
        %v890 = vpack.c.b16 %v674, %v670
        %v891 = vpack.c.b16 %v675, %v671
        %v892 = vpack.c.b16 %v680, %v676
        %v893 = vpack.c.b16 %v681, %v677
        %v894 = vpack.c.b16 %v682, %v678
        %v895 = vpack.c.b16 %v683, %v679
        %v896 = vpack.c.b16 %v688, %v684
        %v897 = vpack.c.b16 %v689, %v685
        %v898 = vpack.c.b16 %v690, %v686
        %v899 = vpack.c.b16 %v691, %v687
        %v900 = vpack.c.b16 %v696, %v692
        %v901 = vpack.c.b16 %v697, %v693
        %v902 = vpack.c.b16 %v698, %v694
        %v903 = vpack.c.b16 %v699, %v695
        %v904 = vpack.c.b16 %v704, %v700
        %v905 = vpack.c.b16 %v705, %v701
        %v906 = vpack.c.b16 %v706, %v702
        %v907 = vpack.c.b16 %v707, %v703
        %v908 = vpack.c.b16 %v712, %v708
        %v909 = vpack.c.b16 %v713, %v709
        %v910 = vpack.c.b16 %v714, %v710
        %v911 = vpack.c.b16 %v715, %v711
        %v912 = vpack.c.b16 %v720, %v716
        %v913 = vpack.c.b16 %v721, %v717
        %v914 = vpack.c.b16 %v722, %v718
        %v915 = vpack.c.b16 %v723, %v719
        %v916 = vpack.c.b16 %v728, %v724
        %v917 = vpack.c.b16 %v729, %v725
        %v918 = vpack.c.b16 %v730, %v726
        %v919 = vpack.c.b16 %v731, %v727
        %v920 = vpack.c.b16 %v736, %v732
        %v921 = vpack.c.b16 %v737, %v733
        %v922 = vpack.c.b16 %v738, %v734
        %v923 = vpack.c.b16 %v739, %v735
        %v924 = vpack.c.b16 %v744, %v740
        %v925 = vpack.c.b16 %v745, %v741
        %v926 = vpack.c.b16 %v746, %v742
        %v927 = vpack.c.b16 %v747, %v743
        %v928 = vpack.c.b16 %v752, %v748
        %v929 = vpack.c.b16 %v753, %v749
        %v930 = vpack.c.b16 %v754, %v750
        %v931 = vpack.c.b16 %v755, %v751
        %v932 = vpack.c.b16 %v760, %v756
        %v933 = vpack.c.b16 %v761, %v757
        %v934 = vpack.c.b16 %v762, %v758
        %v935 = vpack.c.b16 %v763, %v759
        %v936 = vpack.c.b16 %v768, %v764
        %v937 = vpack.c.b16 %v769, %v765
        %v938 = vpack.c.b16 %v770, %v766
        %v939 = vpack.c.b16 %v771, %v767
        %v940 = vpack.c.b16 %v776, %v772
        %v941 = vpack.c.b16 %v777, %v773
        %v942 = vpack.c.b16 %v778, %v774
        %v943 = vpack.c.b16 %v779, %v775
        %v944 = vpack.c.b16 %v784, %v780
        %v945 = vpack.c.b16 %v785, %v781
        %v946 = vpack.c.b16 %v786, %v782
        %v947 = vpack.c.b16 %v787, %v783
        %v948 = vpack.c.b16 %v792, %v788
        %v949 = vpack.c.b16 %v793, %v789
        %v950 = vpack.c.b16 %v794, %v790
        %v951 = vpack.c.b16 %v795, %v791
        %v952 = vpack.c.b16 %v800, %v796
        %v953 = vpack.c.b16 %v801, %v797
        %v954 = vpack.c.b16 %v802, %v798
        %v955 = vpack.c.b16 %v803, %v799
        %v956 = vpack.c.b16 %v808, %v804
        %v957 = vpack.c.b16 %v809, %v805
        %v958 = vpack.c.b16 %v810, %v806
        %v959 = vpack.c.b16 %v811, %v807
        %v960 = vpack.c.b16 %v816, %v812
        %v961 = vpack.c.b16 %v817, %v813
        %v962 = vpack.c.b16 %v818, %v814
        %v963 = vpack.c.b16 %v819, %v815
        %v964 = vpack.c.b16 %v824, %v820
        %v965 = vpack.c.b16 %v825, %v821
        %v966 = vpack.c.b16 %v826, %v822
        %v967 = vpack.c.b16 %v827, %v823
        %v968 = vpack.c.b16 %v832, %v828
        %v969 = vpack.c.b16 %v833, %v829
        %v970 = vpack.c.b16 %v834, %v830
        %v971 = vpack.c.b16 %v835, %v831
        %v972 = vpack.c.b16 %v840, %v836
        %v973 = vpack.c.b16 %v841, %v837
        %v974 = vpack.c.b16 %v842, %v838
        %v975 = vpack.c.b16 %v843, %v839
        %v976 = vpack.c.b16 %v848, %v844
        %v977 = vpack.c.b16 %v849, %v845
        %v978 = vpack.c.b16 %v850, %v846
        %v979 = vpack.c.b16 %v851, %v847
        %1108 = vmatpush.bf16.msra.mxu0 %v880
        %1109 = vmatpush.bf16.msra.mxu0 %v876
        %1110 = vmatpush.bf16.msra.mxu0 %v872
        %1111 = vmatpush.bf16.msra.mxu0 %v868
        %1112 = vmatpush.bf16.msra.mxu0 %v864
        %1113 = vmatpush.bf16.msra.mxu0 %v860
        %1114 = vmatpush.bf16.msra.mxu0 %v856
        %1115 = vmatpush.bf16.msra.mxu0 %v852
        %1116 = vmatmul.bf16.gmra.mxu0 %v460
        %v1117 = vpop.f32.mrf.mxu0
        %v1118 = vadd.f32 0.0, %v1117
        %v1119 = vpop.f32.mrf.mxu0
        %v1120 = vadd.f32 0.0, %v1119
        %1121 = vdwg.mxu0
        %1122 = vmatpush.bf16.msra.mxu0 %v912
        %1123 = vmatpush.bf16.msra.mxu0 %v908
        %1124 = vmatpush.bf16.msra.mxu0 %v904
        %1125 = vmatpush.bf16.msra.mxu0 %v900
        %1126 = vmatpush.bf16.msra.mxu0 %v896
        %1127 = vmatpush.bf16.msra.mxu0 %v892
        %1128 = vmatpush.bf16.msra.mxu0 %v888
        %1129 = vmatpush.bf16.msra.mxu0 %v884
        %1130 = vmatmul.bf16.gmra.mxu0 %v461
        %v1131 = vpop.f32.mrf.mxu0
        %v1132 = vadd.f32 %v1118, %v1131
        %v1133 = vpop.f32.mrf.mxu0
        %v1134 = vadd.f32 %v1120, %v1133
        %1135 = vdwg.mxu0
        %1136 = vmatpush.bf16.msra.mxu0 %v944
        %1137 = vmatpush.bf16.msra.mxu0 %v940
        %1138 = vmatpush.bf16.msra.mxu0 %v936
        %1139 = vmatpush.bf16.msra.mxu0 %v932
        %1140 = vmatpush.bf16.msra.mxu0 %v928
        %1141 = vmatpush.bf16.msra.mxu0 %v924
        %1142 = vmatpush.bf16.msra.mxu0 %v920
        %1143 = vmatpush.bf16.msra.mxu0 %v916
        %1144 = vmatmul.bf16.gmra.mxu0 %v462
        %v1145 = vpop.f32.mrf.mxu0
        %v1146 = vadd.f32 %v1132, %v1145
        %v1147 = vpop.f32.mrf.mxu0
        %v1148 = vadd.f32 %v1134, %v1147
        %1149 = vdwg.mxu0
        %1150 = vmatpush.bf16.msra.mxu0 %v976
        %1151 = vmatpush.bf16.msra.mxu0 %v972
        %1152 = vmatpush.bf16.msra.mxu0 %v968
        %1153 = vmatpush.bf16.msra.mxu0 %v964
        %1154 = vmatpush.bf16.msra.mxu0 %v960
        %1155 = vmatpush.bf16.msra.mxu0 %v956
        %1156 = vmatpush.bf16.msra.mxu0 %v952
        %1157 = vmatpush.bf16.msra.mxu0 %v948
        %1158 = vmatmul.bf16.gmra.mxu0 %v463
        %v1159 = vpop.f32.mrf.mxu0
        %v1160 = vadd.f32 %v1146, %v1159
        %v1161 = vpop.f32.mrf.mxu0
        %v1162 = vadd.f32 %v1148, %v1161
        %1163 = vdwg.mxu0
        %1164 = vmatpush.bf16.msra.mxu0 %v881
        %1165 = vmatpush.bf16.msra.mxu0 %v877
        %1166 = vmatpush.bf16.msra.mxu0 %v873
        %1167 = vmatpush.bf16.msra.mxu0 %v869
        %1168 = vmatpush.bf16.msra.mxu0 %v865
        %1169 = vmatpush.bf16.msra.mxu0 %v861
        %1170 = vmatpush.bf16.msra.mxu0 %v857
        %1171 = vmatpush.bf16.msra.mxu0 %v853
        %1172 = vmatmul.bf16.gmra.mxu0 %v460
        %v1173 = vpop.f32.mrf.mxu0
        %v1174 = vadd.f32 0.0, %v1173
        %v1175 = vpop.f32.mrf.mxu0
        %v1176 = vadd.f32 0.0, %v1175
        %1177 = vdwg.mxu0
        %1178 = vmatpush.bf16.msra.mxu0 %v913
        %1179 = vmatpush.bf16.msra.mxu0 %v909
        %1180 = vmatpush.bf16.msra.mxu0 %v905
        %1181 = vmatpush.bf16.msra.mxu0 %v901
        %1182 = vmatpush.bf16.msra.mxu0 %v897
        %1183 = vmatpush.bf16.msra.mxu0 %v893
        %1184 = vmatpush.bf16.msra.mxu0 %v889
        %1185 = vmatpush.bf16.msra.mxu0 %v885
        %1186 = vmatmul.bf16.gmra.mxu0 %v461
        %v1187 = vpop.f32.mrf.mxu0
        %v1188 = vadd.f32 %v1174, %v1187
        %v1189 = vpop.f32.mrf.mxu0
        %v1190 = vadd.f32 %v1176, %v1189
        %1191 = vdwg.mxu0
        %1192 = vmatpush.bf16.msra.mxu0 %v945
        %1193 = vmatpush.bf16.msra.mxu0 %v941
        %1194 = vmatpush.bf16.msra.mxu0 %v937
        %1195 = vmatpush.bf16.msra.mxu0 %v933
        %1196 = vmatpush.bf16.msra.mxu0 %v929
        %1197 = vmatpush.bf16.msra.mxu0 %v925
        %1198 = vmatpush.bf16.msra.mxu0 %v921
        %1199 = vmatpush.bf16.msra.mxu0 %v917
        %1200 = vmatmul.bf16.gmra.mxu0 %v462
        %v1201 = vpop.f32.mrf.mxu0
        %v1202 = vadd.f32 %v1188, %v1201
        %v1203 = vpop.f32.mrf.mxu0
        %v1204 = vadd.f32 %v1190, %v1203
        %1205 = vdwg.mxu0
        %1206 = vmatpush.bf16.msra.mxu0 %v977
        %1207 = vmatpush.bf16.msra.mxu0 %v973
        %1208 = vmatpush.bf16.msra.mxu0 %v969
        %1209 = vmatpush.bf16.msra.mxu0 %v965
        %1210 = vmatpush.bf16.msra.mxu0 %v961
        %1211 = vmatpush.bf16.msra.mxu0 %v957
        %1212 = vmatpush.bf16.msra.mxu0 %v953
        %1213 = vmatpush.bf16.msra.mxu0 %v949
        %1214 = vmatmul.bf16.gmra.mxu0 %v463
        %v1215 = vpop.f32.mrf.mxu0
        %v1216 = vadd.f32 %v1202, %v1215
        %v1217 = vpop.f32.mrf.mxu0
        %v1218 = vadd.f32 %v1204, %v1217
        %1219 = vdwg.mxu0
        %1220 = vmatpush.bf16.msra.mxu0 %v882
        %1221 = vmatpush.bf16.msra.mxu0 %v878
        %1222 = vmatpush.bf16.msra.mxu0 %v874
        %1223 = vmatpush.bf16.msra.mxu0 %v870
        %1224 = vmatpush.bf16.msra.mxu0 %v866
        %1225 = vmatpush.bf16.msra.mxu0 %v862
        %1226 = vmatpush.bf16.msra.mxu0 %v858
        %1227 = vmatpush.bf16.msra.mxu0 %v854
        %1228 = vmatmul.bf16.gmra.mxu0 %v460
        %v1229 = vpop.f32.mrf.mxu0
        %v1230 = vadd.f32 0.0, %v1229
        %v1231 = vpop.f32.mrf.mxu0
        %v1232 = vadd.f32 0.0, %v1231
        %1233 = vdwg.mxu0
        %1234 = vmatpush.bf16.msra.mxu0 %v914
        %1235 = vmatpush.bf16.msra.mxu0 %v910
        %1236 = vmatpush.bf16.msra.mxu0 %v906
        %1237 = vmatpush.bf16.msra.mxu0 %v902
        %1238 = vmatpush.bf16.msra.mxu0 %v898
        %1239 = vmatpush.bf16.msra.mxu0 %v894
        %1240 = vmatpush.bf16.msra.mxu0 %v890
        %1241 = vmatpush.bf16.msra.mxu0 %v886
        %1242 = vmatmul.bf16.gmra.mxu0 %v461
        %v1243 = vpop.f32.mrf.mxu0
        %v1244 = vadd.f32 %v1230, %v1243
        %v1245 = vpop.f32.mrf.mxu0
        %v1246 = vadd.f32 %v1232, %v1245
        %1247 = vdwg.mxu0
        %1248 = vmatpush.bf16.msra.mxu0 %v946
        %1249 = vmatpush.bf16.msra.mxu0 %v942
        %1250 = vmatpush.bf16.msra.mxu0 %v938
        %1251 = vmatpush.bf16.msra.mxu0 %v934
        %1252 = vmatpush.bf16.msra.mxu0 %v930
        %1253 = vmatpush.bf16.msra.mxu0 %v926
        %1254 = vmatpush.bf16.msra.mxu0 %v922
        %1255 = vmatpush.bf16.msra.mxu0 %v918
        %1256 = vmatmul.bf16.gmra.mxu0 %v462
        %v1257 = vpop.f32.mrf.mxu0
        %v1258 = vadd.f32 %v1244, %v1257
        %v1259 = vpop.f32.mrf.mxu0
        %v1260 = vadd.f32 %v1246, %v1259
        %1261 = vdwg.mxu0
        %1262 = vmatpush.bf16.msra.mxu0 %v978
        %1263 = vmatpush.bf16.msra.mxu0 %v974
        %1264 = vmatpush.bf16.msra.mxu0 %v970
        %1265 = vmatpush.bf16.msra.mxu0 %v966
        %1266 = vmatpush.bf16.msra.mxu0 %v962
        %1267 = vmatpush.bf16.msra.mxu0 %v958
        %1268 = vmatpush.bf16.msra.mxu0 %v954
        %1269 = vmatpush.bf16.msra.mxu0 %v950
        %1270 = vmatmul.bf16.gmra.mxu0 %v463
        %v1271 = vpop.f32.mrf.mxu0
        %v1272 = vadd.f32 %v1258, %v1271
        %v1273 = vpop.f32.mrf.mxu0
        %v1274 = vadd.f32 %v1260, %v1273
        %1275 = vdwg.mxu0
        %1276 = vmatpush.bf16.msra.mxu0 %v883
        %1277 = vmatpush.bf16.msra.mxu0 %v879
        %1278 = vmatpush.bf16.msra.mxu0 %v875
        %1279 = vmatpush.bf16.msra.mxu0 %v871
        %1280 = vmatpush.bf16.msra.mxu0 %v867
        %1281 = vmatpush.bf16.msra.mxu0 %v863
        %1282 = vmatpush.bf16.msra.mxu0 %v859
        %1283 = vmatpush.bf16.msra.mxu0 %v855
        %1284 = vmatmul.bf16.gmra.mxu0 %v460
        %v1285 = vpop.f32.mrf.mxu0
        %v1286 = vadd.f32 0.0, %v1285
        %v1287 = vpop.f32.mrf.mxu0
        %v1288 = vadd.f32 0.0, %v1287
        %1289 = vdwg.mxu0
        %1290 = vmatpush.bf16.msra.mxu0 %v915
        %1291 = vmatpush.bf16.msra.mxu0 %v911
        %1292 = vmatpush.bf16.msra.mxu0 %v907
        %1293 = vmatpush.bf16.msra.mxu0 %v903
        %1294 = vmatpush.bf16.msra.mxu0 %v899
        %1295 = vmatpush.bf16.msra.mxu0 %v895
        %1296 = vmatpush.bf16.msra.mxu0 %v891
        %1297 = vmatpush.bf16.msra.mxu0 %v887
        %1298 = vmatmul.bf16.gmra.mxu0 %v461
        %v1299 = vpop.f32.mrf.mxu0
        %v1300 = vadd.f32 %v1286, %v1299
        %v1301 = vpop.f32.mrf.mxu0
        %v1302 = vadd.f32 %v1288, %v1301
        %1303 = vdwg.mxu0
        %1304 = vmatpush.bf16.msra.mxu0 %v947
        %1305 = vmatpush.bf16.msra.mxu0 %v943
        %1306 = vmatpush.bf16.msra.mxu0 %v939
        %1307 = vmatpush.bf16.msra.mxu0 %v935
        %1308 = vmatpush.bf16.msra.mxu0 %v931
        %1309 = vmatpush.bf16.msra.mxu0 %v927
        %1310 = vmatpush.bf16.msra.mxu0 %v923
        %1311 = vmatpush.bf16.msra.mxu0 %v919
        %1312 = vmatmul.bf16.gmra.mxu0 %v462
        %v1313 = vpop.f32.mrf.mxu0
        %v1314 = vadd.f32 %v1300, %v1313
        %v1315 = vpop.f32.mrf.mxu0
        %v1316 = vadd.f32 %v1302, %v1315
        %1317 = vdwg.mxu0
        %1318 = vmatpush.bf16.msra.mxu0 %v979
        %1319 = vmatpush.bf16.msra.mxu0 %v975
        %1320 = vmatpush.bf16.msra.mxu0 %v971
        %1321 = vmatpush.bf16.msra.mxu0 %v967
        %1322 = vmatpush.bf16.msra.mxu0 %v963
        %1323 = vmatpush.bf16.msra.mxu0 %v959
        %1324 = vmatpush.bf16.msra.mxu0 %v955
        %1325 = vmatpush.bf16.msra.mxu0 %v951
        %1326 = vmatmul.bf16.gmra.mxu0 %v463
        %v1327 = vpop.f32.mrf.mxu0
        %v1328 = vadd.f32 %v1314, %v1327
        %v1329 = vpop.f32.mrf.mxu0
        %v1330 = vadd.f32 %v1316, %v1329
        %1331 = vdwg.mxu0
        %v1332 = vadd.f32 %v308, %v1160
        %v1333 = vadd.f32 %v309, %v1216
        %v1334 = vadd.f32 %v310, %v1272
        %v1335 = vadd.f32 %v311, %v1328
        %v1336 = vadd.f32 %v312, %v1162
        %v1337 = vadd.f32 %v313, %v1218
        %v1338 = vadd.f32 %v314, %v1274
        %v1339 = vadd.f32 %v315, %v1330
        %1340 = vst [vmem:[#allocation2] sm:$0xff] %v1332
        %1341 = vst [vmem:[#allocation2 + $0x8] sm:$0xff] %v1333
        %1342 = vst [vmem:[#allocation2 + $0x10] sm:$0xff] %v1334
        %1343 = vst [vmem:[#allocation2 + $0x18] sm:$0xff] %v1335
        %1344 = vst [vmem:[#allocation2 + $0x20] sm:$0xff] %v1336
        %1345 = vst [vmem:[#allocation2 + $0x28] sm:$0xff] %v1337
        %1346 = vst [vmem:[#allocation2 + $0x30] sm:$0xff] %v1338
        %1347 = vst [vmem:[#allocation2 + $0x38] sm:$0xff] %v1339
        %p1348 = scmp.eq.s32.totalorder %s21, 6
        // Predicated region
        $region68: #{mnist_cnn_forward.9} parent=58 // pred_check
          %p1349 = pneg %p1348
        $region69: #{mnist_cnn_forward.9} parent=58 // pred_check_branch
          %1351 = sbr.rel (%p1349) target = $region71
        $region70: #{mnist_cnn_forward.9} parent=58 // pred_region
          %v1352 = vld [vmem:[#allocation2] sm:$0xff]
          %v1353 = vld [vmem:[#allocation2 + $0x8] sm:$0xff]
          %v1354 = vld [vmem:[#allocation2 + $0x10] sm:$0xff]
          %v1355 = vld [vmem:[#allocation2 + $0x18] sm:$0xff]
          %v1356 = vld [vmem:[#allocation2 + $0x20] sm:$0xff]
          %v1357 = vld [vmem:[#allocation2 + $0x28] sm:$0xff]
          %v1358 = vld [vmem:[#allocation2 + $0x30] sm:$0xff]
          %v1359 = vld [vmem:[#allocation2 + $0x38] sm:$0xff]
          %v1360 = vld [vmem:[%s2] sm:$0xf]
          %v1362 = vperm.slane %v1360, 0
          %v1363 = vperm.slane %v1360, 1
          %v1364 = vperm.slane %v1360, 2
          %v1365 = vperm.slane %v1360, 3
          %v1370 = vadd.f32 %v1352, %v1362
          %v1371 = vadd.f32 %v1353, %v1363
          %v1372 = vadd.f32 %v1354, %v1364
          %v1373 = vadd.f32 %v1355, %v1365
          %v1374 = vadd.f32 %v1356, %v1362
          %v1375 = vadd.f32 %v1357, %v1363
          %v1376 = vadd.f32 %v1358, %v1364
          %v1377 = vadd.f32 %v1359, %v1365
          %v1378 = vmax.f32 %v1370, 0.0
          %v1379 = vmax.f32 %v1371, 0.0
          %v1380 = vmax.f32 %v1372, 0.0
          %v1381 = vmax.f32 %v1373, 0.0
          %v1382 = vmax.f32 %v1374, 0.0
          %v1383 = vmax.f32 %v1375, 0.0
          %v1384 = vmax.f32 %v1376, 0.0
          %v1385 = vmax.f32 %v1377, 0.0
          %v1386 = vpack.c.bf16 %v1382, %v1378
          %v1387 = vpack.c.bf16 %v1383, %v1379
          %v1388 = vpack.c.bf16 %v1384, %v1380
          %v1389 = vpack.c.bf16 %v1385, %v1381
          %v1390 = vld [vmem:[%s3] sm:$0xf]
          %v1391 = vld [vmem:[%s3 + $0x4] sm:$0xf]
          %v1392 = vld [vmem:[%s3 + $0x8] sm:$0xf]
          %v1393 = vld [vmem:[%s3 + $0xc] sm:$0xf]
          %v1394 = vld [vmem:[%s3 + $0x10] sm:$0xf]
          %v1395 = vld [vmem:[%s3 + $0x14] sm:$0xf]
          %v1396 = vld [vmem:[%s3 + $0x18] sm:$0xf]
          %v1397 = vld [vmem:[%s3 + $0x1c] sm:$0xf]
          %v1398 = vld [vmem:[%s3 + $0x20] sm:$0xf]
          %v1399 = vld [vmem:[%s3 + $0x24] sm:$0xf]
          %v1400 = vld [vmem:[%s3 + $0x28] sm:$0xf]
          %v1401 = vld [vmem:[%s3 + $0x2c] sm:$0xf]
          %v1402 = vld [vmem:[%s3 + $0x30] sm:$0xf]
          %v1403 = vld [vmem:[%s3 + $0x34] sm:$0xf]
          %v1404 = vld [vmem:[%s3 + $0x38] sm:$0xf]
          %v1405 = vld [vmem:[%s3 + $0x3c] sm:$0xf]
          %v1406 = vld [vmem:[%s3 + $0x40] sm:$0xf]
          %v1407 = vld [vmem:[%s3 + $0x44] sm:$0xf]
          %v1408 = vld [vmem:[%s3 + $0x48] sm:$0xf]
          %v1409 = vld [vmem:[%s3 + $0x4c] sm:$0xf]
          %v1410 = vld [vmem:[%s3 + $0x50] sm:$0xf]
          %v1411 = vld [vmem:[%s3 + $0x54] sm:$0xf]
          %v1412 = vld [vmem:[%s3 + $0x58] sm:$0xf]
          %v1413 = vld [vmem:[%s3 + $0x5c] sm:$0xf]
          %v1414 = vld [vmem:[%s3 + $0x60] sm:$0xf]
          %v1415 = vld [vmem:[%s3 + $0x64] sm:$0xf]
          %v1416 = vld [vmem:[%s3 + $0x68] sm:$0xf]
          %v1417 = vld [vmem:[%s3 + $0x6c] sm:$0xf]
          %v1418 = vld [vmem:[%s3 + $0x70] sm:$0xf]
          %v1419 = vld [vmem:[%s3 + $0x74] sm:$0xf]
          %v1420 = vld [vmem:[%s3 + $0x78] sm:$0xf]
          %v1421 = vld [vmem:[%s3 + $0x7c] sm:$0xf]
          %v1422 = vld [vmem:[%s3 + $0x80] sm:$0xf]
          %v1423 = vld [vmem:[%s3 + $0x84] sm:$0xf]
          %v1424 = vld [vmem:[%s3 + $0x88] sm:$0xf]
          %v1425 = vld [vmem:[%s3 + $0x8c] sm:$0xf]
          %v1426 = vld [vmem:[%s3 + $0x90] sm:$0xf]
          %v1427 = vld [vmem:[%s3 + $0x94] sm:$0xf]
          %v1428 = vld [vmem:[%s3 + $0x98] sm:$0xf]
          %v1429 = vld [vmem:[%s3 + $0x9c] sm:$0xf]
          %v1430 = vld [vmem:[%s3 + $0xa0] sm:$0xf]
          %v1431 = vld [vmem:[%s3 + $0xa4] sm:$0xf]
          %v1432 = vld [vmem:[%s3 + $0xa8] sm:$0xf]
          %v1433 = vld [vmem:[%s3 + $0xac] sm:$0xf]
          %v1434 = vld [vmem:[%s3 + $0xb0] sm:$0xf]
          %v1435 = vld [vmem:[%s3 + $0xb4] sm:$0xf]
          %v1436 = vld [vmem:[%s3 + $0xb8] sm:$0xf]
          %v1437 = vld [vmem:[%s3 + $0xbc] sm:$0xf]
          %v1438 = vld [vmem:[%s3 + $0xc0] sm:$0xf]
          %v1439 = vld [vmem:[%s3 + $0xc4] sm:$0xf]
          %v1440 = vld [vmem:[%s3 + $0xc8] sm:$0xf]
          %v1441 = vld [vmem:[%s3 + $0xcc] sm:$0xf]
          %v1442 = vld [vmem:[%s3 + $0xd0] sm:$0xf]
          %v1443 = vld [vmem:[%s3 + $0xd4] sm:$0xf]
          %v1444 = vld [vmem:[%s3 + $0xd8] sm:$0xf]
          %v1445 = vld [vmem:[%s3 + $0xdc] sm:$0xf]
          %v1446 = vld [vmem:[%s3 + $0xe0] sm:$0xf]
          %v1447 = vld [vmem:[%s3 + $0xe4] sm:$0xf]
          %v1448 = vld [vmem:[%s3 + $0xe8] sm:$0xf]
          %v1449 = vld [vmem:[%s3 + $0xec] sm:$0xf]
          %v1450 = vld [vmem:[%s3 + $0xf0] sm:$0xf]
          %v1451 = vld [vmem:[%s3 + $0xf4] sm:$0xf]
          %v1452 = vld [vmem:[%s3 + $0xf8] sm:$0xf]
          %v1453 = vld [vmem:[%s3 + $0xfc] sm:$0xf]
          %v1454 = vld [vmem:[%s4] sm:$0x1]
          %v1456 = vperm.slane %v1454, 0
          %v1522 = vunpack.c.l.b16 %v1390
          %v1523 = vunpack.c.l.b16 %v1391
          %v1524 = vunpack.c.l.b16 %v1392
          %v1525 = vunpack.c.l.b16 %v1393
          %v1526 = vunpack.c.l.b16 %v1394
          %v1527 = vunpack.c.l.b16 %v1395
          %v1528 = vunpack.c.l.b16 %v1396
          %v1529 = vunpack.c.l.b16 %v1397
          %v1530 = vunpack.c.l.b16 %v1398
          %v1531 = vunpack.c.l.b16 %v1399
          %v1532 = vunpack.c.l.b16 %v1400
          %v1533 = vunpack.c.l.b16 %v1401
          %v1534 = vunpack.c.l.b16 %v1402
          %v1535 = vunpack.c.l.b16 %v1403
          %v1536 = vunpack.c.l.b16 %v1404
          %v1537 = vunpack.c.l.b16 %v1405
          %v1538 = vunpack.c.l.b16 %v1406
          %v1539 = vunpack.c.l.b16 %v1407
          %v1540 = vunpack.c.l.b16 %v1408
          %v1541 = vunpack.c.l.b16 %v1409
          %v1542 = vunpack.c.l.b16 %v1410
          %v1543 = vunpack.c.l.b16 %v1411
          %v1544 = vunpack.c.l.b16 %v1412
          %v1545 = vunpack.c.l.b16 %v1413
          %v1546 = vunpack.c.l.b16 %v1414
          %v1547 = vunpack.c.l.b16 %v1415
          %v1548 = vunpack.c.l.b16 %v1416
          %v1549 = vunpack.c.l.b16 %v1417
          %v1550 = vunpack.c.l.b16 %v1418
          %v1551 = vunpack.c.l.b16 %v1419
          %v1552 = vunpack.c.l.b16 %v1420
          %v1553 = vunpack.c.l.b16 %v1421
          %v1554 = vunpack.c.l.b16 %v1422
          %v1555 = vunpack.c.l.b16 %v1423
          %v1556 = vunpack.c.l.b16 %v1424
          %v1557 = vunpack.c.l.b16 %v1425
          %v1558 = vunpack.c.l.b16 %v1426
          %v1559 = vunpack.c.l.b16 %v1427
          %v1560 = vunpack.c.l.b16 %v1428
          %v1561 = vunpack.c.l.b16 %v1429
          %v1562 = vunpack.c.l.b16 %v1430
          %v1563 = vunpack.c.l.b16 %v1431
          %v1564 = vunpack.c.l.b16 %v1432
          %v1565 = vunpack.c.l.b16 %v1433
          %v1566 = vunpack.c.l.b16 %v1434
          %v1567 = vunpack.c.l.b16 %v1435
          %v1568 = vunpack.c.l.b16 %v1436
          %v1569 = vunpack.c.l.b16 %v1437
          %v1570 = vunpack.c.l.b16 %v1438
          %v1571 = vunpack.c.l.b16 %v1439
          %v1572 = vunpack.c.l.b16 %v1440
          %v1573 = vunpack.c.l.b16 %v1441
          %v1574 = vunpack.c.l.b16 %v1442
          %v1575 = vunpack.c.l.b16 %v1443
          %v1576 = vunpack.c.l.b16 %v1444
          %v1577 = vunpack.c.l.b16 %v1445
          %v1578 = vunpack.c.l.b16 %v1446
          %v1579 = vunpack.c.l.b16 %v1447
          %v1580 = vunpack.c.l.b16 %v1448
          %v1581 = vunpack.c.l.b16 %v1449
          %v1582 = vunpack.c.l.b16 %v1450
          %v1583 = vunpack.c.l.b16 %v1451
          %v1584 = vunpack.c.l.b16 %v1452
          %v1585 = vunpack.c.l.b16 %v1453
          %v1586 = vpack.c.b16 %v1523, %v1522
          %v1587 = vpack.c.b16 %v1525, %v1524
          %v1588 = vpack.c.b16 %v1527, %v1526
          %v1589 = vpack.c.b16 %v1529, %v1528
          %v1590 = vpack.c.b16 %v1531, %v1530
          %v1591 = vpack.c.b16 %v1533, %v1532
          %v1592 = vpack.c.b16 %v1535, %v1534
          %v1593 = vpack.c.b16 %v1537, %v1536
          %v1594 = vpack.c.b16 %v1539, %v1538
          %v1595 = vpack.c.b16 %v1541, %v1540
          %v1596 = vpack.c.b16 %v1543, %v1542
          %v1597 = vpack.c.b16 %v1545, %v1544
          %v1598 = vpack.c.b16 %v1547, %v1546
          %v1599 = vpack.c.b16 %v1549, %v1548
          %v1600 = vpack.c.b16 %v1551, %v1550
          %v1601 = vpack.c.b16 %v1553, %v1552
          %v1602 = vpack.c.b16 %v1555, %v1554
          %v1603 = vpack.c.b16 %v1557, %v1556
          %v1604 = vpack.c.b16 %v1559, %v1558
          %v1605 = vpack.c.b16 %v1561, %v1560
          %v1606 = vpack.c.b16 %v1563, %v1562
          %v1607 = vpack.c.b16 %v1565, %v1564
          %v1608 = vpack.c.b16 %v1567, %v1566
          %v1609 = vpack.c.b16 %v1569, %v1568
          %v1610 = vpack.c.b16 %v1571, %v1570
          %v1611 = vpack.c.b16 %v1573, %v1572
          %v1612 = vpack.c.b16 %v1575, %v1574
          %v1613 = vpack.c.b16 %v1577, %v1576
          %v1614 = vpack.c.b16 %v1579, %v1578
          %v1615 = vpack.c.b16 %v1581, %v1580
          %v1616 = vpack.c.b16 %v1583, %v1582
          %v1617 = vpack.c.b16 %v1585, %v1584
          %1650 = vmatpush.bf16.msra.mxu0 %v1593
          %1651 = vmatpush.bf16.msra.mxu0 %v1592
          %1652 = vmatpush.bf16.msra.mxu0 %v1591
          %1653 = vmatpush.bf16.msra.mxu0 %v1590
          %1654 = vmatpush.bf16.msra.mxu0 %v1589
          %1655 = vmatpush.bf16.msra.mxu0 %v1588
          %1656 = vmatpush.bf16.msra.mxu0 %v1587
          %1657 = vmatpush.bf16.msra.mxu0 %v1586
          %1658 = vmatmul.bf16.gmra.mxu0 %v1386
          %v1659 = vpop.f32.mrf.mxu0
          %v1660 = vadd.f32 %v1456, %v1659
          %v1661 = vpop.f32.mrf.mxu0
          %v1662 = vadd.f32 %v1456, %v1661
          %1663 = vdwg.mxu0
          %1664 = vmatpush.bf16.msra.mxu0 %v1601
          %1665 = vmatpush.bf16.msra.mxu0 %v1600
          %1666 = vmatpush.bf16.msra.mxu0 %v1599
          %1667 = vmatpush.bf16.msra.mxu0 %v1598
          %1668 = vmatpush.bf16.msra.mxu0 %v1597
          %1669 = vmatpush.bf16.msra.mxu0 %v1596
          %1670 = vmatpush.bf16.msra.mxu0 %v1595
          %1671 = vmatpush.bf16.msra.mxu0 %v1594
          %1672 = vmatmul.bf16.gmra.mxu0 %v1387
          %v1673 = vpop.f32.mrf.mxu0
          %v1674 = vadd.f32 %v1660, %v1673
          %v1675 = vpop.f32.mrf.mxu0
          %v1676 = vadd.f32 %v1662, %v1675
          %1677 = vdwg.mxu0
          %1678 = vmatpush.bf16.msra.mxu0 %v1609
          %1679 = vmatpush.bf16.msra.mxu0 %v1608
          %1680 = vmatpush.bf16.msra.mxu0 %v1607
          %1681 = vmatpush.bf16.msra.mxu0 %v1606
          %1682 = vmatpush.bf16.msra.mxu0 %v1605
          %1683 = vmatpush.bf16.msra.mxu0 %v1604
          %1684 = vmatpush.bf16.msra.mxu0 %v1603
          %1685 = vmatpush.bf16.msra.mxu0 %v1602
          %1686 = vmatmul.bf16.gmra.mxu0 %v1388
          %v1687 = vpop.f32.mrf.mxu0
          %v1688 = vadd.f32 %v1674, %v1687
          %v1689 = vpop.f32.mrf.mxu0
          %v1690 = vadd.f32 %v1676, %v1689
          %1691 = vdwg.mxu0
          %1692 = vmatpush.bf16.msra.mxu0 %v1617
          %1693 = vmatpush.bf16.msra.mxu0 %v1616
          %1694 = vmatpush.bf16.msra.mxu0 %v1615
          %1695 = vmatpush.bf16.msra.mxu0 %v1614
          %1696 = vmatpush.bf16.msra.mxu0 %v1613
          %1697 = vmatpush.bf16.msra.mxu0 %v1612
          %1698 = vmatpush.bf16.msra.mxu0 %v1611
          %1699 = vmatpush.bf16.msra.mxu0 %v1610
          %1700 = vmatmul.bf16.gmra.mxu0 %v1389
          %v1701 = vpop.f32.mrf.mxu0
          %v1702 = vadd.f32 %v1688, %v1701
          %v1703 = vpop.f32.mrf.mxu0
          %v1704 = vadd.f32 %v1690, %v1703
          %1705 = vdwg.mxu0
          %1706 = vst [vmem:[%s294] sm:$0xff] %v1702
          %1707 = vst [vmem:[%s294 + $0x8] sm:$0xff] %v1704
        $region71: #{mnist_cnn_forward.9} parent=58 // pred_fallthru
          _
        %s1708 = smul.u32 2, %s20
        %p1709 = scmp.lt.s32.totalorder %s1708, 1
        %s1710 = scalar_select %p1709, %s1708, 1
        %s1711 = smul.addr %s1710, 8
        %s1712 = scalar_lea.vmem %s5, %s1711
        // Predicated region
        $region72: #{mnist_cnn_forward.9} parent=58 // pred_check
          %p1713 = pneg %p163
        $region73: #{mnist_cnn_forward.9} parent=58 // pred_check_branch
          %1715 = sbr.rel (%p1713) target = $region75
        $region74: #{mnist_cnn_forward.9} parent=58 // pred_region
          %s1716 = smul.u32 2, %s20
        $region75: #{mnist_cnn_forward.9} parent=58 // pred_fallthru
          _
        // Predicated region
        $region76: #{mnist_cnn_forward.9} parent=58 // pred_check
          %p1717 = pneg %p163
        $region77: #{mnist_cnn_forward.9} parent=58 // pred_check_branch
          %1719 = sbr.rel (%p1717) target = $region79
        $region78: #{mnist_cnn_forward.9} parent=58 // pred_region
          %s1720 = smul.u32 2, %s20
          %p1721 = scmp.lt.s32.totalorder %s1720, 1
          %s1722 = scalar_select %p1721, %s1720, 1
          %s1723 = smul.addr %s1722, 8
          %s1724 = scalar_lea.vmem %s5, %s1723
        $region79: #{mnist_cnn_forward.9} parent=58 // pred_fallthru
          _
      $region59: #{mnist_cnn_forward.9} parent=5 // pred_fallthru
        _
      %p1725 = scmp.le.s32.totalorder 2, %s11
      // Predicated region
      $region80: #{mnist_cnn_forward.9} parent=5 // pred_check
        %p1726 = pneg %p1725
      $region81: #{mnist_cnn_forward.9} parent=5 // pred_check_branch
        %1728 = sbr.rel (%p1726) target = $region83
      $region82: #{mnist_cnn_forward.9} parent=5 // pred_region
        %s1729 = ssub.s32 %s11, 2
      $region83: #{mnist_cnn_forward.9} parent=5 // pred_fallthru
        _
    $region6: #{mnist_cnn_forward.9} parent=1 // loop_footer
      %s15 = sadd.s32 1, %s11
    $region7: #{mnist_cnn_forward.9} parent=1 // loop_footer_branch
      %10 = sbr.rel target = $region3
    $region8: #{mnist_cnn_forward.9} parent=1 // loop_exit
      _

</llo_original>
